<compile_context>
chip_gen: v7x
topology: tpu7x:2x2x1
jax: 0.10.0
libtpu: 0.0.40
codegen_flags: <defaults>
</compile_context>

<pallas_src>
import jax
import jax.numpy as jnp
from jax import lax
from jax.experimental import pallas as pl
from jax.experimental.pallas import tpu as pltpu

# ---- configuration (small, but consistent with the module) -----------------
CLASS_NUM = 4
KERNEL_NUM = 128                         # channels per conv branch
KERNEL_SIZES = (3, 4, 5)
K_MAX = max(KERNEL_SIZES)                # 5 fused taps
N_CONV = KERNEL_NUM * len(KERNEL_SIZES)  # 384 fused output channels
EMBED_DIM = 128                          # module default is 300; reduced, lane-aligned
VOCAB_SIZE = 64
VOCAB_PAD = 128                          # lane-aligned padded vocab for one-hot matmul
BATCH = 16
SEQ_LEN = 16
OUT_PAD = 128                            # lane-dense padded logits width


def textcnn_kernel(tok_ref, emb_ref, w_ref, b_ref, mask_ref, lw_ref, lb_ref, out_ref):
    # tok_ref : [B*L, 1]            int32 flattened tokens
    # emb_ref : [VOCAB_PAD, E]      bf16 embedding table (rows >= VOCAB are zero)
    # w_ref   : [K_MAX*E, N_CONV]   bf16 fused im2col conv weights (zero-padded taps)
    # b_ref   : [1, N_CONV]         f32 fused conv bias
    # mask_ref: [L, N_CONV]         f32 static validity mask (1 if t <= L - k(c))
    # lw_ref  : [N_CONV, OUT_PAD]   bf16 linear weight (zero-padded columns)
    # lb_ref  : [1, OUT_PAD]        f32 linear bias (zero-padded)
    # out_ref : [B, OUT_PAD]        f32 padded logits
    BL = tok_ref.shape[0]
    L, n_conv = mask_ref.shape
    Bb = BL // L
    vocab_pad = emb_ref.shape[0]

    # In-kernel embedding "gather" as a one-hot MXU matmul (VOCAB is tiny).
    tok = tok_ref[...]                                            # [BL, 1] int32
    lane = lax.broadcasted_iota(jnp.int32, (BL, vocab_pad), 1)
    onehot = jnp.where(lane == tok, 1.0, 0.0).astype(jnp.bfloat16)  # [BL, 128]
    x2d = jnp.dot(onehot, emb_ref[...],
                  preferred_element_type=jnp.float32)             # [BL, E] (bf16-valued)

    # im2col: K_MAX shifted copies of x along the contraction axis -> one fat matmul.
    # Tap j is aligned by rolling rows (row t <- row t+j); rolled-in garbage only
    # lands on positions with t%L > L-k, which the constant mask zeroes before the
    # max-pool (ReLU output >= 0, so 0 is a safe neutral value).
    cols = [x2d.astype(jnp.bfloat16)]
    for j in range(1, K_MAX):
        cols.append(pltpu.roll(x2d, BL - j, axis=0).astype(jnp.bfloat16))
    lhs = jnp.concatenate(cols, axis=-1)                          # [BL, K_MAX*E] bf16

    y = jnp.dot(lhs, w_ref[...], preferred_element_type=jnp.float32)   # [BL, 3C]
    y = jnp.maximum(y + b_ref[...], 0.0)                          # bias + ReLU (f32)

    # Precomputed constant validity mask, then global max-pool over time.
    y3 = y.reshape(Bb, L, n_conv) * mask_ref[...]                 # [Bb, L, 3C]
    pooled = jnp.max(y3, axis=1)                                  # [Bb, 3C]

    # TODO(synk): nn.Dropout(0.5) is identity in eval mode; stochastic mask omitted.
    logits = jnp.dot(pooled.astype(lw_ref.dtype), lw_ref[...],
                     preferred_element_type=jnp.float32) + lb_ref[...]
    out_ref[...] = logits                                         # lane-dense [B, 128]


@jax.jit
def textcnn_forward(tokens, packed):
    """tokens: int32 [B, L].  Embedding, convs, pool, and linear all run in Pallas."""
    emb_pad, w_all, b_all, mask, lw_pad, lb_pad = packed
    B, L = tokens.shape
    tok_flat = tokens.reshape(B * L, 1).astype(jnp.int32)         # pre-flattened, trivial layout

    cost = pl.CostEstimate(
        flops=(2 * B * L * VOCAB_PAD * EMBED_DIM
               + 2 * B * L * (K_MAX * EMBED_DIM) * N_CONV
               + 2 * B * N_CONV * OUT_PAD),
        transcendentals=0,
        bytes_accessed=(tok_flat.size * 4 + emb_pad.size * 2 + w_all.size * 2
                        + b_all.size * 4 + mask.size * 4 + lw_pad.size * 2
                        + lb_pad.size * 4 + B * OUT_PAD * 4),
    )

    padded_logits = pl.pallas_call(
        textcnn_kernel,
        out_shape=jax.ShapeDtypeStruct((B, OUT_PAD), jnp.float32),
        grid=(1,),                                                # single step: overhead-bound shapes
        in_specs=[
            pl.BlockSpec((B * L, 1), lambda i: (0, 0)),
            pl.BlockSpec((VOCAB_PAD, EMBED_DIM), lambda i: (0, 0)),
            pl.BlockSpec((K_MAX * EMBED_DIM, N_CONV), lambda i: (0, 0)),
            pl.BlockSpec((1, N_CONV), lambda i: (0, 0)),
            pl.BlockSpec((L, N_CONV), lambda i: (0, 0)),
            pl.BlockSpec((N_CONV, OUT_PAD), lambda i: (0, 0)),
            pl.BlockSpec((1, OUT_PAD), lambda i: (0, 0)),
        ],
        out_specs=pl.BlockSpec((B, OUT_PAD), lambda i: (0, 0)),
        compiler_params=pltpu.CompilerParams(dimension_semantics=("arbitrary",)),
        cost_estimate=cost,
    )(tok_flat, emb_pad, w_all, b_all, mask, lw_pad, lb_pad)

    return padded_logits[:, :CLASS_NUM]


# ---------------------------- parameters ------------------------------------
def init_params(key):
    """PyTorch-layout parameters."""
    keys = jax.random.split(key, 2 + 2 * len(KERNEL_SIZES) + 2)
    it = iter(keys)

    # nn.Embedding.from_pretrained(weight): [VOCAB, EMBED_DIM]
    emb_table = jax.random.normal(next(it), (VOCAB_SIZE, EMBED_DIM), jnp.float32) * 0.1

    convs = []
    for k in KERNEL_SIZES:
        # PyTorch Conv1d weight: [out_channels, in_channels, kernel_size]
        w_pt = jax.random.normal(next(it), (KERNEL_NUM, EMBED_DIM, k), jnp.float32) * 0.05
        b = jax.random.normal(next(it), (KERNEL_NUM,), jnp.float32) * 0.05
        convs.append((w_pt, b))

    # nn.Linear(3*KERNEL_NUM, CLASS_NUM): weight [CLASS_NUM, 3*KERNEL_NUM]
    lw_pt = jax.random.normal(next(it), (CLASS_NUM, N_CONV), jnp.float32) * 0.05
    lb = jax.random.normal(next(it), (CLASS_NUM,), jnp.float32) * 0.05
    return emb_table, tuple(convs), (lw_pt, lb)


def pack_params(params):
    """PyTorch layout -> fused, MXU-friendly kernel layout (one-time prep)."""
    emb_table, convs, (lw_pt, lb) = params

    # Embedding table padded to 128 lane-aligned rows (zero rows never selected).
    emb_pad = jnp.zeros((VOCAB_PAD, EMBED_DIM), jnp.float32).at[:VOCAB_SIZE].set(emb_table)
    emb_pad = emb_pad.astype(jnp.bfloat16)

    # Fused im2col conv weights: [K_MAX*E, 3C] with zero-padded taps per branch.
    w_taps, biases = [], []
    for (w_pt, b) in convs:                           # w_pt: [C, E, k]
        k = w_pt.shape[-1]
        w_k = jnp.transpose(w_pt, (2, 1, 0))          # [k, E, C]
        pad = jnp.zeros((K_MAX - k,) + w_k.shape[1:], w_k.dtype)
        w_taps.append(jnp.concatenate([w_k, pad], axis=0))   # [K_MAX, E, C]
        biases.append(b)
    w_all = jnp.concatenate(w_taps, axis=-1)                          # [K_MAX, E, 3C]
    w_all = w_all.reshape(K_MAX * EMBED_DIM, N_CONV).astype(jnp.bfloat16)
    b_all = jnp.concatenate(biases, axis=0).reshape(1, N_CONV).astype(jnp.float32)

    # Static validity mask: position t is valid for a conv of width k iff t <= L - k.
    t = jnp.arange(SEQ_LEN)[:, None]                                  # [L, 1]
    k_of_col = jnp.concatenate(
        [jnp.full((KERNEL_NUM,), k, jnp.int32) for k in KERNEL_SIZES])  # [3C]
    mask = (t <= SEQ_LEN - k_of_col[None, :]).astype(jnp.float32)     # [L, 3C]

    lw_pad = jnp.zeros((N_CONV, OUT_PAD), jnp.float32).at[:, :CLASS_NUM].set(lw_pt.T)
    lw_pad = lw_pad.astype(jnp.bfloat16)                              # [3C, 128]
    lb_pad = jnp.zeros((1, OUT_PAD), jnp.float32).at[0, :CLASS_NUM].set(lb)

    return emb_pad, w_all, b_all, mask, lw_pad, lb_pad


# ---------------------------- reference -------------------------------------
def reference_forward(tokens, params):
    """Pure-JAX mirror of the PyTorch forward (eval mode), bf16 MXU inputs."""
    emb_table, convs, (lw_pt, lb) = params
    x = emb_table[tokens].astype(jnp.bfloat16)        # [B, L, E]
    pooled = []
    for (w_pt, b) in convs:                           # w_pt: [C, E, k]
        w_k = jnp.transpose(w_pt, (2, 1, 0)).astype(jnp.bfloat16)   # [k, E, C]
        k = w_k.shape[0]
        l_out = x.shape[1] - k + 1
        acc = jnp.zeros((x.shape[0], l_out, KERNEL_NUM), jnp.float32)
        for j in range(k):
            acc += jnp.einsum('ble,ec->blc', x[:, j:j + l_out, :], w_k[j],
                              preferred_element_type=jnp.float32)
        acc = jax.nn.relu(acc + b[None, None, :])
        pooled.append(jnp.max(acc, axis=1))           # [B, C]
    feats = jnp.concatenate(pooled, axis=-1).astype(jnp.bfloat16)    # [B, 3C]
    return jnp.dot(feats, lw_pt.T.astype(jnp.bfloat16),
                   preferred_element_type=jnp.float32) + lb[None, :]


if __name__ == "__main__":
    key = jax.random.PRNGKey(0)
    pkey, tkey = jax.random.split(key)

    params = init_params(pkey)
    packed = pack_params(params)
    tokens = jax.random.randint(tkey, (BATCH, SEQ_LEN), 0, VOCAB_SIZE, dtype=jnp.int32)

    out = textcnn_forward(tokens, packed)
    jax.block_until_ready(out)

    ref = reference_forward(tokens, params)
    assert out.shape == (BATCH, CLASS_NUM), out.shape
    err = float(jnp.max(jnp.abs(out - ref)))
    assert jnp.allclose(out, ref, rtol=1e-3, atol=1e-3), f"mismatch vs reference, max err {err}"

    print("KERNEL_OK")
</pallas_src>

<mosaic_0001>
module attributes {stable_mosaic.version = 11 : i64} {
  func.func @textcnn_kernel(%arg0: i32, %arg1: memref<256x1xi32, #tpu.memory_space<vmem>>, %arg2: memref<128x128xbf16, #tpu.memory_space<vmem>>, %arg3: memref<640x384xbf16, #tpu.memory_space<vmem>>, %arg4: memref<1x384xf32, #tpu.memory_space<vmem>>, %arg5: memref<16x384xf32, #tpu.memory_space<vmem>>, %arg6: memref<384x128xbf16, #tpu.memory_space<vmem>>, %arg7: memref<1x128xf32, #tpu.memory_space<vmem>>, %arg8: memref<16x128xf32, #tpu.memory_space<vmem>>) attributes {dimension_semantics = [#tpu.dimension_semantics<arbitrary>], iteration_bounds = array<i64: 1>, scalar_prefetch = 0 : i64, scratch_operands = 0 : i64, tpu.core_type = #tpu.core_type<tc>, window_params = [{pipeline_mode = #tpu.pipeline_mode<synchronous>, transform_indices = @transform_0, window_bounds = array<i64: 256, 1>}, {pipeline_mode = #tpu.pipeline_mode<synchronous>, transform_indices = @transform_1, window_bounds = array<i64: 128, 128>}, {pipeline_mode = #tpu.pipeline_mode<synchronous>, transform_indices = @transform_2, window_bounds = array<i64: 640, 384>}, {pipeline_mode = #tpu.pipeline_mode<synchronous>, transform_indices = @transform_3, window_bounds = array<i64: 1, 384>}, {pipeline_mode = #tpu.pipeline_mode<synchronous>, transform_indices = @transform_4, window_bounds = array<i64: 16, 384>}, {pipeline_mode = #tpu.pipeline_mode<synchronous>, transform_indices = @transform_5, window_bounds = array<i64: 384, 128>}, {pipeline_mode = #tpu.pipeline_mode<synchronous>, transform_indices = @transform_6, window_bounds = array<i64: 1, 128>}, {pipeline_mode = #tpu.pipeline_mode<synchronous>, transform_indices = @transform_7, window_bounds = array<i64: 16, 128>}]} {
    %c0 = arith.constant 0 : index
    %c0_0 = arith.constant 0 : index
    %0 = vector.load %arg1[%c0, %c0_0] : memref<256x1xi32, #tpu.memory_space<vmem>>, vector<256x1xi32>
    %1 = tpu.iota {dimensions = array<i32: 1>} : vector<256x128xi32>
    %2 = vector.broadcast %0 : vector<256x1xi32> to vector<256x128xi32>
    %3 = arith.cmpi eq, %1, %2 : vector<256x128xi32>
    %cst = arith.constant 1.000000e+00 : f32
    %cst_1 = arith.constant 0.000000e+00 : f32
    %4 = vector.broadcast %cst : f32 to vector<256x128xf32>
    %5 = vector.broadcast %cst_1 : f32 to vector<256x128xf32>
    %6 = arith.select %3, %4, %5 : vector<256x128xi1>, vector<256x128xf32>
    %7 = arith.truncf %6 : vector<256x128xf32> to vector<256x128xbf16>
    %c0_2 = arith.constant 0 : index
    %c0_3 = arith.constant 0 : index
    %8 = vector.load %arg2[%c0_2, %c0_3] : memref<128x128xbf16, #tpu.memory_space<vmem>>, vector<128x128xbf16>
    %cst_4 = arith.constant dense<0.000000e+00> : vector<256x128xf32>
    %9 = tpu.matmul %7, %8, %cst_4 {dimension_numbers = #tpu.dot_dimension_numbers<[1], [0], [0], [1], [0, 0, 1, 1], [], []>} : vector<256x128xbf16>, vector<128x128xbf16>, vector<256x128xf32> -> vector<256x128xf32>
    %10 = arith.truncf %9 : vector<256x128xf32> to vector<256x128xbf16>
    %c255_i32 = arith.constant 255 : i32
    %11 = tpu.dynamic_rotate %9 by %c255_i32 dim 0 : vector<256x128xf32>, i32 -> vector<256x128xf32>
    %12 = arith.truncf %11 : vector<256x128xf32> to vector<256x128xbf16>
    %c254_i32 = arith.constant 254 : i32
    %13 = tpu.dynamic_rotate %9 by %c254_i32 dim 0 : vector<256x128xf32>, i32 -> vector<256x128xf32>
    %14 = arith.truncf %13 : vector<256x128xf32> to vector<256x128xbf16>
    %c253_i32 = arith.constant 253 : i32
    %15 = tpu.dynamic_rotate %9 by %c253_i32 dim 0 : vector<256x128xf32>, i32 -> vector<256x128xf32>
    %16 = arith.truncf %15 : vector<256x128xf32> to vector<256x128xbf16>
    %c252_i32 = arith.constant 252 : i32
    %17 = tpu.dynamic_rotate %9 by %c252_i32 dim 0 : vector<256x128xf32>, i32 -> vector<256x128xf32>
    %18 = arith.truncf %17 : vector<256x128xf32> to vector<256x128xbf16>
    %19 = tpu.concatenate %10, %12, %14, %16, %18 in 1 : vector<256x128xbf16>, vector<256x128xbf16>, vector<256x128xbf16>, vector<256x128xbf16>, vector<256x128xbf16> -> vector<256x640xbf16>
    %c0_5 = arith.constant 0 : index
    %c0_6 = arith.constant 0 : index
    %20 = vector.load %arg3[%c0_5, %c0_6] : memref<640x384xbf16, #tpu.memory_space<vmem>>, vector<640x384xbf16>
    %cst_7 = arith.constant dense<0.000000e+00> : vector<256x384xf32>
    %21 = tpu.matmul %19, %20, %cst_7 {dimension_numbers = #tpu.dot_dimension_numbers<[1], [0], [0], [1], [0, 0, 1, 1], [], []>} : vector<256x640xbf16>, vector<640x384xbf16>, vector<256x384xf32> -> vector<256x384xf32>
    %c0_8 = arith.constant 0 : index
    %c0_9 = arith.constant 0 : index
    %22 = vector.load %arg4[%c0_8, %c0_9] : memref<1x384xf32, #tpu.memory_space<vmem>>, vector<1x384xf32>
    %23 = vector.broadcast %22 : vector<1x384xf32> to vector<256x384xf32>
    %24 = arith.addf %21, %23 : vector<256x384xf32>
    %cst_10 = arith.constant 0.000000e+00 : f32
    %25 = vector.broadcast %cst_10 : f32 to vector<256x384xf32>
    %26 = arith.maximumf %24, %25 : vector<256x384xf32>
    %27 = vector.shape_cast %26 : vector<256x384xf32> to vector<16x16x384xf32>
    %c0_11 = arith.constant 0 : index
    %c0_12 = arith.constant 0 : index
    %28 = vector.load %arg5[%c0_11, %c0_12] : memref<16x384xf32, #tpu.memory_space<vmem>>, vector<16x384xf32>
    %29 = vector.shape_cast %28 : vector<16x384xf32> to vector<1x16x384xf32>
    %30 = vector.broadcast %29 : vector<1x16x384xf32> to vector<16x16x384xf32>
    %31 = arith.mulf %27, %30 : vector<16x16x384xf32>
    %cst_13 = arith.constant dense<0xFF800000> : vector<16x384xf32>
    %32 = vector.multi_reduction <maximumf>, %31, %cst_13 [1] : vector<16x16x384xf32> to vector<16x384xf32>
    %33 = arith.truncf %32 : vector<16x384xf32> to vector<16x384xbf16>
    %c0_14 = arith.constant 0 : index
    %c0_15 = arith.constant 0 : index
    %34 = vector.load %arg6[%c0_14, %c0_15] : memref<384x128xbf16, #tpu.memory_space<vmem>>, vector<384x128xbf16>
    %cst_16 = arith.constant dense<0.000000e+00> : vector<16x128xf32>
    %35 = tpu.matmul %33, %34, %cst_16 {dimension_numbers = #tpu.dot_dimension_numbers<[1], [0], [0], [1], [0, 0, 1, 1], [], []>} : vector<16x384xbf16>, vector<384x128xbf16>, vector<16x128xf32> -> vector<16x128xf32>
    %c0_17 = arith.constant 0 : index
    %c0_18 = arith.constant 0 : index
    %36 = vector.load %arg7[%c0_17, %c0_18] : memref<1x128xf32, #tpu.memory_space<vmem>>, vector<1x128xf32>
    %37 = vector.broadcast %36 : vector<1x128xf32> to vector<16x128xf32>
    %38 = arith.addf %35, %37 : vector<16x128xf32>
    %c0_19 = arith.constant 0 : index
    %c0_20 = arith.constant 0 : index
    %39 = vector.load %arg8[%c0_19, %c0_20] : memref<16x128xf32, #tpu.memory_space<vmem>>, vector<16x128xf32>
    tpu.vector_store %arg8[%c0_19, %c0_20], %38 {strides = array<i32>} : memref<16x128xf32, #tpu.memory_space<vmem>>, vector<16x128xf32>,
    return
  }
  func.func @transform_0(%arg0: i32) -> (i32, i32) {
    %c0_i32 = arith.constant 0 : i32
    %c0_i32_0 = arith.constant 0 : i32
    %c0_i32_1 = arith.constant 0 : i32
    return %c0_i32, %c0_i32_0 : i32, i32
  }
  func.func @transform_1(%arg0: i32) -> (i32, i32) {
    %c0_i32 = arith.constant 0 : i32
    %c0_i32_0 = arith.constant 0 : i32
    %c0_i32_1 = arith.constant 0 : i32
    return %c0_i32, %c0_i32_0 : i32, i32
  }
  func.func @transform_2(%arg0: i32) -> (i32, i32) {
    %c0_i32 = arith.constant 0 : i32
    %c0_i32_0 = arith.constant 0 : i32
    %c0_i32_1 = arith.constant 0 : i32
    return %c0_i32, %c0_i32_0 : i32, i32
  }
  func.func @transform_3(%arg0: i32) -> (i32, i32) {
    %c0_i32 = arith.constant 0 : i32
    %c0_i32_0 = arith.constant 0 : i32
    %c0_i32_1 = arith.constant 0 : i32
    return %c0_i32, %c0_i32_0 : i32, i32
  }
  func.func @transform_4(%arg0: i32) -> (i32, i32) {
    %c0_i32 = arith.constant 0 : i32
    %c0_i32_0 = arith.constant 0 : i32
    %c0_i32_1 = arith.constant 0 : i32
    return %c0_i32, %c0_i32_0 : i32, i32
  }
  func.func @transform_5(%arg0: i32) -> (i32, i32) {
    %c0_i32 = arith.constant 0 : i32
    %c0_i32_0 = arith.constant 0 : i32
    %c0_i32_1 = arith.constant 0 : i32
    return %c0_i32, %c0_i32_0 : i32, i32
  }
  func.func @transform_6(%arg0: i32) -> (i32, i32) {
    %c0_i32 = arith.constant 0 : i32
    %c0_i32_0 = arith.constant 0 : i32
    %c0_i32_1 = arith.constant 0 : i32
    return %c0_i32, %c0_i32_0 : i32, i32
  }
  func.func @transform_7(%arg0: i32) -> (i32, i32) {
    %c0_i32 = arith.constant 0 : i32
    %c0_i32_0 = arith.constant 0 : i32
    %c0_i32_1 = arith.constant 0 : i32
    return %c0_i32, %c0_i32_0 : i32, i32
  }
}

</mosaic_0001>

<llo_original>
// kernel: textcnn_forward.1
$region0: #{textcnn_forward.1}
  #allocation0 [shape = 'u32[]', space=smem, size = 0x4, offset = 0x4, fixed_abs, tag = 'smem constant byte address 0x4 - core index']
  #allocation1 [shape = 'u32[144,128]{1,0:T(1,128)}', space=vmem, size = 0x12000, scoped, tag = 'internal scratch']
  %s0 = inlined_call_operand.vmem [shape: s32[256,1], index: 0, kind: input, shape index: {}]
  %s1 = inlined_call_operand.vmem [shape: bf16[128,128], index: 1, kind: input, shape index: {}]
  %s2 = inlined_call_operand.hbm [shape: bf16[640,384], index: 2, kind: input, shape index: {}]
  %s3 = inlined_call_operand.vmem [shape: f32[1,384], index: 3, kind: input, shape index: {}]
  %s4 = inlined_call_operand.hbm [shape: f32[16,384], index: 4, kind: input, shape index: {}]
  %s5 = inlined_call_operand.vmem [shape: bf16[384,128], index: 5, kind: input, shape index: {}]
  %s6 = inlined_call_operand.vmem [shape: f32[1,128], index: 6, kind: input, shape index: {}]
  %s7 = inlined_call_operand.vmem [shape: f32[16,128], index: 7, kind: output, shape index: {}]
  %s8 = sld [smem:[#allocation0]]
  $region46: #{textcnn_forward.1} parent=0
    _
  %s10 = ssub.s32 1, %s8
  %s11 = scalar_select 0, %s10, %s8
  $region1: #{textcnn_forward.1} parent=0
    #allocation2 [shape = 'u8[491520]{0}', space=vmem, size = 0x78000, scoped, tag = 'input window, operand 2, single buffered']
    #allocation3 [shape = 's32[1]{0}', space=sflag, size = 0x4, scoped, tag = 'scoped memory for textcnn_forward.1']
    #allocation4 [shape = 'u8[24576]{0}', space=vmem, size = 0x6000, scoped, tag = 'input window, operand 4, single buffered']
    #allocation5 [shape = 's32[1]{0}', space=sflag, size = 0x4, scoped, tag = 'scoped memory for textcnn_forward.1']
    %12 = vsyncpa [#allocation3], 0
    %13 = vsyncpa [#allocation5], 0
    // Predicated region
    $region2: #{textcnn_forward.1} parent=1 // pred_check
      _
    $region3: #{textcnn_forward.1} parent=1 // pred_check_branch
      %15 = sbr.rel (0) target = $region5
    $region4: #{textcnn_forward.1} parent=1 // pred_region
      _
    $region5: #{textcnn_forward.1} parent=1 // pred_fallthru
      _
    // Predicated region
    $region6: #{textcnn_forward.1} parent=1 // pred_check
      _
    $region7: #{textcnn_forward.1} parent=1 // pred_check_branch
      %17 = sbr.rel (0) target = $region9
    $region8: #{textcnn_forward.1} parent=1 // pred_region
      _
    $region9: #{textcnn_forward.1} parent=1 // pred_fallthru
      _
    // Predicated region
    $region10: #{textcnn_forward.1} parent=1 // pred_check
      _
    $region11: #{textcnn_forward.1} parent=1 // pred_check_branch
      %19 = sbr.rel (0) target = $region13
    $region12: #{textcnn_forward.1} parent=1 // pred_region
      %s21 = ssub.s32 15360, 15360
      %22 = vsyncadd [#allocation3], %s21
      %s23 = sshll.u32 [#allocation2], 4
      %s24 = int_to_ptr.vmem [resolvable:$true] %s23
      %29 = dma.hbm_to_vmem [thread:$0]  %s2, 15360, %s24, [#allocation3], 192, 192, 12
    $region13: #{textcnn_forward.1} parent=1 // pred_fallthru
      _
    // Predicated region
    $region14: #{textcnn_forward.1} parent=1 // pred_check
      _
    $region15: #{textcnn_forward.1} parent=1 // pred_check_branch
      %31 = sbr.rel (0) target = $region17
    $region16: #{textcnn_forward.1} parent=1 // pred_region
      _
    $region17: #{textcnn_forward.1} parent=1 // pred_fallthru
      _
    // Predicated region
    $region18: #{textcnn_forward.1} parent=1 // pred_check
      _
    $region19: #{textcnn_forward.1} parent=1 // pred_check_branch
      %33 = sbr.rel (0) target = $region21
    $region20: #{textcnn_forward.1} parent=1 // pred_region
      %s35 = ssub.s32 768, 768
      %36 = vsyncadd [#allocation5], %s35
      %s37 = sshll.u32 [#allocation4], 4
      %s38 = int_to_ptr.vmem [resolvable:$true] %s37
      %43 = dma.hbm_to_vmem [thread:$0]  %s4, 768, %s38, [#allocation5], 384, 384, 24
    $region21: #{textcnn_forward.1} parent=1 // pred_fallthru
      _
    // Predicated region
    $region22: #{textcnn_forward.1} parent=1 // pred_check
      _
    $region23: #{textcnn_forward.1} parent=1 // pred_check_branch
      %45 = sbr.rel (0) target = $region25
    $region24: #{textcnn_forward.1} parent=1 // pred_region
      _
    $region25: #{textcnn_forward.1} parent=1 // pred_fallthru
      _
    // Predicated region
    $region26: #{textcnn_forward.1} parent=1 // pred_check
      _
    $region27: #{textcnn_forward.1} parent=1 // pred_check_branch
      %47 = sbr.rel (0) target = $region29
    $region28: #{textcnn_forward.1} parent=1 // pred_region
      _
    $region29: #{textcnn_forward.1} parent=1 // pred_fallthru
      _
    // Predicated region
    $region30: #{textcnn_forward.1} parent=1 // pred_check
      _
    $region31: #{textcnn_forward.1} parent=1 // pred_check_branch
      %49 = sbr.rel (0) target = $region33
    $region32: #{textcnn_forward.1} parent=1 // pred_region
      %50 = dma.done [#allocation3], 15360
    $region33: #{textcnn_forward.1} parent=1 // pred_fallthru
      _
    // Predicated region
    $region34: #{textcnn_forward.1} parent=1 // pred_check
      _
    $region35: #{textcnn_forward.1} parent=1 // pred_check_branch
      %52 = sbr.rel (0) target = $region37
    $region36: #{textcnn_forward.1} parent=1 // pred_region
      %53 = dma.done [#allocation5], 768
    $region37: #{textcnn_forward.1} parent=1 // pred_fallthru
      _
    %v55 = vld [vmem:[%s0] sm:$0xff]
    %v56 = vld [vmem:[%s0 + $0x8] sm:$0xff]
    %v57 = vld [vmem:[%s0 + $0x10] sm:$0xff]
    %v58 = vld [vmem:[%s0 + $0x18] sm:$0xff]
    %v59 = vld [vmem:[%s0 + $0x20] sm:$0xff]
    %v60 = vld [vmem:[%s0 + $0x28] sm:$0xff]
    %v61 = vld [vmem:[%s0 + $0x30] sm:$0xff]
    %v62 = vld [vmem:[%s0 + $0x38] sm:$0xff]
    %v63 = vld [vmem:[%s0 + $0x40] sm:$0xff]
    %v64 = vld [vmem:[%s0 + $0x48] sm:$0xff]
    %v65 = vld [vmem:[%s0 + $0x50] sm:$0xff]
    %v66 = vld [vmem:[%s0 + $0x58] sm:$0xff]
    %v67 = vld [vmem:[%s0 + $0x60] sm:$0xff]
    %v68 = vld [vmem:[%s0 + $0x68] sm:$0xff]
    %v69 = vld [vmem:[%s0 + $0x70] sm:$0xff]
    %v70 = vld [vmem:[%s0 + $0x78] sm:$0xff]
    %v71 = vld [vmem:[%s0 + $0x80] sm:$0xff]
    %v72 = vld [vmem:[%s0 + $0x88] sm:$0xff]
    %v73 = vld [vmem:[%s0 + $0x90] sm:$0xff]
    %v74 = vld [vmem:[%s0 + $0x98] sm:$0xff]
    %v75 = vld [vmem:[%s0 + $0xa0] sm:$0xff]
    %v76 = vld [vmem:[%s0 + $0xa8] sm:$0xff]
    %v77 = vld [vmem:[%s0 + $0xb0] sm:$0xff]
    %v78 = vld [vmem:[%s0 + $0xb8] sm:$0xff]
    %v79 = vld [vmem:[%s0 + $0xc0] sm:$0xff]
    %v80 = vld [vmem:[%s0 + $0xc8] sm:$0xff]
    %v81 = vld [vmem:[%s0 + $0xd0] sm:$0xff]
    %v82 = vld [vmem:[%s0 + $0xd8] sm:$0xff]
    %v83 = vld [vmem:[%s0 + $0xe0] sm:$0xff]
    %v84 = vld [vmem:[%s0 + $0xe8] sm:$0xff]
    %v85 = vld [vmem:[%s0 + $0xf0] sm:$0xff]
    %v86 = vld [vmem:[%s0 + $0xf8] sm:$0xff]
    %v87 = vlaneseq
    %v88 = vand.u32 %v87, 127
    %89 = vset.pattern.permute.xlu0 0
    %90 = vperm.xlu0 %89, %v55
    %v91 = vpop.permute.xlu0 %90
    %92 = vset.pattern.permute.xlu0 0
    %93 = vperm.xlu0 %92, %v56
    %v94 = vpop.permute.xlu0 %93
    %95 = vset.pattern.permute.xlu0 0
    %96 = vperm.xlu0 %95, %v57
    %v97 = vpop.permute.xlu0 %96
    %98 = vset.pattern.permute.xlu0 0
    %99 = vperm.xlu0 %98, %v58
    %v100 = vpop.permute.xlu0 %99
    %101 = vset.pattern.permute.xlu0 0
    %102 = vperm.xlu0 %101, %v59
    %v103 = vpop.permute.xlu0 %102
    %104 = vset.pattern.permute.xlu0 0
    %105 = vperm.xlu0 %104, %v60
    %v106 = vpop.permute.xlu0 %105
    %107 = vset.pattern.permute.xlu0 0
    %108 = vperm.xlu0 %107, %v61
    %v109 = vpop.permute.xlu0 %108
    %110 = vset.pattern.permute.xlu0 0
    %111 = vperm.xlu0 %110, %v62
    %v112 = vpop.permute.xlu0 %111
    %113 = vset.pattern.permute.xlu0 0
    %114 = vperm.xlu0 %113, %v63
    %v115 = vpop.permute.xlu0 %114
    %116 = vset.pattern.permute.xlu0 0
    %117 = vperm.xlu0 %116, %v64
    %v118 = vpop.permute.xlu0 %117
    %119 = vset.pattern.permute.xlu0 0
    %120 = vperm.xlu0 %119, %v65
    %v121 = vpop.permute.xlu0 %120
    %122 = vset.pattern.permute.xlu0 0
    %123 = vperm.xlu0 %122, %v66
    %v124 = vpop.permute.xlu0 %123
    %125 = vset.pattern.permute.xlu0 0
    %126 = vperm.xlu0 %125, %v67
    %v127 = vpop.permute.xlu0 %126
    %128 = vset.pattern.permute.xlu0 0
    %129 = vperm.xlu0 %128, %v68
    %v130 = vpop.permute.xlu0 %129
    %131 = vset.pattern.permute.xlu0 0
    %132 = vperm.xlu0 %131, %v69
    %v133 = vpop.permute.xlu0 %132
    %134 = vset.pattern.permute.xlu0 0
    %135 = vperm.xlu0 %134, %v70
    %v136 = vpop.permute.xlu0 %135
    %137 = vset.pattern.permute.xlu0 0
    %138 = vperm.xlu0 %137, %v71
    %v139 = vpop.permute.xlu0 %138
    %140 = vset.pattern.permute.xlu0 0
    %141 = vperm.xlu0 %140, %v72
    %v142 = vpop.permute.xlu0 %141
    %143 = vset.pattern.permute.xlu0 0
    %144 = vperm.xlu0 %143, %v73
    %v145 = vpop.permute.xlu0 %144
    %146 = vset.pattern.permute.xlu0 0
    %147 = vperm.xlu0 %146, %v74
    %v148 = vpop.permute.xlu0 %147
    %149 = vset.pattern.permute.xlu0 0
    %150 = vperm.xlu0 %149, %v75
    %v151 = vpop.permute.xlu0 %150
    %152 = vset.pattern.permute.xlu0 0
    %153 = vperm.xlu0 %152, %v76
    %v154 = vpop.permute.xlu0 %153
    %155 = vset.pattern.permute.xlu0 0
    %156 = vperm.xlu0 %155, %v77
    %v157 = vpop.permute.xlu0 %156
    %158 = vset.pattern.permute.xlu0 0
    %159 = vperm.xlu0 %158, %v78
    %v160 = vpop.permute.xlu0 %159
    %161 = vset.pattern.permute.xlu0 0
    %162 = vperm.xlu0 %161, %v79
    %v163 = vpop.permute.xlu0 %162
    %164 = vset.pattern.permute.xlu0 0
    %165 = vperm.xlu0 %164, %v80
    %v166 = vpop.permute.xlu0 %165
    %167 = vset.pattern.permute.xlu0 0
    %168 = vperm.xlu0 %167, %v81
    %v169 = vpop.permute.xlu0 %168
    %170 = vset.pattern.permute.xlu0 0
    %171 = vperm.xlu0 %170, %v82
    %v172 = vpop.permute.xlu0 %171
    %173 = vset.pattern.permute.xlu0 0
    %174 = vperm.xlu0 %173, %v83
    %v175 = vpop.permute.xlu0 %174
    %176 = vset.pattern.permute.xlu0 0
    %177 = vperm.xlu0 %176, %v84
    %v178 = vpop.permute.xlu0 %177
    %179 = vset.pattern.permute.xlu0 0
    %180 = vperm.xlu0 %179, %v85
    %v181 = vpop.permute.xlu0 %180
    %182 = vset.pattern.permute.xlu0 0
    %183 = vperm.xlu0 %182, %v86
    %v184 = vpop.permute.xlu0 %183
    %vm185 = vcmp.eq.s32.totalorder %v88, %v91
    %vm186 = vcmp.eq.s32.totalorder %v88, %v94
    %vm187 = vcmp.eq.s32.totalorder %v88, %v97
    %vm188 = vcmp.eq.s32.totalorder %v88, %v100
    %vm189 = vcmp.eq.s32.totalorder %v88, %v103
    %vm190 = vcmp.eq.s32.totalorder %v88, %v106
    %vm191 = vcmp.eq.s32.totalorder %v88, %v109
    %vm192 = vcmp.eq.s32.totalorder %v88, %v112
    %vm193 = vcmp.eq.s32.totalorder %v88, %v115
    %vm194 = vcmp.eq.s32.totalorder %v88, %v118
    %vm195 = vcmp.eq.s32.totalorder %v88, %v121
    %vm196 = vcmp.eq.s32.totalorder %v88, %v124
    %vm197 = vcmp.eq.s32.totalorder %v88, %v127
    %vm198 = vcmp.eq.s32.totalorder %v88, %v130
    %vm199 = vcmp.eq.s32.totalorder %v88, %v133
    %vm200 = vcmp.eq.s32.totalorder %v88, %v136
    %vm201 = vcmp.eq.s32.totalorder %v88, %v139
    %vm202 = vcmp.eq.s32.totalorder %v88, %v142
    %vm203 = vcmp.eq.s32.totalorder %v88, %v145
    %vm204 = vcmp.eq.s32.totalorder %v88, %v148
    %vm205 = vcmp.eq.s32.totalorder %v88, %v151
    %vm206 = vcmp.eq.s32.totalorder %v88, %v154
    %vm207 = vcmp.eq.s32.totalorder %v88, %v157
    %vm208 = vcmp.eq.s32.totalorder %v88, %v160
    %vm209 = vcmp.eq.s32.totalorder %v88, %v163
    %vm210 = vcmp.eq.s32.totalorder %v88, %v166
    %vm211 = vcmp.eq.s32.totalorder %v88, %v169
    %vm212 = vcmp.eq.s32.totalorder %v88, %v172
    %vm213 = vcmp.eq.s32.totalorder %v88, %v175
    %vm214 = vcmp.eq.s32.totalorder %v88, %v178
    %vm215 = vcmp.eq.s32.totalorder %v88, %v181
    %vm216 = vcmp.eq.s32.totalorder %v88, %v184
    %v217 = vsel %vm185, 1.0, 0.0
    %v218 = vsel %vm186, 1.0, 0.0
    %v219 = vsel %vm187, 1.0, 0.0
    %v220 = vsel %vm188, 1.0, 0.0
    %v221 = vsel %vm189, 1.0, 0.0
    %v222 = vsel %vm190, 1.0, 0.0
    %v223 = vsel %vm191, 1.0, 0.0
    %v224 = vsel %vm192, 1.0, 0.0
    %v225 = vsel %vm193, 1.0, 0.0
    %v226 = vsel %vm194, 1.0, 0.0
    %v227 = vsel %vm195, 1.0, 0.0
    %v228 = vsel %vm196, 1.0, 0.0
    %v229 = vsel %vm197, 1.0, 0.0
    %v230 = vsel %vm198, 1.0, 0.0
    %v231 = vsel %vm199, 1.0, 0.0
    %v232 = vsel %vm200, 1.0, 0.0
    %v233 = vsel %vm201, 1.0, 0.0
    %v234 = vsel %vm202, 1.0, 0.0
    %v235 = vsel %vm203, 1.0, 0.0
    %v236 = vsel %vm204, 1.0, 0.0
    %v237 = vsel %vm205, 1.0, 0.0
    %v238 = vsel %vm206, 1.0, 0.0
    %v239 = vsel %vm207, 1.0, 0.0
    %v240 = vsel %vm208, 1.0, 0.0
    %v241 = vsel %vm209, 1.0, 0.0
    %v242 = vsel %vm210, 1.0, 0.0
    %v243 = vsel %vm211, 1.0, 0.0
    %v244 = vsel %vm212, 1.0, 0.0
    %v245 = vsel %vm213, 1.0, 0.0
    %v246 = vsel %vm214, 1.0, 0.0
    %v247 = vsel %vm215, 1.0, 0.0
    %v248 = vsel %vm216, 1.0, 0.0
    %v249 = vpack.c.bf16 %v218, %v217
    %v250 = vpack.c.bf16 %v220, %v219
    %v251 = vpack.c.bf16 %v222, %v221
    %v252 = vpack.c.bf16 %v224, %v223
    %v253 = vpack.c.bf16 %v226, %v225
    %v254 = vpack.c.bf16 %v228, %v227
    %v255 = vpack.c.bf16 %v230, %v229
    %v256 = vpack.c.bf16 %v232, %v231
    %v257 = vpack.c.bf16 %v234, %v233
    %v258 = vpack.c.bf16 %v236, %v235
    %v259 = vpack.c.bf16 %v238, %v237
    %v260 = vpack.c.bf16 %v240, %v239
    %v261 = vpack.c.bf16 %v242, %v241
    %v262 = vpack.c.bf16 %v244, %v243
    %v263 = vpack.c.bf16 %v246, %v245
    %v264 = vpack.c.bf16 %v248, %v247
    %v265 = vld [vmem:[%s1] sm:$0xf]
    %v266 = vld [vmem:[%s1 + $0x4] sm:$0xf]
    %v267 = vld [vmem:[%s1 + $0x8] sm:$0xf]
    %v268 = vld [vmem:[%s1 + $0xc] sm:$0xf]
    %v269 = vld [vmem:[%s1 + $0x10] sm:$0xf]
    %v270 = vld [vmem:[%s1 + $0x14] sm:$0xf]
    %v271 = vld [vmem:[%s1 + $0x18] sm:$0xf]
    %v272 = vld [vmem:[%s1 + $0x1c] sm:$0xf]
    %v273 = vld [vmem:[%s1 + $0x20] sm:$0xf]
    %v274 = vld [vmem:[%s1 + $0x24] sm:$0xf]
    %v275 = vld [vmem:[%s1 + $0x28] sm:$0xf]
    %v276 = vld [vmem:[%s1 + $0x2c] sm:$0xf]
    %v277 = vld [vmem:[%s1 + $0x30] sm:$0xf]
    %v278 = vld [vmem:[%s1 + $0x34] sm:$0xf]
    %v279 = vld [vmem:[%s1 + $0x38] sm:$0xf]
    %v280 = vld [vmem:[%s1 + $0x3c] sm:$0xf]
    %v297 = vunpack.c.l.b16 %v265
    %v298 = vunpack.c.l.b16 %v266
    %v299 = vunpack.c.l.b16 %v267
    %v300 = vunpack.c.l.b16 %v268
    %v301 = vunpack.c.l.b16 %v269
    %v302 = vunpack.c.l.b16 %v270
    %v303 = vunpack.c.l.b16 %v271
    %v304 = vunpack.c.l.b16 %v272
    %v305 = vunpack.c.l.b16 %v273
    %v306 = vunpack.c.l.b16 %v274
    %v307 = vunpack.c.l.b16 %v275
    %v308 = vunpack.c.l.b16 %v276
    %v309 = vunpack.c.l.b16 %v277
    %v310 = vunpack.c.l.b16 %v278
    %v311 = vunpack.c.l.b16 %v279
    %v312 = vunpack.c.l.b16 %v280
    %v313 = vpack.c.b16 %v298, %v297
    %v314 = vpack.c.b16 %v300, %v299
    %v315 = vpack.c.b16 %v302, %v301
    %v316 = vpack.c.b16 %v304, %v303
    %v317 = vpack.c.b16 %v306, %v305
    %v318 = vpack.c.b16 %v308, %v307
    %v319 = vpack.c.b16 %v310, %v309
    %v320 = vpack.c.b16 %v312, %v311
    %329 = vmatprep.subr.bf16.mxu0 0
    %330 = vmatpush1.bf16.msra.mxu0 %v313
    %331 = vmatprep.subr.bf16.mxu0 0
    %332 = vmatpush1.bf16.msra.mxu0 %v314
    %333 = vmatprep.subr.bf16.mxu0 0
    %334 = vmatpush1.bf16.msra.mxu0 %v315
    %335 = vmatprep.subr.bf16.mxu0 0
    %336 = vmatpush1.bf16.msra.mxu0 %v316
    %337 = vmatprep.subr.bf16.mxu0 0
    %338 = vmatpush1.bf16.msra.mxu0 %v317
    %339 = vmatprep.subr.bf16.mxu0 0
    %340 = vmatpush1.bf16.msra.mxu0 %v318
    %341 = vmatprep.subr.bf16.mxu0 0
    %342 = vmatpush1.bf16.msra.mxu0 %v319
    %343 = vmatprep.subr.bf16.mxu0 0
    %344 = vmatpush1.bf16.msra.mxu0 %v320
    %345 = vmatprep.subr.bf16.mxu0 0
    %346 = vmatpush1.bf16.msra.mxu0 0
    %347 = vmatprep.subr.bf16.mxu0 0
    %348 = vmatpush1.bf16.msra.mxu0 0
    %349 = vmatprep.subr.bf16.mxu0 0
    %350 = vmatpush1.bf16.msra.mxu0 0
    %351 = vmatprep.subr.bf16.mxu0 0
    %352 = vmatpush1.bf16.msra.mxu0 0
    %353 = vmatprep.subr.bf16.mxu0 0
    %354 = vmatpush1.bf16.msra.mxu0 0
    %355 = vmatprep.subr.bf16.mxu0 0
    %356 = vmatpush1.bf16.msra.mxu0 0
    %357 = vmatprep.subr.bf16.mxu0 0
    %358 = vmatpush1.bf16.msra.mxu0 0
    %359 = vmatprep.subr.bf16.mxu0 0
    %360 = vmatpush1.bf16.msra.mxu0 0
    %361 = vmatprep.mubr.bf16.mxu0 0
    %362 = vmatmul.mubr.bf16.gmra.mrb[0].mxu0 %v249
    %v363 = vpop.f32.mrb[0].mxu0
    %v364 = vadd.f32 0.0, %v363
    %v365 = vpop.f32.mrb[0].mxu0
    %v366 = vpop.f32.mrb[0].mxu0
    %v367 = vadd.f32 0.0, %v366
    %v368 = vpop.f32.mrb[0].mxu0
    %369 = vmatprep.mubr.bf16.mxu0 0
    %370 = vmatmul.mubr.bf16.gmra.mrb[0].mxu0 %v250
    %v371 = vpop.f32.mrb[0].mxu0
    %v372 = vadd.f32 0.0, %v371
    %v373 = vpop.f32.mrb[0].mxu0
    %v374 = vpop.f32.mrb[0].mxu0
    %v375 = vadd.f32 0.0, %v374
    %v376 = vpop.f32.mrb[0].mxu0
    %377 = vmatprep.mubr.bf16.mxu0 0
    %378 = vmatmul.mubr.bf16.gmra.mrb[0].mxu0 %v251
    %v379 = vpop.f32.mrb[0].mxu0
    %v380 = vadd.f32 0.0, %v379
    %v381 = vpop.f32.mrb[0].mxu0
    %v382 = vpop.f32.mrb[0].mxu0
    %v383 = vadd.f32 0.0, %v382
    %v384 = vpop.f32.mrb[0].mxu0
    %385 = vmatprep.mubr.bf16.mxu0 0
    %386 = vmatmul.mubr.bf16.gmra.mrb[0].mxu0 %v252
    %v387 = vpop.f32.mrb[0].mxu0
    %v388 = vadd.f32 0.0, %v387
    %v389 = vpop.f32.mrb[0].mxu0
    %v390 = vpop.f32.mrb[0].mxu0
    %v391 = vadd.f32 0.0, %v390
    %v392 = vpop.f32.mrb[0].mxu0
    %393 = vmatprep.mubr.bf16.mxu0 0
    %394 = vmatmul.mubr.bf16.gmra.mrb[0].mxu0 %v253
    %v395 = vpop.f32.mrb[0].mxu0
    %v396 = vadd.f32 0.0, %v395
    %v397 = vpop.f32.mrb[0].mxu0
    %v398 = vpop.f32.mrb[0].mxu0
    %v399 = vadd.f32 0.0, %v398
    %v400 = vpop.f32.mrb[0].mxu0
    %401 = vmatprep.mubr.bf16.mxu0 0
    %402 = vmatmul.mubr.bf16.gmra.mrb[0].mxu0 %v254
    %v403 = vpop.f32.mrb[0].mxu0
    %v404 = vadd.f32 0.0, %v403
    %v405 = vpop.f32.mrb[0].mxu0
    %v406 = vpop.f32.mrb[0].mxu0
    %v407 = vadd.f32 0.0, %v406
    %v408 = vpop.f32.mrb[0].mxu0
    %409 = vmatprep.mubr.bf16.mxu0 0
    %410 = vmatmul.mubr.bf16.gmra.mrb[0].mxu0 %v255
    %v411 = vpop.f32.mrb[0].mxu0
    %v412 = vadd.f32 0.0, %v411
    %v413 = vpop.f32.mrb[0].mxu0
    %v414 = vpop.f32.mrb[0].mxu0
    %v415 = vadd.f32 0.0, %v414
    %v416 = vpop.f32.mrb[0].mxu0
    %417 = vmatprep.mubr.bf16.mxu0 0
    %418 = vmatmul.mubr.bf16.gmra.mrb[0].mxu0 %v256
    %v419 = vpop.f32.mrb[0].mxu0
    %v420 = vadd.f32 0.0, %v419
    %v421 = vpop.f32.mrb[0].mxu0
    %v422 = vpop.f32.mrb[0].mxu0
    %v423 = vadd.f32 0.0, %v422
    %v424 = vpop.f32.mrb[0].mxu0
    %425 = vmatprep.mubr.bf16.mxu0 0
    %426 = vmatmul.mubr.bf16.gmra.mrb[0].mxu0 %v257
    %v427 = vpop.f32.mrb[0].mxu0
    %v428 = vadd.f32 0.0, %v427
    %v429 = vpop.f32.mrb[0].mxu0
    %v430 = vpop.f32.mrb[0].mxu0
    %v431 = vadd.f32 0.0, %v430
    %v432 = vpop.f32.mrb[0].mxu0
    %433 = vmatprep.mubr.bf16.mxu0 0
    %434 = vmatmul.mubr.bf16.gmra.mrb[0].mxu0 %v258
    %v435 = vpop.f32.mrb[0].mxu0
    %v436 = vadd.f32 0.0, %v435
    %v437 = vpop.f32.mrb[0].mxu0
    %v438 = vpop.f32.mrb[0].mxu0
    %v439 = vadd.f32 0.0, %v438
    %v440 = vpop.f32.mrb[0].mxu0
    %441 = vmatprep.mubr.bf16.mxu0 0
    %442 = vmatmul.mubr.bf16.gmra.mrb[0].mxu0 %v259
    %v443 = vpop.f32.mrb[0].mxu0
    %v444 = vadd.f32 0.0, %v443
    %v445 = vpop.f32.mrb[0].mxu0
    %v446 = vpop.f32.mrb[0].mxu0
    %v447 = vadd.f32 0.0, %v446
    %v448 = vpop.f32.mrb[0].mxu0
    %449 = vmatprep.mubr.bf16.mxu0 0
    %450 = vmatmul.mubr.bf16.gmra.mrb[0].mxu0 %v260
    %v451 = vpop.f32.mrb[0].mxu0
    %v452 = vadd.f32 0.0, %v451
    %v453 = vpop.f32.mrb[0].mxu0
    %v454 = vpop.f32.mrb[0].mxu0
    %v455 = vadd.f32 0.0, %v454
    %v456 = vpop.f32.mrb[0].mxu0
    %457 = vmatprep.mubr.bf16.mxu0 0
    %458 = vmatmul.mubr.bf16.gmra.mrb[0].mxu0 %v261
    %v459 = vpop.f32.mrb[0].mxu0
    %v460 = vadd.f32 0.0, %v459
    %v461 = vpop.f32.mrb[0].mxu0
    %v462 = vpop.f32.mrb[0].mxu0
    %v463 = vadd.f32 0.0, %v462
    %v464 = vpop.f32.mrb[0].mxu0
    %465 = vmatprep.mubr.bf16.mxu0 0
    %466 = vmatmul.mubr.bf16.gmra.mrb[0].mxu0 %v262
    %v467 = vpop.f32.mrb[0].mxu0
    %v468 = vadd.f32 0.0, %v467
    %v469 = vpop.f32.mrb[0].mxu0
    %v470 = vpop.f32.mrb[0].mxu0
    %v471 = vadd.f32 0.0, %v470
    %v472 = vpop.f32.mrb[0].mxu0
    %473 = vmatprep.mubr.bf16.mxu0 0
    %474 = vmatmul.mubr.bf16.gmra.mrb[0].mxu0 %v263
    %v475 = vpop.f32.mrb[0].mxu0
    %v476 = vadd.f32 0.0, %v475
    %v477 = vpop.f32.mrb[0].mxu0
    %v478 = vpop.f32.mrb[0].mxu0
    %v479 = vadd.f32 0.0, %v478
    %v480 = vpop.f32.mrb[0].mxu0
    %481 = vmatprep.mubr.bf16.mxu0 0
    %482 = vmatmul.mubr.bf16.gmra.mrb[0].mxu0 %v264
    %v483 = vpop.f32.mrb[0].mxu0
    %v484 = vadd.f32 0.0, %v483
    %v485 = vpop.f32.mrb[0].mxu0
    %v486 = vpop.f32.mrb[0].mxu0
    %v487 = vadd.f32 0.0, %v486
    %v488 = vpop.f32.mrb[0].mxu0
    %489 = vdwg.mxu0
    %v490 = vpack.c.bf16 %v367, %v364
    %v491 = vpack.c.bf16 %v375, %v372
    %v492 = vpack.c.bf16 %v383, %v380
    %v493 = vpack.c.bf16 %v391, %v388
    %v494 = vpack.c.bf16 %v399, %v396
    %v495 = vpack.c.bf16 %v407, %v404
    %v496 = vpack.c.bf16 %v415, %v412
    %v497 = vpack.c.bf16 %v423, %v420
    %v498 = vpack.c.bf16 %v431, %v428
    %v499 = vpack.c.bf16 %v439, %v436
    %v500 = vpack.c.bf16 %v447, %v444
    %v501 = vpack.c.bf16 %v455, %v452
    %v502 = vpack.c.bf16 %v463, %v460
    %v503 = vpack.c.bf16 %v471, %v468
    %v504 = vpack.c.bf16 %v479, %v476
    %v505 = vpack.c.bf16 %v487, %v484
    %v506 = vrot.slane %v364, 1
    %v507 = vrot.slane %v367, 1
    %v508 = vrot.slane %v372, 1
    %v509 = vrot.slane %v375, 1
    %v510 = vrot.slane %v380, 1
    %v511 = vrot.slane %v383, 1
    %v512 = vrot.slane %v388, 1
    %v513 = vrot.slane %v391, 1
    %v514 = vrot.slane %v396, 1
    %v515 = vrot.slane %v399, 1
    %v516 = vrot.slane %v404, 1
    %v517 = vrot.slane %v407, 1
    %v518 = vrot.slane %v412, 1
    %v519 = vrot.slane %v415, 1
    %v520 = vrot.slane %v420, 1
    %v521 = vrot.slane %v423, 1
    %v522 = vrot.slane %v428, 1
    %v523 = vrot.slane %v431, 1
    %v524 = vrot.slane %v436, 1
    %v525 = vrot.slane %v439, 1
    %v526 = vrot.slane %v444, 1
    %v527 = vrot.slane %v447, 1
    %v528 = vrot.slane %v452, 1
    %v529 = vrot.slane %v455, 1
    %v530 = vrot.slane %v460, 1
    %v531 = vrot.slane %v463, 1
    %v532 = vrot.slane %v468, 1
    %v533 = vrot.slane %v471, 1
    %v534 = vrot.slane %v476, 1
    %v535 = vrot.slane %v479, 1
    %v536 = vrot.slane %v484, 1
    %v537 = vrot.slane %v487, 1
    %v538 = vlaneseq
    %v539 = vshrl.u32 %v538, 7
    %vm540 = vcmp.lt.s32.totalorder %v539, 7
    %v541 = vsel %vm540, %v536, %v537
    %v542 = vsel %vm540, %v535, %v536
    %v543 = vsel %vm540, %v534, %v535
    %v544 = vsel %vm540, %v533, %v534
    %v545 = vsel %vm540, %v532, %v533
    %v546 = vsel %vm540, %v531, %v532
    %v547 = vsel %vm540, %v530, %v531
    %v548 = vsel %vm540, %v529, %v530
    %v549 = vsel %vm540, %v528, %v529
    %v550 = vsel %vm540, %v527, %v528
    %v551 = vsel %vm540, %v526, %v527
    %v552 = vsel %vm540, %v525, %v526
    %v553 = vsel %vm540, %v524, %v525
    %v554 = vsel %vm540, %v523, %v524
    %v555 = vsel %vm540, %v522, %v523
    %v556 = vsel %vm540, %v521, %v522
    %v557 = vsel %vm540, %v520, %v521
    %v558 = vsel %vm540, %v519, %v520
    %v559 = vsel %vm540, %v518, %v519
    %v560 = vsel %vm540, %v517, %v518
    %v561 = vsel %vm540, %v516, %v517
    %v562 = vsel %vm540, %v515, %v516
    %v563 = vsel %vm540, %v514, %v515
    %v564 = vsel %vm540, %v513, %v514
    %v565 = vsel %vm540, %v512, %v513
    %v566 = vsel %vm540, %v511, %v512
    %v567 = vsel %vm540, %v510, %v511
    %v568 = vsel %vm540, %v509, %v510
    %v569 = vsel %vm540, %v508, %v509
    %v570 = vsel %vm540, %v507, %v508
    %v571 = vsel %vm540, %v506, %v507
    %v572 = vsel %vm540, %v537, %v506
    %v573 = vpack.c.bf16 %v570, %v571
    %v574 = vpack.c.bf16 %v568, %v569
    %v575 = vpack.c.bf16 %v566, %v567
    %v576 = vpack.c.bf16 %v564, %v565
    %v577 = vpack.c.bf16 %v562, %v563
    %v578 = vpack.c.bf16 %v560, %v561
    %v579 = vpack.c.bf16 %v558, %v559
    %v580 = vpack.c.bf16 %v556, %v557
    %v581 = vpack.c.bf16 %v554, %v555
    %v582 = vpack.c.bf16 %v552, %v553
    %v583 = vpack.c.bf16 %v550, %v551
    %v584 = vpack.c.bf16 %v548, %v549
    %v585 = vpack.c.bf16 %v546, %v547
    %v586 = vpack.c.bf16 %v544, %v545
    %v587 = vpack.c.bf16 %v542, %v543
    %v588 = vpack.c.bf16 %v572, %v541
    %v589 = vrot.slane %v364, 2
    %v590 = vrot.slane %v367, 2
    %v591 = vrot.slane %v372, 2
    %v592 = vrot.slane %v375, 2
    %v593 = vrot.slane %v380, 2
    %v594 = vrot.slane %v383, 2
    %v595 = vrot.slane %v388, 2
    %v596 = vrot.slane %v391, 2
    %v597 = vrot.slane %v396, 2
    %v598 = vrot.slane %v399, 2
    %v599 = vrot.slane %v404, 2
    %v600 = vrot.slane %v407, 2
    %v601 = vrot.slane %v412, 2
    %v602 = vrot.slane %v415, 2
    %v603 = vrot.slane %v420, 2
    %v604 = vrot.slane %v423, 2
    %v605 = vrot.slane %v428, 2
    %v606 = vrot.slane %v431, 2
    %v607 = vrot.slane %v436, 2
    %v608 = vrot.slane %v439, 2
    %v609 = vrot.slane %v444, 2
    %v610 = vrot.slane %v447, 2
    %v611 = vrot.slane %v452, 2
    %v612 = vrot.slane %v455, 2
    %v613 = vrot.slane %v460, 2
    %v614 = vrot.slane %v463, 2
    %v615 = vrot.slane %v468, 2
    %v616 = vrot.slane %v471, 2
    %v617 = vrot.slane %v476, 2
    %v618 = vrot.slane %v479, 2
    %v619 = vrot.slane %v484, 2
    %v620 = vrot.slane %v487, 2
    %vm621 = vcmp.lt.s32.totalorder %v539, 6
    %v622 = vsel %vm621, %v619, %v620
    %v623 = vsel %vm621, %v618, %v619
    %v624 = vsel %vm621, %v617, %v618
    %v625 = vsel %vm621, %v616, %v617
    %v626 = vsel %vm621, %v615, %v616
    %v627 = vsel %vm621, %v614, %v615
    %v628 = vsel %vm621, %v613, %v614
    %v629 = vsel %vm621, %v612, %v613
    %v630 = vsel %vm621, %v611, %v612
    %v631 = vsel %vm621, %v610, %v611
    %v632 = vsel %vm621, %v609, %v610
    %v633 = vsel %vm621, %v608, %v609
    %v634 = vsel %vm621, %v607, %v608
    %v635 = vsel %vm621, %v606, %v607
    %v636 = vsel %vm621, %v605, %v606
    %v637 = vsel %vm621, %v604, %v605
    %v638 = vsel %vm621, %v603, %v604
    %v639 = vsel %vm621, %v602, %v603
    %v640 = vsel %vm621, %v601, %v602
    %v641 = vsel %vm621, %v600, %v601
    %v642 = vsel %vm621, %v599, %v600
    %v643 = vsel %vm621, %v598, %v599
    %v644 = vsel %vm621, %v597, %v598
    %v645 = vsel %vm621, %v596, %v597
    %v646 = vsel %vm621, %v595, %v596
    %v647 = vsel %vm621, %v594, %v595
    %v648 = vsel %vm621, %v593, %v594
    %v649 = vsel %vm621, %v592, %v593
    %v650 = vsel %vm621, %v591, %v592
    %v651 = vsel %vm621, %v590, %v591
    %v652 = vsel %vm621, %v589, %v590
    %v653 = vsel %vm621, %v620, %v589
    %v654 = vpack.c.bf16 %v651, %v652
    %v655 = vpack.c.bf16 %v649, %v650
    %v656 = vpack.c.bf16 %v647, %v648
    %v657 = vpack.c.bf16 %v645, %v646
    %v658 = vpack.c.bf16 %v643, %v644
    %v659 = vpack.c.bf16 %v641, %v642
    %v660 = vpack.c.bf16 %v639, %v640
    %v661 = vpack.c.bf16 %v637, %v638
    %v662 = vpack.c.bf16 %v635, %v636
    %v663 = vpack.c.bf16 %v633, %v634
    %v664 = vpack.c.bf16 %v631, %v632
    %v665 = vpack.c.bf16 %v629, %v630
    %v666 = vpack.c.bf16 %v627, %v628
    %v667 = vpack.c.bf16 %v625, %v626
    %v668 = vpack.c.bf16 %v623, %v624
    %v669 = vpack.c.bf16 %v653, %v622
    %v670 = vrot.slane %v364, 3
    %v671 = vrot.slane %v367, 3
    %v672 = vrot.slane %v372, 3
    %v673 = vrot.slane %v375, 3
    %v674 = vrot.slane %v380, 3
    %v675 = vrot.slane %v383, 3
    %v676 = vrot.slane %v388, 3
    %v677 = vrot.slane %v391, 3
    %v678 = vrot.slane %v396, 3
    %v679 = vrot.slane %v399, 3
    %v680 = vrot.slane %v404, 3
    %v681 = vrot.slane %v407, 3
    %v682 = vrot.slane %v412, 3
    %v683 = vrot.slane %v415, 3
    %v684 = vrot.slane %v420, 3
    %v685 = vrot.slane %v423, 3
    %v686 = vrot.slane %v428, 3
    %v687 = vrot.slane %v431, 3
    %v688 = vrot.slane %v436, 3
    %v689 = vrot.slane %v439, 3
    %v690 = vrot.slane %v444, 3
    %v691 = vrot.slane %v447, 3
    %v692 = vrot.slane %v452, 3
    %v693 = vrot.slane %v455, 3
    %v694 = vrot.slane %v460, 3
    %v695 = vrot.slane %v463, 3
    %v696 = vrot.slane %v468, 3
    %v697 = vrot.slane %v471, 3
    %v698 = vrot.slane %v476, 3
    %v699 = vrot.slane %v479, 3
    %v700 = vrot.slane %v484, 3
    %v701 = vrot.slane %v487, 3
    %vm702 = vcmp.lt.s32.totalorder %v539, 5
    %v703 = vsel %vm702, %v700, %v701
    %v704 = vsel %vm702, %v699, %v700
    %v705 = vsel %vm702, %v698, %v699
    %v706 = vsel %vm702, %v697, %v698
    %v707 = vsel %vm702, %v696, %v697
    %v708 = vsel %vm702, %v695, %v696
    %v709 = vsel %vm702, %v694, %v695
    %v710 = vsel %vm702, %v693, %v694
    %v711 = vsel %vm702, %v692, %v693
    %v712 = vsel %vm702, %v691, %v692
    %v713 = vsel %vm702, %v690, %v691
    %v714 = vsel %vm702, %v689, %v690
    %v715 = vsel %vm702, %v688, %v689
    %v716 = vsel %vm702, %v687, %v688
    %v717 = vsel %vm702, %v686, %v687
    %v718 = vsel %vm702, %v685, %v686
    %v719 = vsel %vm702, %v684, %v685
    %v720 = vsel %vm702, %v683, %v684
    %v721 = vsel %vm702, %v682, %v683
    %v722 = vsel %vm702, %v681, %v682
    %v723 = vsel %vm702, %v680, %v681
    %v724 = vsel %vm702, %v679, %v680
    %v725 = vsel %vm702, %v678, %v679
    %v726 = vsel %vm702, %v677, %v678
    %v727 = vsel %vm702, %v676, %v677
    %v728 = vsel %vm702, %v675, %v676
    %v729 = vsel %vm702, %v674, %v675
    %v730 = vsel %vm702, %v673, %v674
    %v731 = vsel %vm702, %v672, %v673
    %v732 = vsel %vm702, %v671, %v672
    %v733 = vsel %vm702, %v670, %v671
    %v734 = vsel %vm702, %v701, %v670
    %v735 = vpack.c.bf16 %v732, %v733
    %v736 = vpack.c.bf16 %v730, %v731
    %v737 = vpack.c.bf16 %v728, %v729
    %v738 = vpack.c.bf16 %v726, %v727
    %v739 = vpack.c.bf16 %v724, %v725
    %v740 = vpack.c.bf16 %v722, %v723
    %v741 = vpack.c.bf16 %v720, %v721
    %v742 = vpack.c.bf16 %v718, %v719
    %v743 = vpack.c.bf16 %v716, %v717
    %v744 = vpack.c.bf16 %v714, %v715
    %v745 = vpack.c.bf16 %v712, %v713
    %v746 = vpack.c.bf16 %v710, %v711
    %v747 = vpack.c.bf16 %v708, %v709
    %v748 = vpack.c.bf16 %v706, %v707
    %v749 = vpack.c.bf16 %v704, %v705
    %v750 = vpack.c.bf16 %v734, %v703
    %v751 = vrot.slane %v364, 4
    %v752 = vrot.slane %v367, 4
    %v753 = vrot.slane %v372, 4
    %v754 = vrot.slane %v375, 4
    %v755 = vrot.slane %v380, 4
    %v756 = vrot.slane %v383, 4
    %v757 = vrot.slane %v388, 4
    %v758 = vrot.slane %v391, 4
    %v759 = vrot.slane %v396, 4
    %v760 = vrot.slane %v399, 4
    %v761 = vrot.slane %v404, 4
    %v762 = vrot.slane %v407, 4
    %v763 = vrot.slane %v412, 4
    %v764 = vrot.slane %v415, 4
    %v765 = vrot.slane %v420, 4
    %v766 = vrot.slane %v423, 4
    %v767 = vrot.slane %v428, 4
    %v768 = vrot.slane %v431, 4
    %v769 = vrot.slane %v436, 4
    %v770 = vrot.slane %v439, 4
    %v771 = vrot.slane %v444, 4
    %v772 = vrot.slane %v447, 4
    %v773 = vrot.slane %v452, 4
    %v774 = vrot.slane %v455, 4
    %v775 = vrot.slane %v460, 4
    %v776 = vrot.slane %v463, 4
    %v777 = vrot.slane %v468, 4
    %v778 = vrot.slane %v471, 4
    %v779 = vrot.slane %v476, 4
    %v780 = vrot.slane %v479, 4
    %v781 = vrot.slane %v484, 4
    %v782 = vrot.slane %v487, 4
    %vm783 = vcmp.lt.s32.totalorder %v539, 4
    %v784 = vsel %vm783, %v781, %v782
    %v785 = vsel %vm783, %v780, %v781
    %v786 = vsel %vm783, %v779, %v780
    %v787 = vsel %vm783, %v778, %v779
    %v788 = vsel %vm783, %v777, %v778
    %v789 = vsel %vm783, %v776, %v777
    %v790 = vsel %vm783, %v775, %v776
    %v791 = vsel %vm783, %v774, %v775
    %v792 = vsel %vm783, %v773, %v774
    %v793 = vsel %vm783, %v772, %v773
    %v794 = vsel %vm783, %v771, %v772
    %v795 = vsel %vm783, %v770, %v771
    %v796 = vsel %vm783, %v769, %v770
    %v797 = vsel %vm783, %v768, %v769
    %v798 = vsel %vm783, %v767, %v768
    %v799 = vsel %vm783, %v766, %v767
    %v800 = vsel %vm783, %v765, %v766
    %v801 = vsel %vm783, %v764, %v765
    %v802 = vsel %vm783, %v763, %v764
    %v803 = vsel %vm783, %v762, %v763
    %v804 = vsel %vm783, %v761, %v762
    %v805 = vsel %vm783, %v760, %v761
    %v806 = vsel %vm783, %v759, %v760
    %v807 = vsel %vm783, %v758, %v759
    %v808 = vsel %vm783, %v757, %v758
    %v809 = vsel %vm783, %v756, %v757
    %v810 = vsel %vm783, %v755, %v756
    %v811 = vsel %vm783, %v754, %v755
    %v812 = vsel %vm783, %v753, %v754
    %v813 = vsel %vm783, %v752, %v753
    %v814 = vsel %vm783, %v751, %v752
    %v815 = vsel %vm783, %v782, %v751
    %v816 = vpack.c.bf16 %v813, %v814
    %v817 = vpack.c.bf16 %v811, %v812
    %v818 = vpack.c.bf16 %v809, %v810
    %v819 = vpack.c.bf16 %v807, %v808
    %v820 = vpack.c.bf16 %v805, %v806
    %v821 = vpack.c.bf16 %v803, %v804
    %v822 = vpack.c.bf16 %v801, %v802
    %v823 = vpack.c.bf16 %v799, %v800
    %v824 = vpack.c.bf16 %v797, %v798
    %v825 = vpack.c.bf16 %v795, %v796
    %v826 = vpack.c.bf16 %v793, %v794
    %v827 = vpack.c.bf16 %v791, %v792
    %v828 = vpack.c.bf16 %v789, %v790
    %v829 = vpack.c.bf16 %v787, %v788
    %v830 = vpack.c.bf16 %v785, %v786
    %v831 = vpack.c.bf16 %v815, %v784
    %v832 = vld [vmem:[#allocation2] sm:$0xff]
    %v833 = vld [vmem:[#allocation2 + $0x8] sm:$0xf]
    %v834 = vld [vmem:[#allocation2 + $0xc] sm:$0xff]
    %v835 = vld [vmem:[#allocation2 + $0x14] sm:$0xf]
    %v836 = vld [vmem:[#allocation2 + $0x18] sm:$0xff]
    %v837 = vld [vmem:[#allocation2 + $0x20] sm:$0xf]
    %v838 = vld [vmem:[#allocation2 + $0x24] sm:$0xff]
    %v839 = vld [vmem:[#allocation2 + $0x2c] sm:$0xf]
    %v840 = vld [vmem:[#allocation2 + $0x30] sm:$0xff]
    %v841 = vld [vmem:[#allocation2 + $0x38] sm:$0xf]
    %v842 = vld [vmem:[#allocation2 + $0x3c] sm:$0xff]
    %v843 = vld [vmem:[#allocation2 + $0x44] sm:$0xf]
    %v844 = vld [vmem:[#allocation2 + $0x48] sm:$0xff]
    %v845 = vld [vmem:[#allocation2 + $0x50] sm:$0xf]
    %v846 = vld [vmem:[#allocation2 + $0x54] sm:$0xff]
    %v847 = vld [vmem:[#allocation2 + $0x5c] sm:$0xf]
    %v848 = vld [vmem:[#allocation2 + $0x60] sm:$0xff]
    %v849 = vld [vmem:[#allocation2 + $0x68] sm:$0xf]
    %v850 = vld [vmem:[#allocation2 + $0x6c] sm:$0xff]
    %v851 = vld [vmem:[#allocation2 + $0x74] sm:$0xf]
    %v852 = vld [vmem:[#allocation2 + $0x78] sm:$0xff]
    %v853 = vld [vmem:[#allocation2 + $0x80] sm:$0xf]
    %v854 = vld [vmem:[#allocation2 + $0x84] sm:$0xff]
    %v855 = vld [vmem:[#allocation2 + $0x8c] sm:$0xf]
    %v856 = vld [vmem:[#allocation2 + $0x90] sm:$0xff]
    %v857 = vld [vmem:[#allocation2 + $0x98] sm:$0xf]
    %v858 = vld [vmem:[#allocation2 + $0x9c] sm:$0xff]
    %v859 = vld [vmem:[#allocation2 + $0xa4] sm:$0xf]
    %v860 = vld [vmem:[#allocation2 + $0xa8] sm:$0xff]
    %v861 = vld [vmem:[#allocation2 + $0xb0] sm:$0xf]
    %v862 = vld [vmem:[#allocation2 + $0xb4] sm:$0xff]
    %v863 = vld [vmem:[#allocation2 + $0xbc] sm:$0xf]
    %v864 = vld [vmem:[#allocation2 + $0xc0] sm:$0xff]
    %v865 = vld [vmem:[#allocation2 + $0xc8] sm:$0xf]
    %v866 = vld [vmem:[#allocation2 + $0xcc] sm:$0xff]
    %v867 = vld [vmem:[#allocation2 + $0xd4] sm:$0xf]
    %v868 = vld [vmem:[#allocation2 + $0xd8] sm:$0xff]
    %v869 = vld [vmem:[#allocation2 + $0xe0] sm:$0xf]
    %v870 = vld [vmem:[#allocation2 + $0xe4] sm:$0xff]
    %v871 = vld [vmem:[#allocation2 + $0xec] sm:$0xf]
    %v872 = vld [vmem:[#allocation2 + $0xf0] sm:$0xff]
    %v873 = vld [vmem:[#allocation2 + $0xf8] sm:$0xf]
    %v874 = vld [vmem:[#allocation2 + $0xfc] sm:$0xff]
    %v875 = vld [vmem:[#allocation2 + $0x104] sm:$0xf]
    %v876 = vld [vmem:[#allocation2 + $0x108] sm:$0xff]
    %v877 = vld [vmem:[#allocation2 + $0x110] sm:$0xf]
    %v878 = vld [vmem:[#allocation2 + $0x114] sm:$0xff]
    %v879 = vld [vmem:[#allocation2 + $0x11c] sm:$0xf]
    %v880 = vld [vmem:[#allocation2 + $0x120] sm:$0xff]
    %v881 = vld [vmem:[#allocation2 + $0x128] sm:$0xf]
    %v882 = vld [vmem:[#allocation2 + $0x12c] sm:$0xff]
    %v883 = vld [vmem:[#allocation2 + $0x134] sm:$0xf]
    %v884 = vld [vmem:[#allocation2 + $0x138] sm:$0xff]
    %v885 = vld [vmem:[#allocation2 + $0x140] sm:$0xf]
    %v886 = vld [vmem:[#allocation2 + $0x144] sm:$0xff]
    %v887 = vld [vmem:[#allocation2 + $0x14c] sm:$0xf]
    %v888 = vld [vmem:[#allocation2 + $0x150] sm:$0xff]
    %v889 = vld [vmem:[#allocation2 + $0x158] sm:$0xf]
    %v890 = vld [vmem:[#allocation2 + $0x15c] sm:$0xff]
    %v891 = vld [vmem:[#allocation2 + $0x164] sm:$0xf]
    %v892 = vld [vmem:[#allocation2 + $0x168] sm:$0xff]
    %v893 = vld [vmem:[#allocation2 + $0x170] sm:$0xf]
    %v894 = vld [vmem:[#allocation2 + $0x174] sm:$0xff]
    %v895 = vld [vmem:[#allocation2 + $0x17c] sm:$0xf]
    %v896 = vld [vmem:[#allocation2 + $0x180] sm:$0xff]
    %v897 = vld [vmem:[#allocation2 + $0x188] sm:$0xf]
    %v898 = vld [vmem:[#allocation2 + $0x18c] sm:$0xff]
    %v899 = vld [vmem:[#allocation2 + $0x194] sm:$0xf]
    %v900 = vld [vmem:[#allocation2 + $0x198] sm:$0xff]
    %v901 = vld [vmem:[#allocation2 + $0x1a0] sm:$0xf]
    %v902 = vld [vmem:[#allocation2 + $0x1a4] sm:$0xff]
    %v903 = vld [vmem:[#allocation2 + $0x1ac] sm:$0xf]
    %v904 = vld [vmem:[#allocation2 + $0x1b0] sm:$0xff]
    %v905 = vld [vmem:[#allocation2 + $0x1b8] sm:$0xf]
    %v906 = vld [vmem:[#allocation2 + $0x1bc] sm:$0xff]
    %v907 = vld [vmem:[#allocation2 + $0x1c4] sm:$0xf]
    %v908 = vld [vmem:[#allocation2 + $0x1c8] sm:$0xff]
    %v909 = vld [vmem:[#allocation2 + $0x1d0] sm:$0xf]
    %v910 = vld [vmem:[#allocation2 + $0x1d4] sm:$0xff]
    %v911 = vld [vmem:[#allocation2 + $0x1dc] sm:$0xf]
    %v912 = vld [vmem:[#allocation2 + $0x1e0] sm:$0xff]
    %v913 = vld [vmem:[#allocation2 + $0x1e8] sm:$0xf]
    %v914 = vld [vmem:[#allocation2 + $0x1ec] sm:$0xff]
    %v915 = vld [vmem:[#allocation2 + $0x1f4] sm:$0xf]
    %v916 = vld [vmem:[#allocation2 + $0x1f8] sm:$0xff]
    %v917 = vld [vmem:[#allocation2 + $0x200] sm:$0xf]
    %v918 = vld [vmem:[#allocation2 + $0x204] sm:$0xff]
    %v919 = vld [vmem:[#allocation2 + $0x20c] sm:$0xf]
    %v920 = vld [vmem:[#allocation2 + $0x210] sm:$0xff]
    %v921 = vld [vmem:[#allocation2 + $0x218] sm:$0xf]
    %v922 = vld [vmem:[#allocation2 + $0x21c] sm:$0xff]
    %v923 = vld [vmem:[#allocation2 + $0x224] sm:$0xf]
    %v924 = vld [vmem:[#allocation2 + $0x228] sm:$0xff]
    %v925 = vld [vmem:[#allocation2 + $0x230] sm:$0xf]
    %v926 = vld [vmem:[#allocation2 + $0x234] sm:$0xff]
    %v927 = vld [vmem:[#allocation2 + $0x23c] sm:$0xf]
    %v928 = vld [vmem:[#allocation2 + $0x240] sm:$0xff]
    %v929 = vld [vmem:[#allocation2 + $0x248] sm:$0xf]
    %v930 = vld [vmem:[#allocation2 + $0x24c] sm:$0xff]
    %v931 = vld [vmem:[#allocation2 + $0x254] sm:$0xf]
    %v932 = vld [vmem:[#allocation2 + $0x258] sm:$0xff]
    %v933 = vld [vmem:[#allocation2 + $0x260] sm:$0xf]
    %v934 = vld [vmem:[#allocation2 + $0x264] sm:$0xff]
    %v935 = vld [vmem:[#allocation2 + $0x26c] sm:$0xf]
    %v936 = vld [vmem:[#allocation2 + $0x270] sm:$0xff]
    %v937 = vld [vmem:[#allocation2 + $0x278] sm:$0xf]
    %v938 = vld [vmem:[#allocation2 + $0x27c] sm:$0xff]
    %v939 = vld [vmem:[#allocation2 + $0x284] sm:$0xf]
    %v940 = vld [vmem:[#allocation2 + $0x288] sm:$0xff]
    %v941 = vld [vmem:[#allocation2 + $0x290] sm:$0xf]
    %v942 = vld [vmem:[#allocation2 + $0x294] sm:$0xff]
    %v943 = vld [vmem:[#allocation2 + $0x29c] sm:$0xf]
    %v944 = vld [vmem:[#allocation2 + $0x2a0] sm:$0xff]
    %v945 = vld [vmem:[#allocation2 + $0x2a8] sm:$0xf]
    %v946 = vld [vmem:[#allocation2 + $0x2ac] sm:$0xff]
    %v947 = vld [vmem:[#allocation2 + $0x2b4] sm:$0xf]
    %v948 = vld [vmem:[#allocation2 + $0x2b8] sm:$0xff]
    %v949 = vld [vmem:[#allocation2 + $0x2c0] sm:$0xf]
    %v950 = vld [vmem:[#allocation2 + $0x2c4] sm:$0xff]
    %v951 = vld [vmem:[#allocation2 + $0x2cc] sm:$0xf]
    %v952 = vld [vmem:[#allocation2 + $0x2d0] sm:$0xff]
    %v953 = vld [vmem:[#allocation2 + $0x2d8] sm:$0xf]
    %v954 = vld [vmem:[#allocation2 + $0x2dc] sm:$0xff]
    %v955 = vld [vmem:[#allocation2 + $0x2e4] sm:$0xf]
    %v956 = vld [vmem:[#allocation2 + $0x2e8] sm:$0xff]
    %v957 = vld [vmem:[#allocation2 + $0x2f0] sm:$0xf]
    %v958 = vld [vmem:[#allocation2 + $0x2f4] sm:$0xff]
    %v959 = vld [vmem:[#allocation2 + $0x2fc] sm:$0xf]
    %v960 = vld [vmem:[#allocation2 + $0x300] sm:$0xff]
    %v961 = vld [vmem:[#allocation2 + $0x308] sm:$0xf]
    %v962 = vld [vmem:[#allocation2 + $0x30c] sm:$0xff]
    %v963 = vld [vmem:[#allocation2 + $0x314] sm:$0xf]
    %v964 = vld [vmem:[#allocation2 + $0x318] sm:$0xff]
    %v965 = vld [vmem:[#allocation2 + $0x320] sm:$0xf]
    %v966 = vld [vmem:[#allocation2 + $0x324] sm:$0xff]
    %v967 = vld [vmem:[#allocation2 + $0x32c] sm:$0xf]
    %v968 = vld [vmem:[#allocation2 + $0x330] sm:$0xff]
    %v969 = vld [vmem:[#allocation2 + $0x338] sm:$0xf]
    %v970 = vld [vmem:[#allocation2 + $0x33c] sm:$0xff]
    %v971 = vld [vmem:[#allocation2 + $0x344] sm:$0xf]
    %v972 = vld [vmem:[#allocation2 + $0x348] sm:$0xff]
    %v973 = vld [vmem:[#allocation2 + $0x350] sm:$0xf]
    %v974 = vld [vmem:[#allocation2 + $0x354] sm:$0xff]
    %v975 = vld [vmem:[#allocation2 + $0x35c] sm:$0xf]
    %v976 = vld [vmem:[#allocation2 + $0x360] sm:$0xff]
    %v977 = vld [vmem:[#allocation2 + $0x368] sm:$0xf]
    %v978 = vld [vmem:[#allocation2 + $0x36c] sm:$0xff]
    %v979 = vld [vmem:[#allocation2 + $0x374] sm:$0xf]
    %v980 = vld [vmem:[#allocation2 + $0x378] sm:$0xff]
    %v981 = vld [vmem:[#allocation2 + $0x380] sm:$0xf]
    %v982 = vld [vmem:[#allocation2 + $0x384] sm:$0xff]
    %v983 = vld [vmem:[#allocation2 + $0x38c] sm:$0xf]
    %v984 = vld [vmem:[#allocation2 + $0x390] sm:$0xff]
    %v985 = vld [vmem:[#allocation2 + $0x398] sm:$0xf]
    %v986 = vld [vmem:[#allocation2 + $0x39c] sm:$0xff]
    %v987 = vld [vmem:[#allocation2 + $0x3a4] sm:$0xf]
    %v988 = vld [vmem:[#allocation2 + $0x3a8] sm:$0xff]
    %v989 = vld [vmem:[#allocation2 + $0x3b0] sm:$0xf]
    %v990 = vld [vmem:[#allocation2 + $0x3b4] sm:$0xff]
    %v991 = vld [vmem:[#allocation2 + $0x3bc] sm:$0xf]
    %v992 = vld [vmem:[%s3] sm:$0x7]
    %v994 = vlaneseq
    %v995 = vshrl.u32 %v994, 7
    %v996 = vsub.s32 0, %v995
    %v997 = vrot.slane %v992, %v996
    %v998 = vlaneseq
    %v999 = vshrl.u32 %v998, 7
    %v1000 = vsub.s32 1, %v999
    %v1001 = vrot.slane %v992, %v1000
    %v1002 = vlaneseq
    %v1003 = vshrl.u32 %v1002, 7
    %v1004 = vsub.s32 2, %v1003
    %v1005 = vrot.slane %v992, %v1004
    %v1169 = vunpack.c.l.b16 %v832
    %v1170 = vunpack.c.h.b16 %v832
    %v1171 = vunpack.c.l.b16 %v833
    %v1172 = vunpack.c.l.b16 %v834
    %v1173 = vunpack.c.h.b16 %v834
    %v1174 = vunpack.c.l.b16 %v835
    %v1175 = vunpack.c.l.b16 %v836
    %v1176 = vunpack.c.h.b16 %v836
    %v1177 = vunpack.c.l.b16 %v837
    %v1178 = vunpack.c.l.b16 %v838
    %v1179 = vunpack.c.h.b16 %v838
    %v1180 = vunpack.c.l.b16 %v839
    %v1181 = vunpack.c.l.b16 %v840
    %v1182 = vunpack.c.h.b16 %v840
    %v1183 = vunpack.c.l.b16 %v841
    %v1184 = vunpack.c.l.b16 %v842
    %v1185 = vunpack.c.h.b16 %v842
    %v1186 = vunpack.c.l.b16 %v843
    %v1187 = vunpack.c.l.b16 %v844
    %v1188 = vunpack.c.h.b16 %v844
    %v1189 = vunpack.c.l.b16 %v845
    %v1190 = vunpack.c.l.b16 %v846
    %v1191 = vunpack.c.h.b16 %v846
    %v1192 = vunpack.c.l.b16 %v847
    %v1193 = vunpack.c.l.b16 %v848
    %v1194 = vunpack.c.h.b16 %v848
    %v1195 = vunpack.c.l.b16 %v849
    %v1196 = vunpack.c.l.b16 %v850
    %v1197 = vunpack.c.h.b16 %v850
    %v1198 = vunpack.c.l.b16 %v851
    %v1199 = vunpack.c.l.b16 %v852
    %v1200 = vunpack.c.h.b16 %v852
    %v1201 = vunpack.c.l.b16 %v853
    %v1202 = vunpack.c.l.b16 %v854
    %v1203 = vunpack.c.h.b16 %v854
    %v1204 = vunpack.c.l.b16 %v855
    %v1205 = vunpack.c.l.b16 %v856
    %v1206 = vunpack.c.h.b16 %v856
    %v1207 = vunpack.c.l.b16 %v857
    %v1208 = vunpack.c.l.b16 %v858
    %v1209 = vunpack.c.h.b16 %v858
    %v1210 = vunpack.c.l.b16 %v859
    %v1211 = vunpack.c.l.b16 %v860
    %v1212 = vunpack.c.h.b16 %v860
    %v1213 = vunpack.c.l.b16 %v861
    %v1214 = vunpack.c.l.b16 %v862
    %v1215 = vunpack.c.h.b16 %v862
    %v1216 = vunpack.c.l.b16 %v863
    %v1217 = vunpack.c.l.b16 %v864
    %v1218 = vunpack.c.h.b16 %v864
    %v1219 = vunpack.c.l.b16 %v865
    %v1220 = vunpack.c.l.b16 %v866
    %v1221 = vunpack.c.h.b16 %v866
    %v1222 = vunpack.c.l.b16 %v867
    %v1223 = vunpack.c.l.b16 %v868
    %v1224 = vunpack.c.h.b16 %v868
    %v1225 = vunpack.c.l.b16 %v869
    %v1226 = vunpack.c.l.b16 %v870
    %v1227 = vunpack.c.h.b16 %v870
    %v1228 = vunpack.c.l.b16 %v871
    %v1229 = vunpack.c.l.b16 %v872
    %v1230 = vunpack.c.h.b16 %v872
    %v1231 = vunpack.c.l.b16 %v873
    %v1232 = vunpack.c.l.b16 %v874
    %v1233 = vunpack.c.h.b16 %v874
    %v1234 = vunpack.c.l.b16 %v875
    %v1235 = vunpack.c.l.b16 %v876
    %v1236 = vunpack.c.h.b16 %v876
    %v1237 = vunpack.c.l.b16 %v877
    %v1238 = vunpack.c.l.b16 %v878
    %v1239 = vunpack.c.h.b16 %v878
    %v1240 = vunpack.c.l.b16 %v879
    %v1241 = vunpack.c.l.b16 %v880
    %v1242 = vunpack.c.h.b16 %v880
    %v1243 = vunpack.c.l.b16 %v881
    %v1244 = vunpack.c.l.b16 %v882
    %v1245 = vunpack.c.h.b16 %v882
    %v1246 = vunpack.c.l.b16 %v883
    %v1247 = vunpack.c.l.b16 %v884
    %v1248 = vunpack.c.h.b16 %v884
    %v1249 = vunpack.c.l.b16 %v885
    %v1250 = vunpack.c.l.b16 %v886
    %v1251 = vunpack.c.h.b16 %v886
    %v1252 = vunpack.c.l.b16 %v887
    %v1253 = vunpack.c.l.b16 %v888
    %v1254 = vunpack.c.h.b16 %v888
    %v1255 = vunpack.c.l.b16 %v889
    %v1256 = vunpack.c.l.b16 %v890
    %v1257 = vunpack.c.h.b16 %v890
    %v1258 = vunpack.c.l.b16 %v891
    %v1259 = vunpack.c.l.b16 %v892
    %v1260 = vunpack.c.h.b16 %v892
    %v1261 = vunpack.c.l.b16 %v893
    %v1262 = vunpack.c.l.b16 %v894
    %v1263 = vunpack.c.h.b16 %v894
    %v1264 = vunpack.c.l.b16 %v895
    %v1265 = vunpack.c.l.b16 %v896
    %v1266 = vunpack.c.h.b16 %v896
    %v1267 = vunpack.c.l.b16 %v897
    %v1268 = vunpack.c.l.b16 %v898
    %v1269 = vunpack.c.h.b16 %v898
    %v1270 = vunpack.c.l.b16 %v899
    %v1271 = vunpack.c.l.b16 %v900
    %v1272 = vunpack.c.h.b16 %v900
    %v1273 = vunpack.c.l.b16 %v901
    %v1274 = vunpack.c.l.b16 %v902
    %v1275 = vunpack.c.h.b16 %v902
    %v1276 = vunpack.c.l.b16 %v903
    %v1277 = vunpack.c.l.b16 %v904
    %v1278 = vunpack.c.h.b16 %v904
    %v1279 = vunpack.c.l.b16 %v905
    %v1280 = vunpack.c.l.b16 %v906
    %v1281 = vunpack.c.h.b16 %v906
    %v1282 = vunpack.c.l.b16 %v907
    %v1283 = vunpack.c.l.b16 %v908
    %v1284 = vunpack.c.h.b16 %v908
    %v1285 = vunpack.c.l.b16 %v909
    %v1286 = vunpack.c.l.b16 %v910
    %v1287 = vunpack.c.h.b16 %v910
    %v1288 = vunpack.c.l.b16 %v911
    %v1289 = vunpack.c.l.b16 %v912
    %v1290 = vunpack.c.h.b16 %v912
    %v1291 = vunpack.c.l.b16 %v913
    %v1292 = vunpack.c.l.b16 %v914
    %v1293 = vunpack.c.h.b16 %v914
    %v1294 = vunpack.c.l.b16 %v915
    %v1295 = vunpack.c.l.b16 %v916
    %v1296 = vunpack.c.h.b16 %v916
    %v1297 = vunpack.c.l.b16 %v917
    %v1298 = vunpack.c.l.b16 %v918
    %v1299 = vunpack.c.h.b16 %v918
    %v1300 = vunpack.c.l.b16 %v919
    %v1301 = vunpack.c.l.b16 %v920
    %v1302 = vunpack.c.h.b16 %v920
    %v1303 = vunpack.c.l.b16 %v921
    %v1304 = vunpack.c.l.b16 %v922
    %v1305 = vunpack.c.h.b16 %v922
    %v1306 = vunpack.c.l.b16 %v923
    %v1307 = vunpack.c.l.b16 %v924
    %v1308 = vunpack.c.h.b16 %v924
    %v1309 = vunpack.c.l.b16 %v925
    %v1310 = vunpack.c.l.b16 %v926
    %v1311 = vunpack.c.h.b16 %v926
    %v1312 = vunpack.c.l.b16 %v927
    %v1313 = vunpack.c.l.b16 %v928
    %v1314 = vunpack.c.h.b16 %v928
    %v1315 = vunpack.c.l.b16 %v929
    %v1316 = vunpack.c.l.b16 %v930
    %v1317 = vunpack.c.h.b16 %v930
    %v1318 = vunpack.c.l.b16 %v931
    %v1319 = vunpack.c.l.b16 %v932
    %v1320 = vunpack.c.h.b16 %v932
    %v1321 = vunpack.c.l.b16 %v933
    %v1322 = vunpack.c.l.b16 %v934
    %v1323 = vunpack.c.h.b16 %v934
    %v1324 = vunpack.c.l.b16 %v935
    %v1325 = vunpack.c.l.b16 %v936
    %v1326 = vunpack.c.h.b16 %v936
    %v1327 = vunpack.c.l.b16 %v937
    %v1328 = vunpack.c.l.b16 %v938
    %v1329 = vunpack.c.h.b16 %v938
    %v1330 = vunpack.c.l.b16 %v939
    %v1331 = vunpack.c.l.b16 %v940
    %v1332 = vunpack.c.h.b16 %v940
    %v1333 = vunpack.c.l.b16 %v941
    %v1334 = vunpack.c.l.b16 %v942
    %v1335 = vunpack.c.h.b16 %v942
    %v1336 = vunpack.c.l.b16 %v943
    %v1337 = vunpack.c.l.b16 %v944
    %v1338 = vunpack.c.h.b16 %v944
    %v1339 = vunpack.c.l.b16 %v945
    %v1340 = vunpack.c.l.b16 %v946
    %v1341 = vunpack.c.h.b16 %v946
    %v1342 = vunpack.c.l.b16 %v947
    %v1343 = vunpack.c.l.b16 %v948
    %v1344 = vunpack.c.h.b16 %v948
    %v1345 = vunpack.c.l.b16 %v949
    %v1346 = vunpack.c.l.b16 %v950
    %v1347 = vunpack.c.h.b16 %v950
    %v1348 = vunpack.c.l.b16 %v951
    %v1349 = vunpack.c.l.b16 %v952
    %v1350 = vunpack.c.h.b16 %v952
    %v1351 = vunpack.c.l.b16 %v953
    %v1352 = vunpack.c.l.b16 %v954
    %v1353 = vunpack.c.h.b16 %v954
    %v1354 = vunpack.c.l.b16 %v955
    %v1355 = vunpack.c.l.b16 %v956
    %v1356 = vunpack.c.h.b16 %v956
    %v1357 = vunpack.c.l.b16 %v957
    %v1358 = vunpack.c.l.b16 %v958
    %v1359 = vunpack.c.h.b16 %v958
    %v1360 = vunpack.c.l.b16 %v959
    %v1361 = vunpack.c.l.b16 %v960
    %v1362 = vunpack.c.h.b16 %v960
    %v1363 = vunpack.c.l.b16 %v961
    %v1364 = vunpack.c.l.b16 %v962
    %v1365 = vunpack.c.h.b16 %v962
    %v1366 = vunpack.c.l.b16 %v963
    %v1367 = vunpack.c.l.b16 %v964
    %v1368 = vunpack.c.h.b16 %v964
    %v1369 = vunpack.c.l.b16 %v965
    %v1370 = vunpack.c.l.b16 %v966
    %v1371 = vunpack.c.h.b16 %v966
    %v1372 = vunpack.c.l.b16 %v967
    %v1373 = vunpack.c.l.b16 %v968
    %v1374 = vunpack.c.h.b16 %v968
    %v1375 = vunpack.c.l.b16 %v969
    %v1376 = vunpack.c.l.b16 %v970
    %v1377 = vunpack.c.h.b16 %v970
    %v1378 = vunpack.c.l.b16 %v971
    %v1379 = vunpack.c.l.b16 %v972
    %v1380 = vunpack.c.h.b16 %v972
    %v1381 = vunpack.c.l.b16 %v973
    %v1382 = vunpack.c.l.b16 %v974
    %v1383 = vunpack.c.h.b16 %v974
    %v1384 = vunpack.c.l.b16 %v975
    %v1385 = vunpack.c.l.b16 %v976
    %v1386 = vunpack.c.h.b16 %v976
    %v1387 = vunpack.c.l.b16 %v977
    %v1388 = vunpack.c.l.b16 %v978
    %v1389 = vunpack.c.h.b16 %v978
    %v1390 = vunpack.c.l.b16 %v979
    %v1391 = vunpack.c.l.b16 %v980
    %v1392 = vunpack.c.h.b16 %v980
    %v1393 = vunpack.c.l.b16 %v981
    %v1394 = vunpack.c.l.b16 %v982
    %v1395 = vunpack.c.h.b16 %v982
    %v1396 = vunpack.c.l.b16 %v983
    %v1397 = vunpack.c.l.b16 %v984
    %v1398 = vunpack.c.h.b16 %v984
    %v1399 = vunpack.c.l.b16 %v985
    %v1400 = vunpack.c.l.b16 %v986
    %v1401 = vunpack.c.h.b16 %v986
    %v1402 = vunpack.c.l.b16 %v987
    %v1403 = vunpack.c.l.b16 %v988
    %v1404 = vunpack.c.h.b16 %v988
    %v1405 = vunpack.c.l.b16 %v989
    %v1406 = vunpack.c.l.b16 %v990
    %v1407 = vunpack.c.h.b16 %v990
    %v1408 = vunpack.c.l.b16 %v991
    %v1409 = vpack.c.b16 %v1172, %v1169
    %v1410 = vpack.c.b16 %v1173, %v1170
    %v1411 = vpack.c.b16 %v1174, %v1171
    %v1412 = vpack.c.b16 %v1178, %v1175
    %v1413 = vpack.c.b16 %v1179, %v1176
    %v1414 = vpack.c.b16 %v1180, %v1177
    %v1415 = vpack.c.b16 %v1184, %v1181
    %v1416 = vpack.c.b16 %v1185, %v1182
    %v1417 = vpack.c.b16 %v1186, %v1183
    %v1418 = vpack.c.b16 %v1190, %v1187
    %v1419 = vpack.c.b16 %v1191, %v1188
    %v1420 = vpack.c.b16 %v1192, %v1189
    %v1421 = vpack.c.b16 %v1196, %v1193
    %v1422 = vpack.c.b16 %v1197, %v1194
    %v1423 = vpack.c.b16 %v1198, %v1195
    %v1424 = vpack.c.b16 %v1202, %v1199
    %v1425 = vpack.c.b16 %v1203, %v1200
    %v1426 = vpack.c.b16 %v1204, %v1201
    %v1427 = vpack.c.b16 %v1208, %v1205
    %v1428 = vpack.c.b16 %v1209, %v1206
    %v1429 = vpack.c.b16 %v1210, %v1207
    %v1430 = vpack.c.b16 %v1214, %v1211
    %v1431 = vpack.c.b16 %v1215, %v1212
    %v1432 = vpack.c.b16 %v1216, %v1213
    %v1433 = vpack.c.b16 %v1220, %v1217
    %v1434 = vpack.c.b16 %v1221, %v1218
    %v1435 = vpack.c.b16 %v1222, %v1219
    %v1436 = vpack.c.b16 %v1226, %v1223
    %v1437 = vpack.c.b16 %v1227, %v1224
    %v1438 = vpack.c.b16 %v1228, %v1225
    %v1439 = vpack.c.b16 %v1232, %v1229
    %v1440 = vpack.c.b16 %v1233, %v1230
    %v1441 = vpack.c.b16 %v1234, %v1231
    %v1442 = vpack.c.b16 %v1238, %v1235
    %v1443 = vpack.c.b16 %v1239, %v1236
    %v1444 = vpack.c.b16 %v1240, %v1237
    %v1445 = vpack.c.b16 %v1244, %v1241
    %v1446 = vpack.c.b16 %v1245, %v1242
    %v1447 = vpack.c.b16 %v1246, %v1243
    %v1448 = vpack.c.b16 %v1250, %v1247
    %v1449 = vpack.c.b16 %v1251, %v1248
    %v1450 = vpack.c.b16 %v1252, %v1249
    %v1451 = vpack.c.b16 %v1256, %v1253
    %v1452 = vpack.c.b16 %v1257, %v1254
    %v1453 = vpack.c.b16 %v1258, %v1255
    %v1454 = vpack.c.b16 %v1262, %v1259
    %v1455 = vpack.c.b16 %v1263, %v1260
    %v1456 = vpack.c.b16 %v1264, %v1261
    %v1457 = vpack.c.b16 %v1268, %v1265
    %v1458 = vpack.c.b16 %v1269, %v1266
    %v1459 = vpack.c.b16 %v1270, %v1267
    %v1460 = vpack.c.b16 %v1274, %v1271
    %v1461 = vpack.c.b16 %v1275, %v1272
    %v1462 = vpack.c.b16 %v1276, %v1273
    %v1463 = vpack.c.b16 %v1280, %v1277
    %v1464 = vpack.c.b16 %v1281, %v1278
    %v1465 = vpack.c.b16 %v1282, %v1279
    %v1466 = vpack.c.b16 %v1286, %v1283
    %v1467 = vpack.c.b16 %v1287, %v1284
    %v1468 = vpack.c.b16 %v1288, %v1285
    %v1469 = vpack.c.b16 %v1292, %v1289
    %v1470 = vpack.c.b16 %v1293, %v1290
    %v1471 = vpack.c.b16 %v1294, %v1291
    %v1472 = vpack.c.b16 %v1298, %v1295
    %v1473 = vpack.c.b16 %v1299, %v1296
    %v1474 = vpack.c.b16 %v1300, %v1297
    %v1475 = vpack.c.b16 %v1304, %v1301
    %v1476 = vpack.c.b16 %v1305, %v1302
    %v1477 = vpack.c.b16 %v1306, %v1303
    %v1478 = vpack.c.b16 %v1310, %v1307
    %v1479 = vpack.c.b16 %v1311, %v1308
    %v1480 = vpack.c.b16 %v1312, %v1309
    %v1481 = vpack.c.b16 %v1316, %v1313
    %v1482 = vpack.c.b16 %v1317, %v1314
    %v1483 = vpack.c.b16 %v1318, %v1315
    %v1484 = vpack.c.b16 %v1322, %v1319
    %v1485 = vpack.c.b16 %v1323, %v1320
    %v1486 = vpack.c.b16 %v1324, %v1321
    %v1487 = vpack.c.b16 %v1328, %v1325
    %v1488 = vpack.c.b16 %v1329, %v1326
    %v1489 = vpack.c.b16 %v1330, %v1327
    %v1490 = vpack.c.b16 %v1334, %v1331
    %v1491 = vpack.c.b16 %v1335, %v1332
    %v1492 = vpack.c.b16 %v1336, %v1333
    %v1493 = vpack.c.b16 %v1340, %v1337
    %v1494 = vpack.c.b16 %v1341, %v1338
    %v1495 = vpack.c.b16 %v1342, %v1339
    %v1496 = vpack.c.b16 %v1346, %v1343
    %v1497 = vpack.c.b16 %v1347, %v1344
    %v1498 = vpack.c.b16 %v1348, %v1345
    %v1499 = vpack.c.b16 %v1352, %v1349
    %v1500 = vpack.c.b16 %v1353, %v1350
    %v1501 = vpack.c.b16 %v1354, %v1351
    %v1502 = vpack.c.b16 %v1358, %v1355
    %v1503 = vpack.c.b16 %v1359, %v1356
    %v1504 = vpack.c.b16 %v1360, %v1357
    %v1505 = vpack.c.b16 %v1364, %v1361
    %v1506 = vpack.c.b16 %v1365, %v1362
    %v1507 = vpack.c.b16 %v1366, %v1363
    %v1508 = vpack.c.b16 %v1370, %v1367
    %v1509 = vpack.c.b16 %v1371, %v1368
    %v1510 = vpack.c.b16 %v1372, %v1369
    %v1511 = vpack.c.b16 %v1376, %v1373
    %v1512 = vpack.c.b16 %v1377, %v1374
    %v1513 = vpack.c.b16 %v1378, %v1375
    %v1514 = vpack.c.b16 %v1382, %v1379
    %v1515 = vpack.c.b16 %v1383, %v1380
    %v1516 = vpack.c.b16 %v1384, %v1381
    %v1517 = vpack.c.b16 %v1388, %v1385
    %v1518 = vpack.c.b16 %v1389, %v1386
    %v1519 = vpack.c.b16 %v1390, %v1387
    %v1520 = vpack.c.b16 %v1394, %v1391
    %v1521 = vpack.c.b16 %v1395, %v1392
    %v1522 = vpack.c.b16 %v1396, %v1393
    %v1523 = vpack.c.b16 %v1400, %v1397
    %v1524 = vpack.c.b16 %v1401, %v1398
    %v1525 = vpack.c.b16 %v1402, %v1399
    %v1526 = vpack.c.b16 %v1406, %v1403
    %v1527 = vpack.c.b16 %v1407, %v1404
    %v1528 = vpack.c.b16 %v1408, %v1405
    %1649 = vmatprep.subr.bf16.mxu0 %v1410
    %1650 = vmatpush1.bf16.msra.mxu0 %v1409
    %1651 = vmatprep.subr.bf16.mxu0 %v1413
    %1652 = vmatpush1.bf16.msra.mxu0 %v1412
    %1653 = vmatprep.subr.bf16.mxu0 %v1416
    %1654 = vmatpush1.bf16.msra.mxu0 %v1415
    %1655 = vmatprep.subr.bf16.mxu0 %v1419
    %1656 = vmatpush1.bf16.msra.mxu0 %v1418
    %1657 = vmatprep.subr.bf16.mxu0 %v1422
    %1658 = vmatpush1.bf16.msra.mxu0 %v1421
    %1659 = vmatprep.subr.bf16.mxu0 %v1425
    %1660 = vmatpush1.bf16.msra.mxu0 %v1424
    %1661 = vmatprep.subr.bf16.mxu0 %v1428
    %1662 = vmatpush1.bf16.msra.mxu0 %v1427
    %1663 = vmatprep.subr.bf16.mxu0 %v1431
    %1664 = vmatpush1.bf16.msra.mxu0 %v1430
    %1665 = vmatprep.subr.bf16.mxu0 %v1434
    %1666 = vmatpush1.bf16.msra.mxu0 %v1433
    %1667 = vmatprep.subr.bf16.mxu0 %v1437
    %1668 = vmatpush1.bf16.msra.mxu0 %v1436
    %1669 = vmatprep.subr.bf16.mxu0 %v1440
    %1670 = vmatpush1.bf16.msra.mxu0 %v1439
    %1671 = vmatprep.subr.bf16.mxu0 %v1443
    %1672 = vmatpush1.bf16.msra.mxu0 %v1442
    %1673 = vmatprep.subr.bf16.mxu0 %v1446
    %1674 = vmatpush1.bf16.msra.mxu0 %v1445
    %1675 = vmatprep.subr.bf16.mxu0 %v1449
    %1676 = vmatpush1.bf16.msra.mxu0 %v1448
    %1677 = vmatprep.subr.bf16.mxu0 %v1452
    %1678 = vmatpush1.bf16.msra.mxu0 %v1451
    %1679 = vmatprep.subr.bf16.mxu0 %v1455
    %1680 = vmatpush1.bf16.msra.mxu0 %v1454
    %1681 = vmatprep.mubr.bf16.mxu0 %v573
    %1682 = vmatmul.mubr.bf16.gmra.mrb[0].mxu0 %v490
    %v1683 = vpop.f32.mrb[0].mxu0
    %v1684 = vadd.f32 %v997, %v1683
    %v1685 = vpop.f32.mrb[0].mxu0
    %v1686 = vadd.f32 %v1001, %v1685
    %v1687 = vpop.f32.mrb[0].mxu0
    %v1688 = vadd.f32 %v997, %v1687
    %v1689 = vpop.f32.mrb[0].mxu0
    %v1690 = vadd.f32 %v1001, %v1689
    %1691 = vmatprep.mubr.bf16.mxu0 %v574
    %1692 = vmatmul.mubr.bf16.gmra.mrb[0].mxu0 %v491
    %v1693 = vpop.f32.mrb[0].mxu0
    %v1694 = vadd.f32 %v997, %v1693
    %v1695 = vpop.f32.mrb[0].mxu0
    %v1696 = vadd.f32 %v1001, %v1695
    %v1697 = vpop.f32.mrb[0].mxu0
    %v1698 = vadd.f32 %v997, %v1697
    %v1699 = vpop.f32.mrb[0].mxu0
    %v1700 = vadd.f32 %v1001, %v1699
    %1701 = vmatprep.mubr.bf16.mxu0 %v575
    %1702 = vmatmul.mubr.bf16.gmra.mrb[0].mxu0 %v492
    %v1703 = vpop.f32.mrb[0].mxu0
    %v1704 = vadd.f32 %v997, %v1703
    %v1705 = vpop.f32.mrb[0].mxu0
    %v1706 = vadd.f32 %v1001, %v1705
    %v1707 = vpop.f32.mrb[0].mxu0
    %v1708 = vadd.f32 %v997, %v1707
    %v1709 = vpop.f32.mrb[0].mxu0
    %v1710 = vadd.f32 %v1001, %v1709
    %1711 = vmatprep.mubr.bf16.mxu0 %v576
    %1712 = vmatmul.mubr.bf16.gmra.mrb[0].mxu0 %v493
    %v1713 = vpop.f32.mrb[0].mxu0
    %v1714 = vadd.f32 %v997, %v1713
    %v1715 = vpop.f32.mrb[0].mxu0
    %v1716 = vadd.f32 %v1001, %v1715
    %v1717 = vpop.f32.mrb[0].mxu0
    %v1718 = vadd.f32 %v997, %v1717
    %v1719 = vpop.f32.mrb[0].mxu0
    %v1720 = vadd.f32 %v1001, %v1719
    %1721 = vmatprep.mubr.bf16.mxu0 %v577
    %1722 = vmatmul.mubr.bf16.gmra.mrb[0].mxu0 %v494
    %v1723 = vpop.f32.mrb[0].mxu0
    %v1724 = vadd.f32 %v997, %v1723
    %v1725 = vpop.f32.mrb[0].mxu0
    %v1726 = vadd.f32 %v1001, %v1725
    %v1727 = vpop.f32.mrb[0].mxu0
    %v1728 = vadd.f32 %v997, %v1727
    %v1729 = vpop.f32.mrb[0].mxu0
    %v1730 = vadd.f32 %v1001, %v1729
    %1731 = vmatprep.mubr.bf16.mxu0 %v578
    %1732 = vmatmul.mubr.bf16.gmra.mrb[0].mxu0 %v495
    %v1733 = vpop.f32.mrb[0].mxu0
    %v1734 = vadd.f32 %v997, %v1733
    %v1735 = vpop.f32.mrb[0].mxu0
    %v1736 = vadd.f32 %v1001, %v1735
    %v1737 = vpop.f32.mrb[0].mxu0
    %v1738 = vadd.f32 %v997, %v1737
    %v1739 = vpop.f32.mrb[0].mxu0
    %v1740 = vadd.f32 %v1001, %v1739
    %1741 = vmatprep.mubr.bf16.mxu0 %v579
    %1742 = vmatmul.mubr.bf16.gmra.mrb[0].mxu0 %v496
    %v1743 = vpop.f32.mrb[0].mxu0
    %v1744 = vadd.f32 %v997, %v1743
    %v1745 = vpop.f32.mrb[0].mxu0
    %v1746 = vadd.f32 %v1001, %v1745
    %v1747 = vpop.f32.mrb[0].mxu0
    %v1748 = vadd.f32 %v997, %v1747
    %v1749 = vpop.f32.mrb[0].mxu0
    %v1750 = vadd.f32 %v1001, %v1749
    %1751 = vmatprep.mubr.bf16.mxu0 %v580
    %1752 = vmatmul.mubr.bf16.gmra.mrb[0].mxu0 %v497
    %v1753 = vpop.f32.mrb[0].mxu0
    %v1754 = vadd.f32 %v997, %v1753
    %v1755 = vpop.f32.mrb[0].mxu0
    %v1756 = vadd.f32 %v1001, %v1755
    %v1757 = vpop.f32.mrb[0].mxu0
    %v1758 = vadd.f32 %v997, %v1757
    %v1759 = vpop.f32.mrb[0].mxu0
    %v1760 = vadd.f32 %v1001, %v1759
    %1761 = vmatprep.mubr.bf16.mxu0 %v581
    %1762 = vmatmul.mubr.bf16.gmra.mrb[0].mxu0 %v498
    %v1763 = vpop.f32.mrb[0].mxu0
    %v1764 = vadd.f32 %v997, %v1763
    %v1765 = vpop.f32.mrb[0].mxu0
    %v1766 = vadd.f32 %v1001, %v1765
    %v1767 = vpop.f32.mrb[0].mxu0
    %v1768 = vadd.f32 %v997, %v1767
    %v1769 = vpop.f32.mrb[0].mxu0
    %v1770 = vadd.f32 %v1001, %v1769
    %1771 = vmatprep.mubr.bf16.mxu0 %v582
    %1772 = vmatmul.mubr.bf16.gmra.mrb[0].mxu0 %v499
    %v1773 = vpop.f32.mrb[0].mxu0
    %v1774 = vadd.f32 %v997, %v1773
    %v1775 = vpop.f32.mrb[0].mxu0
    %v1776 = vadd.f32 %v1001, %v1775
    %v1777 = vpop.f32.mrb[0].mxu0
    %v1778 = vadd.f32 %v997, %v1777
    %v1779 = vpop.f32.mrb[0].mxu0
    %v1780 = vadd.f32 %v1001, %v1779
    %1781 = vmatprep.mubr.bf16.mxu0 %v583
    %1782 = vmatmul.mubr.bf16.gmra.mrb[0].mxu0 %v500
    %v1783 = vpop.f32.mrb[0].mxu0
    %v1784 = vadd.f32 %v997, %v1783
    %v1785 = vpop.f32.mrb[0].mxu0
    %v1786 = vadd.f32 %v1001, %v1785
    %v1787 = vpop.f32.mrb[0].mxu0
    %v1788 = vadd.f32 %v997, %v1787
    %v1789 = vpop.f32.mrb[0].mxu0
    %v1790 = vadd.f32 %v1001, %v1789
    %1791 = vmatprep.mubr.bf16.mxu0 %v584
    %1792 = vmatmul.mubr.bf16.gmra.mrb[0].mxu0 %v501
    %v1793 = vpop.f32.mrb[0].mxu0
    %v1794 = vadd.f32 %v997, %v1793
    %v1795 = vpop.f32.mrb[0].mxu0
    %v1796 = vadd.f32 %v1001, %v1795
    %v1797 = vpop.f32.mrb[0].mxu0
    %v1798 = vadd.f32 %v997, %v1797
    %v1799 = vpop.f32.mrb[0].mxu0
    %v1800 = vadd.f32 %v1001, %v1799
    %1801 = vmatprep.mubr.bf16.mxu0 %v585
    %1802 = vmatmul.mubr.bf16.gmra.mrb[0].mxu0 %v502
    %v1803 = vpop.f32.mrb[0].mxu0
    %v1804 = vadd.f32 %v997, %v1803
    %v1805 = vpop.f32.mrb[0].mxu0
    %v1806 = vadd.f32 %v1001, %v1805
    %v1807 = vpop.f32.mrb[0].mxu0
    %v1808 = vadd.f32 %v997, %v1807
    %v1809 = vpop.f32.mrb[0].mxu0
    %v1810 = vadd.f32 %v1001, %v1809
    %1811 = vmatprep.mubr.bf16.mxu0 %v586
    %1812 = vmatmul.mubr.bf16.gmra.mrb[0].mxu0 %v503
    %v1813 = vpop.f32.mrb[0].mxu0
    %v1814 = vadd.f32 %v997, %v1813
    %v1815 = vpop.f32.mrb[0].mxu0
    %v1816 = vadd.f32 %v1001, %v1815
    %v1817 = vpop.f32.mrb[0].mxu0
    %v1818 = vadd.f32 %v997, %v1817
    %v1819 = vpop.f32.mrb[0].mxu0
    %v1820 = vadd.f32 %v1001, %v1819
    %1821 = vmatprep.mubr.bf16.mxu0 %v587
    %1822 = vmatmul.mubr.bf16.gmra.mrb[0].mxu0 %v504
    %v1823 = vpop.f32.mrb[0].mxu0
    %v1824 = vadd.f32 %v997, %v1823
    %v1825 = vpop.f32.mrb[0].mxu0
    %v1826 = vadd.f32 %v1001, %v1825
    %v1827 = vpop.f32.mrb[0].mxu0
    %v1828 = vadd.f32 %v997, %v1827
    %v1829 = vpop.f32.mrb[0].mxu0
    %v1830 = vadd.f32 %v1001, %v1829
    %1831 = vmatprep.mubr.bf16.mxu0 %v588
    %1832 = vmatmul.mubr.bf16.gmra.mrb[0].mxu0 %v505
    %v1833 = vpop.f32.mrb[0].mxu0
    %v1834 = vadd.f32 %v997, %v1833
    %v1835 = vpop.f32.mrb[0].mxu0
    %v1836 = vadd.f32 %v1001, %v1835
    %v1837 = vpop.f32.mrb[0].mxu0
    %v1838 = vadd.f32 %v997, %v1837
    %v1839 = vpop.f32.mrb[0].mxu0
    %v1840 = vadd.f32 %v1001, %v1839
    %1841 = vdwg.mxu0
    %1842 = vmatprep.subr.bf16.mxu0 %v1458
    %1843 = vmatpush1.bf16.msra.mxu0 %v1457
    %1844 = vmatprep.subr.bf16.mxu0 %v1461
    %1845 = vmatpush1.bf16.msra.mxu0 %v1460
    %1846 = vmatprep.subr.bf16.mxu0 %v1464
    %1847 = vmatpush1.bf16.msra.mxu0 %v1463
    %1848 = vmatprep.subr.bf16.mxu0 %v1467
    %1849 = vmatpush1.bf16.msra.mxu0 %v1466
    %1850 = vmatprep.subr.bf16.mxu0 %v1470
    %1851 = vmatpush1.bf16.msra.mxu0 %v1469
    %1852 = vmatprep.subr.bf16.mxu0 %v1473
    %1853 = vmatpush1.bf16.msra.mxu0 %v1472
    %1854 = vmatprep.subr.bf16.mxu0 %v1476
    %1855 = vmatpush1.bf16.msra.mxu0 %v1475
    %1856 = vmatprep.subr.bf16.mxu0 %v1479
    %1857 = vmatpush1.bf16.msra.mxu0 %v1478
    %1858 = vmatprep.subr.bf16.mxu0 %v1482
    %1859 = vmatpush1.bf16.msra.mxu0 %v1481
    %1860 = vmatprep.subr.bf16.mxu0 %v1485
    %1861 = vmatpush1.bf16.msra.mxu0 %v1484
    %1862 = vmatprep.subr.bf16.mxu0 %v1488
    %1863 = vmatpush1.bf16.msra.mxu0 %v1487
    %1864 = vmatprep.subr.bf16.mxu0 %v1491
    %1865 = vmatpush1.bf16.msra.mxu0 %v1490
    %1866 = vmatprep.subr.bf16.mxu0 %v1494
    %1867 = vmatpush1.bf16.msra.mxu0 %v1493
    %1868 = vmatprep.subr.bf16.mxu0 %v1497
    %1869 = vmatpush1.bf16.msra.mxu0 %v1496
    %1870 = vmatprep.subr.bf16.mxu0 %v1500
    %1871 = vmatpush1.bf16.msra.mxu0 %v1499
    %1872 = vmatprep.subr.bf16.mxu0 %v1503
    %1873 = vmatpush1.bf16.msra.mxu0 %v1502
    %1874 = vmatprep.mubr.bf16.mxu0 %v735
    %1875 = vmatmul.mubr.bf16.gmra.mrb[0].mxu0 %v654
    %v1876 = vpop.f32.mrb[0].mxu0
    %v1877 = vadd.f32 %v1684, %v1876
    %v1878 = vpop.f32.mrb[0].mxu0
    %v1879 = vadd.f32 %v1686, %v1878
    %v1880 = vpop.f32.mrb[0].mxu0
    %v1881 = vadd.f32 %v1688, %v1880
    %v1882 = vpop.f32.mrb[0].mxu0
    %v1883 = vadd.f32 %v1690, %v1882
    %1884 = vmatprep.mubr.bf16.mxu0 %v736
    %1885 = vmatmul.mubr.bf16.gmra.mrb[0].mxu0 %v655
    %v1886 = vpop.f32.mrb[0].mxu0
    %v1887 = vadd.f32 %v1694, %v1886
    %v1888 = vpop.f32.mrb[0].mxu0
    %v1889 = vadd.f32 %v1696, %v1888
    %v1890 = vpop.f32.mrb[0].mxu0
    %v1891 = vadd.f32 %v1698, %v1890
    %v1892 = vpop.f32.mrb[0].mxu0
    %v1893 = vadd.f32 %v1700, %v1892
    %1894 = vmatprep.mubr.bf16.mxu0 %v737
    %1895 = vmatmul.mubr.bf16.gmra.mrb[0].mxu0 %v656
    %v1896 = vpop.f32.mrb[0].mxu0
    %v1897 = vadd.f32 %v1704, %v1896
    %v1898 = vpop.f32.mrb[0].mxu0
    %v1899 = vadd.f32 %v1706, %v1898
    %v1900 = vpop.f32.mrb[0].mxu0
    %v1901 = vadd.f32 %v1708, %v1900
    %v1902 = vpop.f32.mrb[0].mxu0
    %v1903 = vadd.f32 %v1710, %v1902
    %1904 = vmatprep.mubr.bf16.mxu0 %v738
    %1905 = vmatmul.mubr.bf16.gmra.mrb[0].mxu0 %v657
    %v1906 = vpop.f32.mrb[0].mxu0
    %v1907 = vadd.f32 %v1714, %v1906
    %v1908 = vpop.f32.mrb[0].mxu0
    %v1909 = vadd.f32 %v1716, %v1908
    %v1910 = vpop.f32.mrb[0].mxu0
    %v1911 = vadd.f32 %v1718, %v1910
    %v1912 = vpop.f32.mrb[0].mxu0
    %v1913 = vadd.f32 %v1720, %v1912
    %1914 = vmatprep.mubr.bf16.mxu0 %v739
    %1915 = vmatmul.mubr.bf16.gmra.mrb[0].mxu0 %v658
    %v1916 = vpop.f32.mrb[0].mxu0
    %v1917 = vadd.f32 %v1724, %v1916
    %v1918 = vpop.f32.mrb[0].mxu0
    %v1919 = vadd.f32 %v1726, %v1918
    %v1920 = vpop.f32.mrb[0].mxu0
    %v1921 = vadd.f32 %v1728, %v1920
    %v1922 = vpop.f32.mrb[0].mxu0
    %v1923 = vadd.f32 %v1730, %v1922
    %1924 = vmatprep.mubr.bf16.mxu0 %v740
    %1925 = vmatmul.mubr.bf16.gmra.mrb[0].mxu0 %v659
    %v1926 = vpop.f32.mrb[0].mxu0
    %v1927 = vadd.f32 %v1734, %v1926
    %v1928 = vpop.f32.mrb[0].mxu0
    %v1929 = vadd.f32 %v1736, %v1928
    %v1930 = vpop.f32.mrb[0].mxu0
    %v1931 = vadd.f32 %v1738, %v1930
    %v1932 = vpop.f32.mrb[0].mxu0
    %v1933 = vadd.f32 %v1740, %v1932
    %1934 = vmatprep.mubr.bf16.mxu0 %v741
    %1935 = vmatmul.mubr.bf16.gmra.mrb[0].mxu0 %v660
    %v1936 = vpop.f32.mrb[0].mxu0
    %v1937 = vadd.f32 %v1744, %v1936
    %v1938 = vpop.f32.mrb[0].mxu0
    %v1939 = vadd.f32 %v1746, %v1938
    %v1940 = vpop.f32.mrb[0].mxu0
    %v1941 = vadd.f32 %v1748, %v1940
    %v1942 = vpop.f32.mrb[0].mxu0
    %v1943 = vadd.f32 %v1750, %v1942
    %1944 = vmatprep.mubr.bf16.mxu0 %v742
    %1945 = vmatmul.mubr.bf16.gmra.mrb[0].mxu0 %v661
    %v1946 = vpop.f32.mrb[0].mxu0
    %v1947 = vadd.f32 %v1754, %v1946
    %v1948 = vpop.f32.mrb[0].mxu0
    %v1949 = vadd.f32 %v1756, %v1948
    %v1950 = vpop.f32.mrb[0].mxu0
    %v1951 = vadd.f32 %v1758, %v1950
    %v1952 = vpop.f32.mrb[0].mxu0
    %v1953 = vadd.f32 %v1760, %v1952
    %1954 = vmatprep.mubr.bf16.mxu0 %v743
    %1955 = vmatmul.mubr.bf16.gmra.mrb[0].mxu0 %v662
    %v1956 = vpop.f32.mrb[0].mxu0
    %v1957 = vadd.f32 %v1764, %v1956
    %v1958 = vpop.f32.mrb[0].mxu0
    %v1959 = vadd.f32 %v1766, %v1958
    %v1960 = vpop.f32.mrb[0].mxu0
    %v1961 = vadd.f32 %v1768, %v1960
    %v1962 = vpop.f32.mrb[0].mxu0
    %v1963 = vadd.f32 %v1770, %v1962
    %1964 = vmatprep.mubr.bf16.mxu0 %v744
    %1965 = vmatmul.mubr.bf16.gmra.mrb[0].mxu0 %v663
    %v1966 = vpop.f32.mrb[0].mxu0
    %v1967 = vadd.f32 %v1774, %v1966
    %v1968 = vpop.f32.mrb[0].mxu0
    %v1969 = vadd.f32 %v1776, %v1968
    %v1970 = vpop.f32.mrb[0].mxu0
    %v1971 = vadd.f32 %v1778, %v1970
    %v1972 = vpop.f32.mrb[0].mxu0
    %v1973 = vadd.f32 %v1780, %v1972
    %1974 = vmatprep.mubr.bf16.mxu0 %v745
    %1975 = vmatmul.mubr.bf16.gmra.mrb[0].mxu0 %v664
    %v1976 = vpop.f32.mrb[0].mxu0
    %v1977 = vadd.f32 %v1784, %v1976
    %v1978 = vpop.f32.mrb[0].mxu0
    %v1979 = vadd.f32 %v1786, %v1978
    %v1980 = vpop.f32.mrb[0].mxu0
    %v1981 = vadd.f32 %v1788, %v1980
    %v1982 = vpop.f32.mrb[0].mxu0
    %v1983 = vadd.f32 %v1790, %v1982
    %1984 = vmatprep.mubr.bf16.mxu0 %v746
    %1985 = vmatmul.mubr.bf16.gmra.mrb[0].mxu0 %v665
    %v1986 = vpop.f32.mrb[0].mxu0
    %v1987 = vadd.f32 %v1794, %v1986
    %v1988 = vpop.f32.mrb[0].mxu0
    %v1989 = vadd.f32 %v1796, %v1988
    %v1990 = vpop.f32.mrb[0].mxu0
    %v1991 = vadd.f32 %v1798, %v1990
    %v1992 = vpop.f32.mrb[0].mxu0
    %v1993 = vadd.f32 %v1800, %v1992
    %1994 = vmatprep.mubr.bf16.mxu0 %v747
    %1995 = vmatmul.mubr.bf16.gmra.mrb[0].mxu0 %v666
    %v1996 = vpop.f32.mrb[0].mxu0
    %v1997 = vadd.f32 %v1804, %v1996
    %v1998 = vpop.f32.mrb[0].mxu0
    %v1999 = vadd.f32 %v1806, %v1998
    %v2000 = vpop.f32.mrb[0].mxu0
    %v2001 = vadd.f32 %v1808, %v2000
    %v2002 = vpop.f32.mrb[0].mxu0
    %v2003 = vadd.f32 %v1810, %v2002
    %2004 = vmatprep.mubr.bf16.mxu0 %v748
    %2005 = vmatmul.mubr.bf16.gmra.mrb[0].mxu0 %v667
    %v2006 = vpop.f32.mrb[0].mxu0
    %v2007 = vadd.f32 %v1814, %v2006
    %v2008 = vpop.f32.mrb[0].mxu0
    %v2009 = vadd.f32 %v1816, %v2008
    %v2010 = vpop.f32.mrb[0].mxu0
    %v2011 = vadd.f32 %v1818, %v2010
    %v2012 = vpop.f32.mrb[0].mxu0
    %v2013 = vadd.f32 %v1820, %v2012
    %2014 = vmatprep.mubr.bf16.mxu0 %v749
    %2015 = vmatmul.mubr.bf16.gmra.mrb[0].mxu0 %v668
    %v2016 = vpop.f32.mrb[0].mxu0
    %v2017 = vadd.f32 %v1824, %v2016
    %v2018 = vpop.f32.mrb[0].mxu0
    %v2019 = vadd.f32 %v1826, %v2018
    %v2020 = vpop.f32.mrb[0].mxu0
    %v2021 = vadd.f32 %v1828, %v2020
    %v2022 = vpop.f32.mrb[0].mxu0
    %v2023 = vadd.f32 %v1830, %v2022
    %2024 = vmatprep.mubr.bf16.mxu0 %v750
    %2025 = vmatmul.mubr.bf16.gmra.mrb[0].mxu0 %v669
    %v2026 = vpop.f32.mrb[0].mxu0
    %v2027 = vadd.f32 %v1834, %v2026
    %v2028 = vpop.f32.mrb[0].mxu0
    %v2029 = vadd.f32 %v1836, %v2028
    %v2030 = vpop.f32.mrb[0].mxu0
    %v2031 = vadd.f32 %v1838, %v2030
    %v2032 = vpop.f32.mrb[0].mxu0
    %v2033 = vadd.f32 %v1840, %v2032
    %2034 = vdwg.mxu0
    %2035 = vmatprep.subr.bf16.mxu0 %v1506
    %2036 = vmatpush1.bf16.msra.mxu0 %v1505
    %2037 = vmatprep.subr.bf16.mxu0 %v1509
    %2038 = vmatpush1.bf16.msra.mxu0 %v1508
    %2039 = vmatprep.subr.bf16.mxu0 %v1512
    %2040 = vmatpush1.bf16.msra.mxu0 %v1511
    %2041 = vmatprep.subr.bf16.mxu0 %v1515
    %2042 = vmatpush1.bf16.msra.mxu0 %v1514
    %2043 = vmatprep.subr.bf16.mxu0 %v1518
    %2044 = vmatpush1.bf16.msra.mxu0 %v1517
    %2045 = vmatprep.subr.bf16.mxu0 %v1521
    %2046 = vmatpush1.bf16.msra.mxu0 %v1520
    %2047 = vmatprep.subr.bf16.mxu0 %v1524
    %2048 = vmatpush1.bf16.msra.mxu0 %v1523
    %2049 = vmatprep.subr.bf16.mxu0 %v1527
    %2050 = vmatpush1.bf16.msra.mxu0 %v1526
    %2051 = vmatprep.subr.bf16.mxu0 0
    %2052 = vmatpush1.bf16.msra.mxu0 0
    %2053 = vmatprep.subr.bf16.mxu0 0
    %2054 = vmatpush1.bf16.msra.mxu0 0
    %2055 = vmatprep.subr.bf16.mxu0 0
    %2056 = vmatpush1.bf16.msra.mxu0 0
    %2057 = vmatprep.subr.bf16.mxu0 0
    %2058 = vmatpush1.bf16.msra.mxu0 0
    %2059 = vmatprep.subr.bf16.mxu0 0
    %2060 = vmatpush1.bf16.msra.mxu0 0
    %2061 = vmatprep.subr.bf16.mxu0 0
    %2062 = vmatpush1.bf16.msra.mxu0 0
    %2063 = vmatprep.subr.bf16.mxu0 0
    %2064 = vmatpush1.bf16.msra.mxu0 0
    %2065 = vmatprep.subr.bf16.mxu0 0
    %2066 = vmatpush1.bf16.msra.mxu0 0
    %2067 = vmatprep.mubr.bf16.mxu0 0
    %2068 = vmatmul.mubr.bf16.gmra.mrb[0].mxu0 %v816
    %v2069 = vpop.f32.mrb[0].mxu0
    %v2070 = vadd.f32 %v1877, %v2069
    %v2071 = vpop.f32.mrb[0].mxu0
    %v2072 = vadd.f32 %v1879, %v2071
    %v2073 = vpop.f32.mrb[0].mxu0
    %v2074 = vadd.f32 %v1881, %v2073
    %v2075 = vpop.f32.mrb[0].mxu0
    %v2076 = vadd.f32 %v1883, %v2075
    %2077 = vmatprep.mubr.bf16.mxu0 0
    %2078 = vmatmul.mubr.bf16.gmra.mrb[0].mxu0 %v817
    %v2079 = vpop.f32.mrb[0].mxu0
    %v2080 = vadd.f32 %v1887, %v2079
    %v2081 = vpop.f32.mrb[0].mxu0
    %v2082 = vadd.f32 %v1889, %v2081
    %v2083 = vpop.f32.mrb[0].mxu0
    %v2084 = vadd.f32 %v1891, %v2083
    %v2085 = vpop.f32.mrb[0].mxu0
    %v2086 = vadd.f32 %v1893, %v2085
    %2087 = vmatprep.mubr.bf16.mxu0 0
    %2088 = vmatmul.mubr.bf16.gmra.mrb[0].mxu0 %v818
    %v2089 = vpop.f32.mrb[0].mxu0
    %v2090 = vadd.f32 %v1897, %v2089
    %v2091 = vpop.f32.mrb[0].mxu0
    %v2092 = vadd.f32 %v1899, %v2091
    %v2093 = vpop.f32.mrb[0].mxu0
    %v2094 = vadd.f32 %v1901, %v2093
    %v2095 = vpop.f32.mrb[0].mxu0
    %v2096 = vadd.f32 %v1903, %v2095
    %2097 = vmatprep.mubr.bf16.mxu0 0
    %2098 = vmatmul.mubr.bf16.gmra.mrb[0].mxu0 %v819
    %v2099 = vpop.f32.mrb[0].mxu0
    %v2100 = vadd.f32 %v1907, %v2099
    %v2101 = vpop.f32.mrb[0].mxu0
    %v2102 = vadd.f32 %v1909, %v2101
    %v2103 = vpop.f32.mrb[0].mxu0
    %v2104 = vadd.f32 %v1911, %v2103
    %v2105 = vpop.f32.mrb[0].mxu0
    %v2106 = vadd.f32 %v1913, %v2105
    %2107 = vmatprep.mubr.bf16.mxu0 0
    %2108 = vmatmul.mubr.bf16.gmra.mrb[0].mxu0 %v820
    %v2109 = vpop.f32.mrb[0].mxu0
    %v2110 = vadd.f32 %v1917, %v2109
    %v2111 = vpop.f32.mrb[0].mxu0
    %v2112 = vadd.f32 %v1919, %v2111
    %v2113 = vpop.f32.mrb[0].mxu0
    %v2114 = vadd.f32 %v1921, %v2113
    %v2115 = vpop.f32.mrb[0].mxu0
    %v2116 = vadd.f32 %v1923, %v2115
    %2117 = vmatprep.mubr.bf16.mxu0 0
    %2118 = vmatmul.mubr.bf16.gmra.mrb[0].mxu0 %v821
    %v2119 = vpop.f32.mrb[0].mxu0
    %v2120 = vadd.f32 %v1927, %v2119
    %v2121 = vpop.f32.mrb[0].mxu0
    %v2122 = vadd.f32 %v1929, %v2121
    %v2123 = vpop.f32.mrb[0].mxu0
    %v2124 = vadd.f32 %v1931, %v2123
    %v2125 = vpop.f32.mrb[0].mxu0
    %v2126 = vadd.f32 %v1933, %v2125
    %2127 = vmatprep.mubr.bf16.mxu0 0
    %2128 = vmatmul.mubr.bf16.gmra.mrb[0].mxu0 %v822
    %v2129 = vpop.f32.mrb[0].mxu0
    %v2130 = vadd.f32 %v1937, %v2129
    %v2131 = vpop.f32.mrb[0].mxu0
    %v2132 = vadd.f32 %v1939, %v2131
    %v2133 = vpop.f32.mrb[0].mxu0
    %v2134 = vadd.f32 %v1941, %v2133
    %v2135 = vpop.f32.mrb[0].mxu0
    %v2136 = vadd.f32 %v1943, %v2135
    %2137 = vmatprep.mubr.bf16.mxu0 0
    %2138 = vmatmul.mubr.bf16.gmra.mrb[0].mxu0 %v823
    %v2139 = vpop.f32.mrb[0].mxu0
    %v2140 = vadd.f32 %v1947, %v2139
    %v2141 = vpop.f32.mrb[0].mxu0
    %v2142 = vadd.f32 %v1949, %v2141
    %v2143 = vpop.f32.mrb[0].mxu0
    %v2144 = vadd.f32 %v1951, %v2143
    %v2145 = vpop.f32.mrb[0].mxu0
    %v2146 = vadd.f32 %v1953, %v2145
    %2147 = vmatprep.mubr.bf16.mxu0 0
    %2148 = vmatmul.mubr.bf16.gmra.mrb[0].mxu0 %v824
    %v2149 = vpop.f32.mrb[0].mxu0
    %v2150 = vadd.f32 %v1957, %v2149
    %v2151 = vpop.f32.mrb[0].mxu0
    %v2152 = vadd.f32 %v1959, %v2151
    %v2153 = vpop.f32.mrb[0].mxu0
    %v2154 = vadd.f32 %v1961, %v2153
    %v2155 = vpop.f32.mrb[0].mxu0
    %v2156 = vadd.f32 %v1963, %v2155
    %2157 = vmatprep.mubr.bf16.mxu0 0
    %2158 = vmatmul.mubr.bf16.gmra.mrb[0].mxu0 %v825
    %v2159 = vpop.f32.mrb[0].mxu0
    %v2160 = vadd.f32 %v1967, %v2159
    %v2161 = vpop.f32.mrb[0].mxu0
    %v2162 = vadd.f32 %v1969, %v2161
    %v2163 = vpop.f32.mrb[0].mxu0
    %v2164 = vadd.f32 %v1971, %v2163
    %v2165 = vpop.f32.mrb[0].mxu0
    %v2166 = vadd.f32 %v1973, %v2165
    %2167 = vmatprep.mubr.bf16.mxu0 0
    %2168 = vmatmul.mubr.bf16.gmra.mrb[0].mxu0 %v826
    %v2169 = vpop.f32.mrb[0].mxu0
    %v2170 = vadd.f32 %v1977, %v2169
    %v2171 = vpop.f32.mrb[0].mxu0
    %v2172 = vadd.f32 %v1979, %v2171
    %v2173 = vpop.f32.mrb[0].mxu0
    %v2174 = vadd.f32 %v1981, %v2173
    %v2175 = vpop.f32.mrb[0].mxu0
    %v2176 = vadd.f32 %v1983, %v2175
    %2177 = vmatprep.mubr.bf16.mxu0 0
    %2178 = vmatmul.mubr.bf16.gmra.mrb[0].mxu0 %v827
    %v2179 = vpop.f32.mrb[0].mxu0
    %v2180 = vadd.f32 %v1987, %v2179
    %v2181 = vpop.f32.mrb[0].mxu0
    %v2182 = vadd.f32 %v1989, %v2181
    %v2183 = vpop.f32.mrb[0].mxu0
    %v2184 = vadd.f32 %v1991, %v2183
    %v2185 = vpop.f32.mrb[0].mxu0
    %v2186 = vadd.f32 %v1993, %v2185
    %2187 = vmatprep.mubr.bf16.mxu0 0
    %2188 = vmatmul.mubr.bf16.gmra.mrb[0].mxu0 %v828
    %v2189 = vpop.f32.mrb[0].mxu0
    %v2190 = vadd.f32 %v1997, %v2189
    %v2191 = vpop.f32.mrb[0].mxu0
    %v2192 = vadd.f32 %v1999, %v2191
    %v2193 = vpop.f32.mrb[0].mxu0
    %v2194 = vadd.f32 %v2001, %v2193
    %v2195 = vpop.f32.mrb[0].mxu0
    %v2196 = vadd.f32 %v2003, %v2195
    %2197 = vmatprep.mubr.bf16.mxu0 0
    %2198 = vmatmul.mubr.bf16.gmra.mrb[0].mxu0 %v829
    %v2199 = vpop.f32.mrb[0].mxu0
    %v2200 = vadd.f32 %v2007, %v2199
    %v2201 = vpop.f32.mrb[0].mxu0
    %v2202 = vadd.f32 %v2009, %v2201
    %v2203 = vpop.f32.mrb[0].mxu0
    %v2204 = vadd.f32 %v2011, %v2203
    %v2205 = vpop.f32.mrb[0].mxu0
    %v2206 = vadd.f32 %v2013, %v2205
    %2207 = vmatprep.mubr.bf16.mxu0 0
    %2208 = vmatmul.mubr.bf16.gmra.mrb[0].mxu0 %v830
    %v2209 = vpop.f32.mrb[0].mxu0
    %v2210 = vadd.f32 %v2017, %v2209
    %v2211 = vpop.f32.mrb[0].mxu0
    %v2212 = vadd.f32 %v2019, %v2211
    %v2213 = vpop.f32.mrb[0].mxu0
    %v2214 = vadd.f32 %v2021, %v2213
    %v2215 = vpop.f32.mrb[0].mxu0
    %v2216 = vadd.f32 %v2023, %v2215
    %2217 = vmatprep.mubr.bf16.mxu0 0
    %2218 = vmatmul.mubr.bf16.gmra.mrb[0].mxu0 %v831
    %v2219 = vpop.f32.mrb[0].mxu0
    %v2220 = vadd.f32 %v2027, %v2219
    %v2221 = vpop.f32.mrb[0].mxu0
    %v2222 = vadd.f32 %v2029, %v2221
    %v2223 = vpop.f32.mrb[0].mxu0
    %v2224 = vadd.f32 %v2031, %v2223
    %v2225 = vpop.f32.mrb[0].mxu0
    %v2226 = vadd.f32 %v2033, %v2225
    %2227 = vdwg.mxu0
    %2228 = vmatprep.subr.bf16.mxu0 0
    %2229 = vmatpush1.bf16.msra.mxu0 %v1411
    %2230 = vmatprep.subr.bf16.mxu0 0
    %2231 = vmatpush1.bf16.msra.mxu0 %v1414
    %2232 = vmatprep.subr.bf16.mxu0 0
    %2233 = vmatpush1.bf16.msra.mxu0 %v1417
    %2234 = vmatprep.subr.bf16.mxu0 0
    %2235 = vmatpush1.bf16.msra.mxu0 %v1420
    %2236 = vmatprep.subr.bf16.mxu0 0
    %2237 = vmatpush1.bf16.msra.mxu0 %v1423
    %2238 = vmatprep.subr.bf16.mxu0 0
    %2239 = vmatpush1.bf16.msra.mxu0 %v1426
    %2240 = vmatprep.subr.bf16.mxu0 0
    %2241 = vmatpush1.bf16.msra.mxu0 %v1429
    %2242 = vmatprep.subr.bf16.mxu0 0
    %2243 = vmatpush1.bf16.msra.mxu0 %v1432
    %2244 = vmatprep.subr.bf16.mxu0 0
    %2245 = vmatpush1.bf16.msra.mxu0 %v1435
    %2246 = vmatprep.subr.bf16.mxu0 0
    %2247 = vmatpush1.bf16.msra.mxu0 %v1438
    %2248 = vmatprep.subr.bf16.mxu0 0
    %2249 = vmatpush1.bf16.msra.mxu0 %v1441
    %2250 = vmatprep.subr.bf16.mxu0 0
    %2251 = vmatpush1.bf16.msra.mxu0 %v1444
    %2252 = vmatprep.subr.bf16.mxu0 0
    %2253 = vmatpush1.bf16.msra.mxu0 %v1447
    %2254 = vmatprep.subr.bf16.mxu0 0
    %2255 = vmatpush1.bf16.msra.mxu0 %v1450
    %2256 = vmatprep.subr.bf16.mxu0 0
    %2257 = vmatpush1.bf16.msra.mxu0 %v1453
    %2258 = vmatprep.subr.bf16.mxu0 0
    %2259 = vmatpush1.bf16.msra.mxu0 %v1456
    %2260 = vmatprep.mubr.bf16.mxu0 %v573
    %2261 = vmatmul.mubr.bf16.gmra.mrb[0].mxu0 %v490
    %v2262 = vpop.f32.mrb[0].mxu0
    %v2263 = vadd.f32 %v1005, %v2262
    %v2264 = vpop.f32.mrb[0].mxu0
    %v2265 = vpop.f32.mrb[0].mxu0
    %v2266 = vadd.f32 %v1005, %v2265
    %v2267 = vpop.f32.mrb[0].mxu0
    %2268 = vmatprep.mubr.bf16.mxu0 %v574
    %2269 = vmatmul.mubr.bf16.gmra.mrb[0].mxu0 %v491
    %v2270 = vpop.f32.mrb[0].mxu0
    %v2271 = vadd.f32 %v1005, %v2270
    %v2272 = vpop.f32.mrb[0].mxu0
    %v2273 = vpop.f32.mrb[0].mxu0
    %v2274 = vadd.f32 %v1005, %v2273
    %v2275 = vpop.f32.mrb[0].mxu0
    %2276 = vmatprep.mubr.bf16.mxu0 %v575
    %2277 = vmatmul.mubr.bf16.gmra.mrb[0].mxu0 %v492
    %v2278 = vpop.f32.mrb[0].mxu0
    %v2279 = vadd.f32 %v1005, %v2278
    %v2280 = vpop.f32.mrb[0].mxu0
    %v2281 = vpop.f32.mrb[0].mxu0
    %v2282 = vadd.f32 %v1005, %v2281
    %v2283 = vpop.f32.mrb[0].mxu0
    %2284 = vmatprep.mubr.bf16.mxu0 %v576
    %2285 = vmatmul.mubr.bf16.gmra.mrb[0].mxu0 %v493
    %v2286 = vpop.f32.mrb[0].mxu0
    %v2287 = vadd.f32 %v1005, %v2286
    %v2288 = vpop.f32.mrb[0].mxu0
    %v2289 = vpop.f32.mrb[0].mxu0
    %v2290 = vadd.f32 %v1005, %v2289
    %v2291 = vpop.f32.mrb[0].mxu0
    %2292 = vmatprep.mubr.bf16.mxu0 %v577
    %2293 = vmatmul.mubr.bf16.gmra.mrb[0].mxu0 %v494
    %v2294 = vpop.f32.mrb[0].mxu0
    %v2295 = vadd.f32 %v1005, %v2294
    %v2296 = vpop.f32.mrb[0].mxu0
    %v2297 = vpop.f32.mrb[0].mxu0
    %v2298 = vadd.f32 %v1005, %v2297
    %v2299 = vpop.f32.mrb[0].mxu0
    %2300 = vmatprep.mubr.bf16.mxu0 %v578
    %2301 = vmatmul.mubr.bf16.gmra.mrb[0].mxu0 %v495
    %v2302 = vpop.f32.mrb[0].mxu0
    %v2303 = vadd.f32 %v1005, %v2302
    %v2304 = vpop.f32.mrb[0].mxu0
    %v2305 = vpop.f32.mrb[0].mxu0
    %v2306 = vadd.f32 %v1005, %v2305
    %v2307 = vpop.f32.mrb[0].mxu0
    %2308 = vmatprep.mubr.bf16.mxu0 %v579
    %2309 = vmatmul.mubr.bf16.gmra.mrb[0].mxu0 %v496
    %v2310 = vpop.f32.mrb[0].mxu0
    %v2311 = vadd.f32 %v1005, %v2310
    %v2312 = vpop.f32.mrb[0].mxu0
    %v2313 = vpop.f32.mrb[0].mxu0
    %v2314 = vadd.f32 %v1005, %v2313
    %v2315 = vpop.f32.mrb[0].mxu0
    %2316 = vmatprep.mubr.bf16.mxu0 %v580
    %2317 = vmatmul.mubr.bf16.gmra.mrb[0].mxu0 %v497
    %v2318 = vpop.f32.mrb[0].mxu0
    %v2319 = vadd.f32 %v1005, %v2318
    %v2320 = vpop.f32.mrb[0].mxu0
    %v2321 = vpop.f32.mrb[0].mxu0
    %v2322 = vadd.f32 %v1005, %v2321
    %v2323 = vpop.f32.mrb[0].mxu0
    %2324 = vmatprep.mubr.bf16.mxu0 %v581
    %2325 = vmatmul.mubr.bf16.gmra.mrb[0].mxu0 %v498
    %v2326 = vpop.f32.mrb[0].mxu0
    %v2327 = vadd.f32 %v1005, %v2326
    %v2328 = vpop.f32.mrb[0].mxu0
    %v2329 = vpop.f32.mrb[0].mxu0
    %v2330 = vadd.f32 %v1005, %v2329
    %v2331 = vpop.f32.mrb[0].mxu0
    %2332 = vmatprep.mubr.bf16.mxu0 %v582
    %2333 = vmatmul.mubr.bf16.gmra.mrb[0].mxu0 %v499
    %v2334 = vpop.f32.mrb[0].mxu0
    %v2335 = vadd.f32 %v1005, %v2334
    %v2336 = vpop.f32.mrb[0].mxu0
    %v2337 = vpop.f32.mrb[0].mxu0
    %v2338 = vadd.f32 %v1005, %v2337
    %v2339 = vpop.f32.mrb[0].mxu0
    %2340 = vmatprep.mubr.bf16.mxu0 %v583
    %2341 = vmatmul.mubr.bf16.gmra.mrb[0].mxu0 %v500
    %v2342 = vpop.f32.mrb[0].mxu0
    %v2343 = vadd.f32 %v1005, %v2342
    %v2344 = vpop.f32.mrb[0].mxu0
    %v2345 = vpop.f32.mrb[0].mxu0
    %v2346 = vadd.f32 %v1005, %v2345
    %v2347 = vpop.f32.mrb[0].mxu0
    %2348 = vmatprep.mubr.bf16.mxu0 %v584
    %2349 = vmatmul.mubr.bf16.gmra.mrb[0].mxu0 %v501
    %v2350 = vpop.f32.mrb[0].mxu0
    %v2351 = vadd.f32 %v1005, %v2350
    %v2352 = vpop.f32.mrb[0].mxu0
    %v2353 = vpop.f32.mrb[0].mxu0
    %v2354 = vadd.f32 %v1005, %v2353
    %v2355 = vpop.f32.mrb[0].mxu0
    %2356 = vmatprep.mubr.bf16.mxu0 %v585
    %2357 = vmatmul.mubr.bf16.gmra.mrb[0].mxu0 %v502
    %v2358 = vpop.f32.mrb[0].mxu0
    %v2359 = vadd.f32 %v1005, %v2358
    %v2360 = vpop.f32.mrb[0].mxu0
    %v2361 = vpop.f32.mrb[0].mxu0
    %v2362 = vadd.f32 %v1005, %v2361
    %v2363 = vpop.f32.mrb[0].mxu0
    %2364 = vmatprep.mubr.bf16.mxu0 %v586
    %2365 = vmatmul.mubr.bf16.gmra.mrb[0].mxu0 %v503
    %v2366 = vpop.f32.mrb[0].mxu0
    %v2367 = vadd.f32 %v1005, %v2366
    %v2368 = vpop.f32.mrb[0].mxu0
    %v2369 = vpop.f32.mrb[0].mxu0
    %v2370 = vadd.f32 %v1005, %v2369
    %v2371 = vpop.f32.mrb[0].mxu0
    %2372 = vmatprep.mubr.bf16.mxu0 %v587
    %2373 = vmatmul.mubr.bf16.gmra.mrb[0].mxu0 %v504
    %v2374 = vpop.f32.mrb[0].mxu0
    %v2375 = vadd.f32 %v1005, %v2374
    %v2376 = vpop.f32.mrb[0].mxu0
    %v2377 = vpop.f32.mrb[0].mxu0
    %v2378 = vadd.f32 %v1005, %v2377
    %v2379 = vpop.f32.mrb[0].mxu0
    %2380 = vmatprep.mubr.bf16.mxu0 %v588
    %2381 = vmatmul.mubr.bf16.gmra.mrb[0].mxu0 %v505
    %v2382 = vpop.f32.mrb[0].mxu0
    %v2383 = vadd.f32 %v1005, %v2382
    %v2384 = vpop.f32.mrb[0].mxu0
    %v2385 = vpop.f32.mrb[0].mxu0
    %v2386 = vadd.f32 %v1005, %v2385
    %v2387 = vpop.f32.mrb[0].mxu0
    %2388 = vdwg.mxu0
    %2389 = vmatprep.subr.bf16.mxu0 0
    %2390 = vmatpush1.bf16.msra.mxu0 %v1459
    %2391 = vmatprep.subr.bf16.mxu0 0
    %2392 = vmatpush1.bf16.msra.mxu0 %v1462
    %2393 = vmatprep.subr.bf16.mxu0 0
    %2394 = vmatpush1.bf16.msra.mxu0 %v1465
    %2395 = vmatprep.subr.bf16.mxu0 0
    %2396 = vmatpush1.bf16.msra.mxu0 %v1468
    %2397 = vmatprep.subr.bf16.mxu0 0
    %2398 = vmatpush1.bf16.msra.mxu0 %v1471
    %2399 = vmatprep.subr.bf16.mxu0 0
    %2400 = vmatpush1.bf16.msra.mxu0 %v1474
    %2401 = vmatprep.subr.bf16.mxu0 0
    %2402 = vmatpush1.bf16.msra.mxu0 %v1477
    %2403 = vmatprep.subr.bf16.mxu0 0
    %2404 = vmatpush1.bf16.msra.mxu0 %v1480
    %2405 = vmatprep.subr.bf16.mxu0 0
    %2406 = vmatpush1.bf16.msra.mxu0 %v1483
    %2407 = vmatprep.subr.bf16.mxu0 0
    %2408 = vmatpush1.bf16.msra.mxu0 %v1486
    %2409 = vmatprep.subr.bf16.mxu0 0
    %2410 = vmatpush1.bf16.msra.mxu0 %v1489
    %2411 = vmatprep.subr.bf16.mxu0 0
    %2412 = vmatpush1.bf16.msra.mxu0 %v1492
    %2413 = vmatprep.subr.bf16.mxu0 0
    %2414 = vmatpush1.bf16.msra.mxu0 %v1495
    %2415 = vmatprep.subr.bf16.mxu0 0
    %2416 = vmatpush1.bf16.msra.mxu0 %v1498
    %2417 = vmatprep.subr.bf16.mxu0 0
    %2418 = vmatpush1.bf16.msra.mxu0 %v1501
    %2419 = vmatprep.subr.bf16.mxu0 0
    %2420 = vmatpush1.bf16.msra.mxu0 %v1504
    %2421 = vmatprep.mubr.bf16.mxu0 %v735
    %2422 = vmatmul.mubr.bf16.gmra.mrb[0].mxu0 %v654
    %v2423 = vpop.f32.mrb[0].mxu0
    %v2424 = vadd.f32 %v2263, %v2423
    %v2425 = vpop.f32.mrb[0].mxu0
    %v2426 = vpop.f32.mrb[0].mxu0
    %v2427 = vadd.f32 %v2266, %v2426
    %v2428 = vpop.f32.mrb[0].mxu0
    %2429 = vmatprep.mubr.bf16.mxu0 %v736
    %2430 = vmatmul.mubr.bf16.gmra.mrb[0].mxu0 %v655
    %v2431 = vpop.f32.mrb[0].mxu0
    %v2432 = vadd.f32 %v2271, %v2431
    %v2433 = vpop.f32.mrb[0].mxu0
    %v2434 = vpop.f32.mrb[0].mxu0
    %v2435 = vadd.f32 %v2274, %v2434
    %v2436 = vpop.f32.mrb[0].mxu0
    %2437 = vmatprep.mubr.bf16.mxu0 %v737
    %2438 = vmatmul.mubr.bf16.gmra.mrb[0].mxu0 %v656
    %v2439 = vpop.f32.mrb[0].mxu0
    %v2440 = vadd.f32 %v2279, %v2439
    %v2441 = vpop.f32.mrb[0].mxu0
    %v2442 = vpop.f32.mrb[0].mxu0
    %v2443 = vadd.f32 %v2282, %v2442
    %v2444 = vpop.f32.mrb[0].mxu0
    %2445 = vmatprep.mubr.bf16.mxu0 %v738
    %2446 = vmatmul.mubr.bf16.gmra.mrb[0].mxu0 %v657
    %v2447 = vpop.f32.mrb[0].mxu0
    %v2448 = vadd.f32 %v2287, %v2447
    %v2449 = vpop.f32.mrb[0].mxu0
    %v2450 = vpop.f32.mrb[0].mxu0
    %v2451 = vadd.f32 %v2290, %v2450
    %v2452 = vpop.f32.mrb[0].mxu0
    %2453 = vmatprep.mubr.bf16.mxu0 %v739
    %2454 = vmatmul.mubr.bf16.gmra.mrb[0].mxu0 %v658
    %v2455 = vpop.f32.mrb[0].mxu0
    %v2456 = vadd.f32 %v2295, %v2455
    %v2457 = vpop.f32.mrb[0].mxu0
    %v2458 = vpop.f32.mrb[0].mxu0
    %v2459 = vadd.f32 %v2298, %v2458
    %v2460 = vpop.f32.mrb[0].mxu0
    %2461 = vmatprep.mubr.bf16.mxu0 %v740
    %2462 = vmatmul.mubr.bf16.gmra.mrb[0].mxu0 %v659
    %v2463 = vpop.f32.mrb[0].mxu0
    %v2464 = vadd.f32 %v2303, %v2463
    %v2465 = vpop.f32.mrb[0].mxu0
    %v2466 = vpop.f32.mrb[0].mxu0
    %v2467 = vadd.f32 %v2306, %v2466
    %v2468 = vpop.f32.mrb[0].mxu0
    %2469 = vmatprep.mubr.bf16.mxu0 %v741
    %2470 = vmatmul.mubr.bf16.gmra.mrb[0].mxu0 %v660
    %v2471 = vpop.f32.mrb[0].mxu0
    %v2472 = vadd.f32 %v2311, %v2471
    %v2473 = vpop.f32.mrb[0].mxu0
    %v2474 = vpop.f32.mrb[0].mxu0
    %v2475 = vadd.f32 %v2314, %v2474
    %v2476 = vpop.f32.mrb[0].mxu0
    %2477 = vmatprep.mubr.bf16.mxu0 %v742
    %2478 = vmatmul.mubr.bf16.gmra.mrb[0].mxu0 %v661
    %v2479 = vpop.f32.mrb[0].mxu0
    %v2480 = vadd.f32 %v2319, %v2479
    %v2481 = vpop.f32.mrb[0].mxu0
    %v2482 = vpop.f32.mrb[0].mxu0
    %v2483 = vadd.f32 %v2322, %v2482
    %v2484 = vpop.f32.mrb[0].mxu0
    %2485 = vmatprep.mubr.bf16.mxu0 %v743
    %2486 = vmatmul.mubr.bf16.gmra.mrb[0].mxu0 %v662
    %v2487 = vpop.f32.mrb[0].mxu0
    %v2488 = vadd.f32 %v2327, %v2487
    %v2489 = vpop.f32.mrb[0].mxu0
    %v2490 = vpop.f32.mrb[0].mxu0
    %v2491 = vadd.f32 %v2330, %v2490
    %v2492 = vpop.f32.mrb[0].mxu0
    %2493 = vmatprep.mubr.bf16.mxu0 %v744
    %2494 = vmatmul.mubr.bf16.gmra.mrb[0].mxu0 %v663
    %v2495 = vpop.f32.mrb[0].mxu0
    %v2496 = vadd.f32 %v2335, %v2495
    %v2497 = vpop.f32.mrb[0].mxu0
    %v2498 = vpop.f32.mrb[0].mxu0
    %v2499 = vadd.f32 %v2338, %v2498
    %v2500 = vpop.f32.mrb[0].mxu0
    %2501 = vmatprep.mubr.bf16.mxu0 %v745
    %2502 = vmatmul.mubr.bf16.gmra.mrb[0].mxu0 %v664
    %v2503 = vpop.f32.mrb[0].mxu0
    %v2504 = vadd.f32 %v2343, %v2503
    %v2505 = vpop.f32.mrb[0].mxu0
    %v2506 = vpop.f32.mrb[0].mxu0
    %v2507 = vadd.f32 %v2346, %v2506
    %v2508 = vpop.f32.mrb[0].mxu0
    %2509 = vmatprep.mubr.bf16.mxu0 %v746
    %2510 = vmatmul.mubr.bf16.gmra.mrb[0].mxu0 %v665
    %v2511 = vpop.f32.mrb[0].mxu0
    %v2512 = vadd.f32 %v2351, %v2511
    %v2513 = vpop.f32.mrb[0].mxu0
    %v2514 = vpop.f32.mrb[0].mxu0
    %v2515 = vadd.f32 %v2354, %v2514
    %v2516 = vpop.f32.mrb[0].mxu0
    %2517 = vmatprep.mubr.bf16.mxu0 %v747
    %2518 = vmatmul.mubr.bf16.gmra.mrb[0].mxu0 %v666
    %v2519 = vpop.f32.mrb[0].mxu0
    %v2520 = vadd.f32 %v2359, %v2519
    %v2521 = vpop.f32.mrb[0].mxu0
    %v2522 = vpop.f32.mrb[0].mxu0
    %v2523 = vadd.f32 %v2362, %v2522
    %v2524 = vpop.f32.mrb[0].mxu0
    %2525 = vmatprep.mubr.bf16.mxu0 %v748
    %2526 = vmatmul.mubr.bf16.gmra.mrb[0].mxu0 %v667
    %v2527 = vpop.f32.mrb[0].mxu0
    %v2528 = vadd.f32 %v2367, %v2527
    %v2529 = vpop.f32.mrb[0].mxu0
    %v2530 = vpop.f32.mrb[0].mxu0
    %v2531 = vadd.f32 %v2370, %v2530
    %v2532 = vpop.f32.mrb[0].mxu0
    %2533 = vmatprep.mubr.bf16.mxu0 %v749
    %2534 = vmatmul.mubr.bf16.gmra.mrb[0].mxu0 %v668
    %v2535 = vpop.f32.mrb[0].mxu0
    %v2536 = vadd.f32 %v2375, %v2535
    %v2537 = vpop.f32.mrb[0].mxu0
    %v2538 = vpop.f32.mrb[0].mxu0
    %v2539 = vadd.f32 %v2378, %v2538
    %v2540 = vpop.f32.mrb[0].mxu0
    %2541 = vmatprep.mubr.bf16.mxu0 %v750
    %2542 = vmatmul.mubr.bf16.gmra.mrb[0].mxu0 %v669
    %v2543 = vpop.f32.mrb[0].mxu0
    %v2544 = vadd.f32 %v2383, %v2543
    %v2545 = vpop.f32.mrb[0].mxu0
    %v2546 = vpop.f32.mrb[0].mxu0
    %v2547 = vadd.f32 %v2386, %v2546
    %v2548 = vpop.f32.mrb[0].mxu0
    %2549 = vdwg.mxu0
    %2550 = vmatprep.subr.bf16.mxu0 0
    %2551 = vmatpush1.bf16.msra.mxu0 %v1507
    %2552 = vmatprep.subr.bf16.mxu0 0
    %2553 = vmatpush1.bf16.msra.mxu0 %v1510
    %2554 = vmatprep.subr.bf16.mxu0 0
    %2555 = vmatpush1.bf16.msra.mxu0 %v1513
    %2556 = vmatprep.subr.bf16.mxu0 0
    %2557 = vmatpush1.bf16.msra.mxu0 %v1516
    %2558 = vmatprep.subr.bf16.mxu0 0
    %2559 = vmatpush1.bf16.msra.mxu0 %v1519
    %2560 = vmatprep.subr.bf16.mxu0 0
    %2561 = vmatpush1.bf16.msra.mxu0 %v1522
    %2562 = vmatprep.subr.bf16.mxu0 0
    %2563 = vmatpush1.bf16.msra.mxu0 %v1525
    %2564 = vmatprep.subr.bf16.mxu0 0
    %2565 = vmatpush1.bf16.msra.mxu0 %v1528
    %2566 = vmatprep.subr.bf16.mxu0 0
    %2567 = vmatpush1.bf16.msra.mxu0 0
    %2568 = vmatprep.subr.bf16.mxu0 0
    %2569 = vmatpush1.bf16.msra.mxu0 0
    %2570 = vmatprep.subr.bf16.mxu0 0
    %2571 = vmatpush1.bf16.msra.mxu0 0
    %2572 = vmatprep.subr.bf16.mxu0 0
    %2573 = vmatpush1.bf16.msra.mxu0 0
    %2574 = vmatprep.subr.bf16.mxu0 0
    %2575 = vmatpush1.bf16.msra.mxu0 0
    %2576 = vmatprep.subr.bf16.mxu0 0
    %2577 = vmatpush1.bf16.msra.mxu0 0
    %2578 = vmatprep.subr.bf16.mxu0 0
    %2579 = vmatpush1.bf16.msra.mxu0 0
    %2580 = vmatprep.subr.bf16.mxu0 0
    %2581 = vmatpush1.bf16.msra.mxu0 0
    %2582 = vmatprep.mubr.bf16.mxu0 0
    %2583 = vmatmul.mubr.bf16.gmra.mrb[0].mxu0 %v816
    %v2584 = vpop.f32.mrb[0].mxu0
    %v2585 = vadd.f32 %v2424, %v2584
    %v2586 = vpop.f32.mrb[0].mxu0
    %v2587 = vpop.f32.mrb[0].mxu0
    %v2588 = vadd.f32 %v2427, %v2587
    %v2589 = vpop.f32.mrb[0].mxu0
    %2590 = vmatprep.mubr.bf16.mxu0 0
    %2591 = vmatmul.mubr.bf16.gmra.mrb[0].mxu0 %v817
    %v2592 = vpop.f32.mrb[0].mxu0
    %v2593 = vadd.f32 %v2432, %v2592
    %v2594 = vpop.f32.mrb[0].mxu0
    %v2595 = vpop.f32.mrb[0].mxu0
    %v2596 = vadd.f32 %v2435, %v2595
    %v2597 = vpop.f32.mrb[0].mxu0
    %2598 = vmatprep.mubr.bf16.mxu0 0
    %2599 = vmatmul.mubr.bf16.gmra.mrb[0].mxu0 %v818
    %v2600 = vpop.f32.mrb[0].mxu0
    %v2601 = vadd.f32 %v2440, %v2600
    %v2602 = vpop.f32.mrb[0].mxu0
    %v2603 = vpop.f32.mrb[0].mxu0
    %v2604 = vadd.f32 %v2443, %v2603
    %v2605 = vpop.f32.mrb[0].mxu0
    %2606 = vmatprep.mubr.bf16.mxu0 0
    %2607 = vmatmul.mubr.bf16.gmra.mrb[0].mxu0 %v819
    %v2608 = vpop.f32.mrb[0].mxu0
    %v2609 = vadd.f32 %v2448, %v2608
    %v2610 = vpop.f32.mrb[0].mxu0
    %v2611 = vpop.f32.mrb[0].mxu0
    %v2612 = vadd.f32 %v2451, %v2611
    %v2613 = vpop.f32.mrb[0].mxu0
    %2614 = vmatprep.mubr.bf16.mxu0 0
    %2615 = vmatmul.mubr.bf16.gmra.mrb[0].mxu0 %v820
    %v2616 = vpop.f32.mrb[0].mxu0
    %v2617 = vadd.f32 %v2456, %v2616
    %v2618 = vpop.f32.mrb[0].mxu0
    %v2619 = vpop.f32.mrb[0].mxu0
    %v2620 = vadd.f32 %v2459, %v2619
    %v2621 = vpop.f32.mrb[0].mxu0
    %2622 = vmatprep.mubr.bf16.mxu0 0
    %2623 = vmatmul.mubr.bf16.gmra.mrb[0].mxu0 %v821
    %v2624 = vpop.f32.mrb[0].mxu0
    %v2625 = vadd.f32 %v2464, %v2624
    %v2626 = vpop.f32.mrb[0].mxu0
    %v2627 = vpop.f32.mrb[0].mxu0
    %v2628 = vadd.f32 %v2467, %v2627
    %v2629 = vpop.f32.mrb[0].mxu0
    %2630 = vmatprep.mubr.bf16.mxu0 0
    %2631 = vmatmul.mubr.bf16.gmra.mrb[0].mxu0 %v822
    %v2632 = vpop.f32.mrb[0].mxu0
    %v2633 = vadd.f32 %v2472, %v2632
    %v2634 = vpop.f32.mrb[0].mxu0
    %v2635 = vpop.f32.mrb[0].mxu0
    %v2636 = vadd.f32 %v2475, %v2635
    %v2637 = vpop.f32.mrb[0].mxu0
    %2638 = vmatprep.mubr.bf16.mxu0 0
    %2639 = vmatmul.mubr.bf16.gmra.mrb[0].mxu0 %v823
    %v2640 = vpop.f32.mrb[0].mxu0
    %v2641 = vadd.f32 %v2480, %v2640
    %v2642 = vpop.f32.mrb[0].mxu0
    %v2643 = vpop.f32.mrb[0].mxu0
    %v2644 = vadd.f32 %v2483, %v2643
    %v2645 = vpop.f32.mrb[0].mxu0
    %2646 = vmatprep.mubr.bf16.mxu0 0
    %2647 = vmatmul.mubr.bf16.gmra.mrb[0].mxu0 %v824
    %v2648 = vpop.f32.mrb[0].mxu0
    %v2649 = vadd.f32 %v2488, %v2648
    %v2650 = vpop.f32.mrb[0].mxu0
    %v2651 = vpop.f32.mrb[0].mxu0
    %v2652 = vadd.f32 %v2491, %v2651
    %v2653 = vpop.f32.mrb[0].mxu0
    %2654 = vmatprep.mubr.bf16.mxu0 0
    %2655 = vmatmul.mubr.bf16.gmra.mrb[0].mxu0 %v825
    %v2656 = vpop.f32.mrb[0].mxu0
    %v2657 = vadd.f32 %v2496, %v2656
    %v2658 = vpop.f32.mrb[0].mxu0
    %v2659 = vpop.f32.mrb[0].mxu0
    %v2660 = vadd.f32 %v2499, %v2659
    %v2661 = vpop.f32.mrb[0].mxu0
    %2662 = vmatprep.mubr.bf16.mxu0 0
    %2663 = vmatmul.mubr.bf16.gmra.mrb[0].mxu0 %v826
    %v2664 = vpop.f32.mrb[0].mxu0
    %v2665 = vadd.f32 %v2504, %v2664
    %v2666 = vpop.f32.mrb[0].mxu0
    %v2667 = vpop.f32.mrb[0].mxu0
    %v2668 = vadd.f32 %v2507, %v2667
    %v2669 = vpop.f32.mrb[0].mxu0
    %2670 = vmatprep.mubr.bf16.mxu0 0
    %2671 = vmatmul.mubr.bf16.gmra.mrb[0].mxu0 %v827
    %v2672 = vpop.f32.mrb[0].mxu0
    %v2673 = vadd.f32 %v2512, %v2672
    %v2674 = vpop.f32.mrb[0].mxu0
    %v2675 = vpop.f32.mrb[0].mxu0
    %v2676 = vadd.f32 %v2515, %v2675
    %v2677 = vpop.f32.mrb[0].mxu0
    %2678 = vmatprep.mubr.bf16.mxu0 0
    %2679 = vmatmul.mubr.bf16.gmra.mrb[0].mxu0 %v828
    %v2680 = vpop.f32.mrb[0].mxu0
    %v2681 = vadd.f32 %v2520, %v2680
    %v2682 = vpop.f32.mrb[0].mxu0
    %v2683 = vpop.f32.mrb[0].mxu0
    %v2684 = vadd.f32 %v2523, %v2683
    %v2685 = vpop.f32.mrb[0].mxu0
    %2686 = vmatprep.mubr.bf16.mxu0 0
    %2687 = vmatmul.mubr.bf16.gmra.mrb[0].mxu0 %v829
    %v2688 = vpop.f32.mrb[0].mxu0
    %v2689 = vadd.f32 %v2528, %v2688
    %v2690 = vpop.f32.mrb[0].mxu0
    %v2691 = vpop.f32.mrb[0].mxu0
    %v2692 = vadd.f32 %v2531, %v2691
    %v2693 = vpop.f32.mrb[0].mxu0
    %2694 = vmatprep.mubr.bf16.mxu0 0
    %2695 = vmatmul.mubr.bf16.gmra.mrb[0].mxu0 %v830
    %v2696 = vpop.f32.mrb[0].mxu0
    %v2697 = vadd.f32 %v2536, %v2696
    %v2698 = vpop.f32.mrb[0].mxu0
    %v2699 = vpop.f32.mrb[0].mxu0
    %v2700 = vadd.f32 %v2539, %v2699
    %v2701 = vpop.f32.mrb[0].mxu0
    %2702 = vmatprep.mubr.bf16.mxu0 0
    %2703 = vmatmul.mubr.bf16.gmra.mrb[0].mxu0 %v831
    %v2704 = vpop.f32.mrb[0].mxu0
    %v2705 = vadd.f32 %v2544, %v2704
    %v2706 = vpop.f32.mrb[0].mxu0
    %v2707 = vpop.f32.mrb[0].mxu0
    %v2708 = vadd.f32 %v2547, %v2707
    %v2709 = vpop.f32.mrb[0].mxu0
    %2710 = vdwg.mxu0
    %v2711 = vmax.f32 %v2070, 0.0
    %v2712 = vmax.f32 %v2072, 0.0
    %v2713 = vmax.f32 %v2585, 0.0
    %v2714 = vmax.f32 %v2074, 0.0
    %v2715 = vmax.f32 %v2076, 0.0
    %v2716 = vmax.f32 %v2588, 0.0
    %v2717 = vmax.f32 %v2080, 0.0
    %v2718 = vmax.f32 %v2082, 0.0
    %v2719 = vmax.f32 %v2593, 0.0
    %v2720 = vmax.f32 %v2084, 0.0
    %v2721 = vmax.f32 %v2086, 0.0
    %v2722 = vmax.f32 %v2596, 0.0
    %v2723 = vmax.f32 %v2090, 0.0
    %v2724 = vmax.f32 %v2092, 0.0
    %v2725 = vmax.f32 %v2601, 0.0
    %v2726 = vmax.f32 %v2094, 0.0
    %v2727 = vmax.f32 %v2096, 0.0
    %v2728 = vmax.f32 %v2604, 0.0
    %v2729 = vmax.f32 %v2100, 0.0
    %v2730 = vmax.f32 %v2102, 0.0
    %v2731 = vmax.f32 %v2609, 0.0
    %v2732 = vmax.f32 %v2104, 0.0
    %v2733 = vmax.f32 %v2106, 0.0
    %v2734 = vmax.f32 %v2612, 0.0
    %v2735 = vmax.f32 %v2110, 0.0
    %v2736 = vmax.f32 %v2112, 0.0
    %v2737 = vmax.f32 %v2617, 0.0
    %v2738 = vmax.f32 %v2114, 0.0
    %v2739 = vmax.f32 %v2116, 0.0
    %v2740 = vmax.f32 %v2620, 0.0
    %v2741 = vmax.f32 %v2120, 0.0
    %v2742 = vmax.f32 %v2122, 0.0
    %v2743 = vmax.f32 %v2625, 0.0
    %v2744 = vmax.f32 %v2124, 0.0
    %v2745 = vmax.f32 %v2126, 0.0
    %v2746 = vmax.f32 %v2628, 0.0
    %v2747 = vmax.f32 %v2130, 0.0
    %v2748 = vmax.f32 %v2132, 0.0
    %v2749 = vmax.f32 %v2633, 0.0
    %v2750 = vmax.f32 %v2134, 0.0
    %v2751 = vmax.f32 %v2136, 0.0
    %v2752 = vmax.f32 %v2636, 0.0
    %v2753 = vmax.f32 %v2140, 0.0
    %v2754 = vmax.f32 %v2142, 0.0
    %v2755 = vmax.f32 %v2641, 0.0
    %v2756 = vmax.f32 %v2144, 0.0
    %v2757 = vmax.f32 %v2146, 0.0
    %v2758 = vmax.f32 %v2644, 0.0
    %v2759 = vmax.f32 %v2150, 0.0
    %v2760 = vmax.f32 %v2152, 0.0
    %v2761 = vmax.f32 %v2649, 0.0
    %v2762 = vmax.f32 %v2154, 0.0
    %v2763 = vmax.f32 %v2156, 0.0
    %v2764 = vmax.f32 %v2652, 0.0
    %v2765 = vmax.f32 %v2160, 0.0
    %v2766 = vmax.f32 %v2162, 0.0
    %v2767 = vmax.f32 %v2657, 0.0
    %v2768 = vmax.f32 %v2164, 0.0
    %v2769 = vmax.f32 %v2166, 0.0
    %v2770 = vmax.f32 %v2660, 0.0
    %v2771 = vmax.f32 %v2170, 0.0
    %v2772 = vmax.f32 %v2172, 0.0
    %v2773 = vmax.f32 %v2665, 0.0
    %v2774 = vmax.f32 %v2174, 0.0
    %v2775 = vmax.f32 %v2176, 0.0
    %v2776 = vmax.f32 %v2668, 0.0
    %v2777 = vmax.f32 %v2180, 0.0
    %v2778 = vmax.f32 %v2182, 0.0
    %v2779 = vmax.f32 %v2673, 0.0
    %v2780 = vmax.f32 %v2184, 0.0
    %v2781 = vmax.f32 %v2186, 0.0
    %v2782 = vmax.f32 %v2676, 0.0
    %v2783 = vmax.f32 %v2190, 0.0
    %v2784 = vmax.f32 %v2192, 0.0
    %v2785 = vmax.f32 %v2681, 0.0
    %v2786 = vmax.f32 %v2194, 0.0
    %v2787 = vmax.f32 %v2196, 0.0
    %v2788 = vmax.f32 %v2684, 0.0
    %v2789 = vmax.f32 %v2200, 0.0
    %v2790 = vmax.f32 %v2202, 0.0
    %v2791 = vmax.f32 %v2689, 0.0
    %v2792 = vmax.f32 %v2204, 0.0
    %v2793 = vmax.f32 %v2206, 0.0
    %v2794 = vmax.f32 %v2692, 0.0
    %v2795 = vmax.f32 %v2210, 0.0
    %v2796 = vmax.f32 %v2212, 0.0
    %v2797 = vmax.f32 %v2697, 0.0
    %v2798 = vmax.f32 %v2214, 0.0
    %v2799 = vmax.f32 %v2216, 0.0
    %v2800 = vmax.f32 %v2700, 0.0
    %v2801 = vmax.f32 %v2220, 0.0
    %v2802 = vmax.f32 %v2222, 0.0
    %v2803 = vmax.f32 %v2705, 0.0
    %v2804 = vmax.f32 %v2224, 0.0
    %v2805 = vmax.f32 %v2226, 0.0
    %v2806 = vmax.f32 %v2708, 0.0
    %v2807 = vld [vmem:[#allocation4] sm:$0xff]
    %v2808 = vld [vmem:[#allocation4 + $0x8] sm:$0xff]
    %v2809 = vld [vmem:[#allocation4 + $0x10] sm:$0xff]
    %v2810 = vld [vmem:[#allocation4 + $0x18] sm:$0xff]
    %v2811 = vld [vmem:[#allocation4 + $0x20] sm:$0xff]
    %v2812 = vld [vmem:[#allocation4 + $0x28] sm:$0xff]
    %v2813 = vmul.f32 %v2711, %v2807
    %v2814 = vmul.f32 %v2712, %v2808
    %v2815 = vmul.f32 %v2713, %v2809
    %v2816 = vmul.f32 %v2714, %v2810
    %v2817 = vmul.f32 %v2715, %v2811
    %v2818 = vmul.f32 %v2716, %v2812
    %v2819 = vmul.f32 %v2717, %v2807
    %v2820 = vmul.f32 %v2718, %v2808
    %v2821 = vmul.f32 %v2719, %v2809
    %v2822 = vmul.f32 %v2720, %v2810
    %v2823 = vmul.f32 %v2721, %v2811
    %v2824 = vmul.f32 %v2722, %v2812
    %v2825 = vmul.f32 %v2723, %v2807
    %v2826 = vmul.f32 %v2724, %v2808
    %v2827 = vmul.f32 %v2725, %v2809
    %v2828 = vmul.f32 %v2726, %v2810
    %v2829 = vmul.f32 %v2727, %v2811
    %v2830 = vmul.f32 %v2728, %v2812
    %v2831 = vmul.f32 %v2729, %v2807
    %v2832 = vmul.f32 %v2730, %v2808
    %v2833 = vmul.f32 %v2731, %v2809
    %v2834 = vmul.f32 %v2732, %v2810
    %v2835 = vmul.f32 %v2733, %v2811
    %v2836 = vmul.f32 %v2734, %v2812
    %v2837 = vmul.f32 %v2735, %v2807
    %v2838 = vmul.f32 %v2736, %v2808
    %v2839 = vmul.f32 %v2737, %v2809
    %v2840 = vmul.f32 %v2738, %v2810
    %v2841 = vmul.f32 %v2739, %v2811
    %v2842 = vmul.f32 %v2740, %v2812
    %v2843 = vmul.f32 %v2741, %v2807
    %v2844 = vmul.f32 %v2742, %v2808
    %v2845 = vmul.f32 %v2743, %v2809
    %v2846 = vmul.f32 %v2744, %v2810
    %v2847 = vmul.f32 %v2745, %v2811
    %v2848 = vmul.f32 %v2746, %v2812
    %v2849 = vmul.f32 %v2747, %v2807
    %v2850 = vmul.f32 %v2748, %v2808
    %v2851 = vmul.f32 %v2749, %v2809
    %v2852 = vmul.f32 %v2750, %v2810
    %v2853 = vmul.f32 %v2751, %v2811
    %v2854 = vmul.f32 %v2752, %v2812
    %v2855 = vmul.f32 %v2753, %v2807
    %v2856 = vmul.f32 %v2754, %v2808
    %v2857 = vmul.f32 %v2755, %v2809
    %v2858 = vmul.f32 %v2756, %v2810
    %v2859 = vmul.f32 %v2757, %v2811
    %v2860 = vmul.f32 %v2758, %v2812
    %v2861 = vmul.f32 %v2759, %v2807
    %v2862 = vmul.f32 %v2760, %v2808
    %v2863 = vmul.f32 %v2761, %v2809
    %v2864 = vmul.f32 %v2762, %v2810
    %v2865 = vmul.f32 %v2763, %v2811
    %v2866 = vmul.f32 %v2764, %v2812
    %v2867 = vmul.f32 %v2765, %v2807
    %v2868 = vmul.f32 %v2766, %v2808
    %v2869 = vmul.f32 %v2767, %v2809
    %v2870 = vmul.f32 %v2768, %v2810
    %v2871 = vmul.f32 %v2769, %v2811
    %v2872 = vmul.f32 %v2770, %v2812
    %v2873 = vmul.f32 %v2771, %v2807
    %v2874 = vmul.f32 %v2772, %v2808
    %v2875 = vmul.f32 %v2773, %v2809
    %v2876 = vmul.f32 %v2774, %v2810
    %v2877 = vmul.f32 %v2775, %v2811
    %v2878 = vmul.f32 %v2776, %v2812
    %v2879 = vmul.f32 %v2777, %v2807
    %v2880 = vmul.f32 %v2778, %v2808
    %v2881 = vmul.f32 %v2779, %v2809
    %v2882 = vmul.f32 %v2780, %v2810
    %v2883 = vmul.f32 %v2781, %v2811
    %v2884 = vmul.f32 %v2782, %v2812
    %v2885 = vmul.f32 %v2783, %v2807
    %v2886 = vmul.f32 %v2784, %v2808
    %v2887 = vmul.f32 %v2785, %v2809
    %v2888 = vmul.f32 %v2786, %v2810
    %v2889 = vmul.f32 %v2787, %v2811
    %v2890 = vmul.f32 %v2788, %v2812
    %v2891 = vmul.f32 %v2789, %v2807
    %v2892 = vmul.f32 %v2790, %v2808
    %v2893 = vmul.f32 %v2791, %v2809
    %v2894 = vmul.f32 %v2792, %v2810
    %v2895 = vmul.f32 %v2793, %v2811
    %v2896 = vmul.f32 %v2794, %v2812
    %v2897 = vmul.f32 %v2795, %v2807
    %v2898 = vmul.f32 %v2796, %v2808
    %v2899 = vmul.f32 %v2797, %v2809
    %v2900 = vmul.f32 %v2798, %v2810
    %v2901 = vmul.f32 %v2799, %v2811
    %v2902 = vmul.f32 %v2800, %v2812
    %v2903 = vmul.f32 %v2801, %v2807
    %v2904 = vmul.f32 %v2802, %v2808
    %v2905 = vmul.f32 %v2803, %v2809
    %v2906 = vmul.f32 %v2804, %v2810
    %v2907 = vmul.f32 %v2805, %v2811
    %v2908 = vmul.f32 %v2806, %v2812
    %v2909 = vmax.f32 %v2813, %v2816
    %v2910 = vrot.slane %v2909, 4
    %v2911 = vmax.f32 %v2909, %v2910
    %v2912 = vrot.slane %v2911, 2
    %v2913 = vmax.f32 %v2911, %v2912
    %v2914 = vrot.slane %v2913, 1
    %v2915 = vmax.f32 %v2913, %v2914
    %v2916 = vmax.f32 %v2814, %v2817
    %v2917 = vrot.slane %v2916, 4
    %v2918 = vmax.f32 %v2916, %v2917
    %v2919 = vrot.slane %v2918, 2
    %v2920 = vmax.f32 %v2918, %v2919
    %v2921 = vrot.slane %v2920, 1
    %v2922 = vmax.f32 %v2920, %v2921
    %v2923 = vmax.f32 %v2815, %v2818
    %v2924 = vrot.slane %v2923, 4
    %v2925 = vmax.f32 %v2923, %v2924
    %v2926 = vrot.slane %v2925, 2
    %v2927 = vmax.f32 %v2925, %v2926
    %v2928 = vrot.slane %v2927, 1
    %v2929 = vmax.f32 %v2927, %v2928
    %v2930 = vmax.f32 %v2819, %v2822
    %v2931 = vrot.slane %v2930, 4
    %v2932 = vmax.f32 %v2930, %v2931
    %v2933 = vrot.slane %v2932, 2
    %v2934 = vmax.f32 %v2932, %v2933
    %v2935 = vrot.slane %v2934, 1
    %v2936 = vmax.f32 %v2934, %v2935
    %v2937 = vmax.f32 %v2820, %v2823
    %v2938 = vrot.slane %v2937, 4
    %v2939 = vmax.f32 %v2937, %v2938
    %v2940 = vrot.slane %v2939, 2
    %v2941 = vmax.f32 %v2939, %v2940
    %v2942 = vrot.slane %v2941, 1
    %v2943 = vmax.f32 %v2941, %v2942
    %v2944 = vmax.f32 %v2821, %v2824
    %v2945 = vrot.slane %v2944, 4
    %v2946 = vmax.f32 %v2944, %v2945
    %v2947 = vrot.slane %v2946, 2
    %v2948 = vmax.f32 %v2946, %v2947
    %v2949 = vrot.slane %v2948, 1
    %v2950 = vmax.f32 %v2948, %v2949
    %v2951 = vmax.f32 %v2825, %v2828
    %v2952 = vrot.slane %v2951, 4
    %v2953 = vmax.f32 %v2951, %v2952
    %v2954 = vrot.slane %v2953, 2
    %v2955 = vmax.f32 %v2953, %v2954
    %v2956 = vrot.slane %v2955, 1
    %v2957 = vmax.f32 %v2955, %v2956
    %v2958 = vmax.f32 %v2826, %v2829
    %v2959 = vrot.slane %v2958, 4
    %v2960 = vmax.f32 %v2958, %v2959
    %v2961 = vrot.slane %v2960, 2
    %v2962 = vmax.f32 %v2960, %v2961
    %v2963 = vrot.slane %v2962, 1
    %v2964 = vmax.f32 %v2962, %v2963
    %v2965 = vmax.f32 %v2827, %v2830
    %v2966 = vrot.slane %v2965, 4
    %v2967 = vmax.f32 %v2965, %v2966
    %v2968 = vrot.slane %v2967, 2
    %v2969 = vmax.f32 %v2967, %v2968
    %v2970 = vrot.slane %v2969, 1
    %v2971 = vmax.f32 %v2969, %v2970
    %v2972 = vmax.f32 %v2831, %v2834
    %v2973 = vrot.slane %v2972, 4
    %v2974 = vmax.f32 %v2972, %v2973
    %v2975 = vrot.slane %v2974, 2
    %v2976 = vmax.f32 %v2974, %v2975
    %v2977 = vrot.slane %v2976, 1
    %v2978 = vmax.f32 %v2976, %v2977
    %v2979 = vmax.f32 %v2832, %v2835
    %v2980 = vrot.slane %v2979, 4
    %v2981 = vmax.f32 %v2979, %v2980
    %v2982 = vrot.slane %v2981, 2
    %v2983 = vmax.f32 %v2981, %v2982
    %v2984 = vrot.slane %v2983, 1
    %v2985 = vmax.f32 %v2983, %v2984
    %v2986 = vmax.f32 %v2833, %v2836
    %v2987 = vrot.slane %v2986, 4
    %v2988 = vmax.f32 %v2986, %v2987
    %v2989 = vrot.slane %v2988, 2
    %v2990 = vmax.f32 %v2988, %v2989
    %v2991 = vrot.slane %v2990, 1
    %v2992 = vmax.f32 %v2990, %v2991
    %v2993 = vmax.f32 %v2837, %v2840
    %v2994 = vrot.slane %v2993, 4
    %v2995 = vmax.f32 %v2993, %v2994
    %v2996 = vrot.slane %v2995, 2
    %v2997 = vmax.f32 %v2995, %v2996
    %v2998 = vrot.slane %v2997, 1
    %v2999 = vmax.f32 %v2997, %v2998
    %v3000 = vmax.f32 %v2838, %v2841
    %v3001 = vrot.slane %v3000, 4
    %v3002 = vmax.f32 %v3000, %v3001
    %v3003 = vrot.slane %v3002, 2
    %v3004 = vmax.f32 %v3002, %v3003
    %v3005 = vrot.slane %v3004, 1
    %v3006 = vmax.f32 %v3004, %v3005
    %v3007 = vmax.f32 %v2839, %v2842
    %v3008 = vrot.slane %v3007, 4
    %v3009 = vmax.f32 %v3007, %v3008
    %v3010 = vrot.slane %v3009, 2
    %v3011 = vmax.f32 %v3009, %v3010
    %v3012 = vrot.slane %v3011, 1
    %v3013 = vmax.f32 %v3011, %v3012
    %v3014 = vmax.f32 %v2843, %v2846
    %v3015 = vrot.slane %v3014, 4
    %v3016 = vmax.f32 %v3014, %v3015
    %v3017 = vrot.slane %v3016, 2
    %v3018 = vmax.f32 %v3016, %v3017
    %v3019 = vrot.slane %v3018, 1
    %v3020 = vmax.f32 %v3018, %v3019
    %v3021 = vmax.f32 %v2844, %v2847
    %v3022 = vrot.slane %v3021, 4
    %v3023 = vmax.f32 %v3021, %v3022
    %v3024 = vrot.slane %v3023, 2
    %v3025 = vmax.f32 %v3023, %v3024
    %v3026 = vrot.slane %v3025, 1
    %v3027 = vmax.f32 %v3025, %v3026
    %v3028 = vmax.f32 %v2845, %v2848
    %v3029 = vrot.slane %v3028, 4
    %v3030 = vmax.f32 %v3028, %v3029
    %v3031 = vrot.slane %v3030, 2
    %v3032 = vmax.f32 %v3030, %v3031
    %v3033 = vrot.slane %v3032, 1
    %v3034 = vmax.f32 %v3032, %v3033
    %v3035 = vmax.f32 %v2849, %v2852
    %v3036 = vrot.slane %v3035, 4
    %v3037 = vmax.f32 %v3035, %v3036
    %v3038 = vrot.slane %v3037, 2
    %v3039 = vmax.f32 %v3037, %v3038
    %v3040 = vrot.slane %v3039, 1
    %v3041 = vmax.f32 %v3039, %v3040
    %v3042 = vmax.f32 %v2850, %v2853
    %v3043 = vrot.slane %v3042, 4
    %v3044 = vmax.f32 %v3042, %v3043
    %v3045 = vrot.slane %v3044, 2
    %v3046 = vmax.f32 %v3044, %v3045
    %v3047 = vrot.slane %v3046, 1
    %v3048 = vmax.f32 %v3046, %v3047
    %v3049 = vmax.f32 %v2851, %v2854
    %v3050 = vrot.slane %v3049, 4
    %v3051 = vmax.f32 %v3049, %v3050
    %v3052 = vrot.slane %v3051, 2
    %v3053 = vmax.f32 %v3051, %v3052
    %v3054 = vrot.slane %v3053, 1
    %v3055 = vmax.f32 %v3053, %v3054
    %v3056 = vmax.f32 %v2855, %v2858
    %v3057 = vrot.slane %v3056, 4
    %v3058 = vmax.f32 %v3056, %v3057
    %v3059 = vrot.slane %v3058, 2
    %v3060 = vmax.f32 %v3058, %v3059
    %v3061 = vrot.slane %v3060, 1
    %v3062 = vmax.f32 %v3060, %v3061
    %v3063 = vmax.f32 %v2856, %v2859
    %v3064 = vrot.slane %v3063, 4
    %v3065 = vmax.f32 %v3063, %v3064
    %v3066 = vrot.slane %v3065, 2
    %v3067 = vmax.f32 %v3065, %v3066
    %v3068 = vrot.slane %v3067, 1
    %v3069 = vmax.f32 %v3067, %v3068
    %v3070 = vmax.f32 %v2857, %v2860
    %v3071 = vrot.slane %v3070, 4
    %v3072 = vmax.f32 %v3070, %v3071
    %v3073 = vrot.slane %v3072, 2
    %v3074 = vmax.f32 %v3072, %v3073
    %v3075 = vrot.slane %v3074, 1
    %v3076 = vmax.f32 %v3074, %v3075
    %v3077 = vmax.f32 %v2861, %v2864
    %v3078 = vrot.slane %v3077, 4
    %v3079 = vmax.f32 %v3077, %v3078
    %v3080 = vrot.slane %v3079, 2
    %v3081 = vmax.f32 %v3079, %v3080
    %v3082 = vrot.slane %v3081, 1
    %v3083 = vmax.f32 %v3081, %v3082
    %v3084 = vmax.f32 %v2862, %v2865
    %v3085 = vrot.slane %v3084, 4
    %v3086 = vmax.f32 %v3084, %v3085
    %v3087 = vrot.slane %v3086, 2
    %v3088 = vmax.f32 %v3086, %v3087
    %v3089 = vrot.slane %v3088, 1
    %v3090 = vmax.f32 %v3088, %v3089
    %v3091 = vmax.f32 %v2863, %v2866
    %v3092 = vrot.slane %v3091, 4
    %v3093 = vmax.f32 %v3091, %v3092
    %v3094 = vrot.slane %v3093, 2
    %v3095 = vmax.f32 %v3093, %v3094
    %v3096 = vrot.slane %v3095, 1
    %v3097 = vmax.f32 %v3095, %v3096
    %v3098 = vmax.f32 %v2867, %v2870
    %v3099 = vrot.slane %v3098, 4
    %v3100 = vmax.f32 %v3098, %v3099
    %v3101 = vrot.slane %v3100, 2
    %v3102 = vmax.f32 %v3100, %v3101
    %v3103 = vrot.slane %v3102, 1
    %v3104 = vmax.f32 %v3102, %v3103
    %v3105 = vmax.f32 %v2868, %v2871
    %v3106 = vrot.slane %v3105, 4
    %v3107 = vmax.f32 %v3105, %v3106
    %v3108 = vrot.slane %v3107, 2
    %v3109 = vmax.f32 %v3107, %v3108
    %v3110 = vrot.slane %v3109, 1
    %v3111 = vmax.f32 %v3109, %v3110
    %v3112 = vmax.f32 %v2869, %v2872
    %v3113 = vrot.slane %v3112, 4
    %v3114 = vmax.f32 %v3112, %v3113
    %v3115 = vrot.slane %v3114, 2
    %v3116 = vmax.f32 %v3114, %v3115
    %v3117 = vrot.slane %v3116, 1
    %v3118 = vmax.f32 %v3116, %v3117
    %v3119 = vmax.f32 %v2873, %v2876
    %v3120 = vrot.slane %v3119, 4
    %v3121 = vmax.f32 %v3119, %v3120
    %v3122 = vrot.slane %v3121, 2
    %v3123 = vmax.f32 %v3121, %v3122
    %v3124 = vrot.slane %v3123, 1
    %v3125 = vmax.f32 %v3123, %v3124
    %v3126 = vmax.f32 %v2874, %v2877
    %v3127 = vrot.slane %v3126, 4
    %v3128 = vmax.f32 %v3126, %v3127
    %v3129 = vrot.slane %v3128, 2
    %v3130 = vmax.f32 %v3128, %v3129
    %v3131 = vrot.slane %v3130, 1
    %v3132 = vmax.f32 %v3130, %v3131
    %v3133 = vmax.f32 %v2875, %v2878
    %v3134 = vrot.slane %v3133, 4
    %v3135 = vmax.f32 %v3133, %v3134
    %v3136 = vrot.slane %v3135, 2
    %v3137 = vmax.f32 %v3135, %v3136
    %v3138 = vrot.slane %v3137, 1
    %v3139 = vmax.f32 %v3137, %v3138
    %v3140 = vmax.f32 %v2879, %v2882
    %v3141 = vrot.slane %v3140, 4
    %v3142 = vmax.f32 %v3140, %v3141
    %v3143 = vrot.slane %v3142, 2
    %v3144 = vmax.f32 %v3142, %v3143
    %v3145 = vrot.slane %v3144, 1
    %v3146 = vmax.f32 %v3144, %v3145
    %v3147 = vmax.f32 %v2880, %v2883
    %v3148 = vrot.slane %v3147, 4
    %v3149 = vmax.f32 %v3147, %v3148
    %v3150 = vrot.slane %v3149, 2
    %v3151 = vmax.f32 %v3149, %v3150
    %v3152 = vrot.slane %v3151, 1
    %v3153 = vmax.f32 %v3151, %v3152
    %v3154 = vmax.f32 %v2881, %v2884
    %v3155 = vrot.slane %v3154, 4
    %v3156 = vmax.f32 %v3154, %v3155
    %v3157 = vrot.slane %v3156, 2
    %v3158 = vmax.f32 %v3156, %v3157
    %v3159 = vrot.slane %v3158, 1
    %v3160 = vmax.f32 %v3158, %v3159
    %v3161 = vmax.f32 %v2885, %v2888
    %v3162 = vrot.slane %v3161, 4
    %v3163 = vmax.f32 %v3161, %v3162
    %v3164 = vrot.slane %v3163, 2
    %v3165 = vmax.f32 %v3163, %v3164
    %v3166 = vrot.slane %v3165, 1
    %v3167 = vmax.f32 %v3165, %v3166
    %v3168 = vmax.f32 %v2886, %v2889
    %v3169 = vrot.slane %v3168, 4
    %v3170 = vmax.f32 %v3168, %v3169
    %v3171 = vrot.slane %v3170, 2
    %v3172 = vmax.f32 %v3170, %v3171
    %v3173 = vrot.slane %v3172, 1
    %v3174 = vmax.f32 %v3172, %v3173
    %v3175 = vmax.f32 %v2887, %v2890
    %v3176 = vrot.slane %v3175, 4
    %v3177 = vmax.f32 %v3175, %v3176
    %v3178 = vrot.slane %v3177, 2
    %v3179 = vmax.f32 %v3177, %v3178
    %v3180 = vrot.slane %v3179, 1
    %v3181 = vmax.f32 %v3179, %v3180
    %v3182 = vmax.f32 %v2891, %v2894
    %v3183 = vrot.slane %v3182, 4
    %v3184 = vmax.f32 %v3182, %v3183
    %v3185 = vrot.slane %v3184, 2
    %v3186 = vmax.f32 %v3184, %v3185
    %v3187 = vrot.slane %v3186, 1
    %v3188 = vmax.f32 %v3186, %v3187
    %v3189 = vmax.f32 %v2892, %v2895
    %v3190 = vrot.slane %v3189, 4
    %v3191 = vmax.f32 %v3189, %v3190
    %v3192 = vrot.slane %v3191, 2
    %v3193 = vmax.f32 %v3191, %v3192
    %v3194 = vrot.slane %v3193, 1
    %v3195 = vmax.f32 %v3193, %v3194
    %v3196 = vmax.f32 %v2893, %v2896
    %v3197 = vrot.slane %v3196, 4
    %v3198 = vmax.f32 %v3196, %v3197
    %v3199 = vrot.slane %v3198, 2
    %v3200 = vmax.f32 %v3198, %v3199
    %v3201 = vrot.slane %v3200, 1
    %v3202 = vmax.f32 %v3200, %v3201
    %v3203 = vmax.f32 %v2897, %v2900
    %v3204 = vrot.slane %v3203, 4
    %v3205 = vmax.f32 %v3203, %v3204
    %v3206 = vrot.slane %v3205, 2
    %v3207 = vmax.f32 %v3205, %v3206
    %v3208 = vrot.slane %v3207, 1
    %v3209 = vmax.f32 %v3207, %v3208
    %v3210 = vmax.f32 %v2898, %v2901
    %v3211 = vrot.slane %v3210, 4
    %v3212 = vmax.f32 %v3210, %v3211
    %v3213 = vrot.slane %v3212, 2
    %v3214 = vmax.f32 %v3212, %v3213
    %v3215 = vrot.slane %v3214, 1
    %v3216 = vmax.f32 %v3214, %v3215
    %v3217 = vmax.f32 %v2899, %v2902
    %v3218 = vrot.slane %v3217, 4
    %v3219 = vmax.f32 %v3217, %v3218
    %v3220 = vrot.slane %v3219, 2
    %v3221 = vmax.f32 %v3219, %v3220
    %v3222 = vrot.slane %v3221, 1
    %v3223 = vmax.f32 %v3221, %v3222
    %v3224 = vmax.f32 %v2903, %v2906
    %v3225 = vrot.slane %v3224, 4
    %v3226 = vmax.f32 %v3224, %v3225
    %v3227 = vrot.slane %v3226, 2
    %v3228 = vmax.f32 %v3226, %v3227
    %v3229 = vrot.slane %v3228, 1
    %v3230 = vmax.f32 %v3228, %v3229
    %v3231 = vmax.f32 %v2904, %v2907
    %v3232 = vrot.slane %v3231, 4
    %v3233 = vmax.f32 %v3231, %v3232
    %v3234 = vrot.slane %v3233, 2
    %v3235 = vmax.f32 %v3233, %v3234
    %v3236 = vrot.slane %v3235, 1
    %v3237 = vmax.f32 %v3235, %v3236
    %v3238 = vmax.f32 %v2905, %v2908
    %v3239 = vrot.slane %v3238, 4
    %v3240 = vmax.f32 %v3238, %v3239
    %v3241 = vrot.slane %v3240, 2
    %v3242 = vmax.f32 %v3240, %v3241
    %v3243 = vrot.slane %v3242, 1
    %v3244 = vmax.f32 %v3242, %v3243
    %v3245 = vpack.c.bf16 %v2915, %v2915
    %v3246 = vpack.c.bf16 %v2922, %v2922
    %v3247 = vpack.c.bf16 %v2929, %v2929
    %v3248 = vpack.c.bf16 %v2936, %v2936
    %v3249 = vpack.c.bf16 %v2943, %v2943
    %v3250 = vpack.c.bf16 %v2950, %v2950
    %v3251 = vpack.c.bf16 %v2957, %v2957
    %v3252 = vpack.c.bf16 %v2964, %v2964
    %v3253 = vpack.c.bf16 %v2971, %v2971
    %v3254 = vpack.c.bf16 %v2978, %v2978
    %v3255 = vpack.c.bf16 %v2985, %v2985
    %v3256 = vpack.c.bf16 %v2992, %v2992
    %v3257 = vpack.c.bf16 %v2999, %v2999
    %v3258 = vpack.c.bf16 %v3006, %v3006
    %v3259 = vpack.c.bf16 %v3013, %v3013
    %v3260 = vpack.c.bf16 %v3020, %v3020
    %v3261 = vpack.c.bf16 %v3027, %v3027
    %v3262 = vpack.c.bf16 %v3034, %v3034
    %v3263 = vpack.c.bf16 %v3041, %v3041
    %v3264 = vpack.c.bf16 %v3048, %v3048
    %v3265 = vpack.c.bf16 %v3055, %v3055
    %v3266 = vpack.c.bf16 %v3062, %v3062
    %v3267 = vpack.c.bf16 %v3069, %v3069
    %v3268 = vpack.c.bf16 %v3076, %v3076
    %v3269 = vpack.c.bf16 %v3083, %v3083
    %v3270 = vpack.c.bf16 %v3090, %v3090
    %v3271 = vpack.c.bf16 %v3097, %v3097
    %v3272 = vpack.c.bf16 %v3104, %v3104
    %v3273 = vpack.c.bf16 %v3111, %v3111
    %v3274 = vpack.c.bf16 %v3118, %v3118
    %v3275 = vpack.c.bf16 %v3125, %v3125
    %v3276 = vpack.c.bf16 %v3132, %v3132
    %v3277 = vpack.c.bf16 %v3139, %v3139
    %v3278 = vpack.c.bf16 %v3146, %v3146
    %v3279 = vpack.c.bf16 %v3153, %v3153
    %v3280 = vpack.c.bf16 %v3160, %v3160
    %v3281 = vpack.c.bf16 %v3167, %v3167
    %v3282 = vpack.c.bf16 %v3174, %v3174
    %v3283 = vpack.c.bf16 %v3181, %v3181
    %v3284 = vpack.c.bf16 %v3188, %v3188
    %v3285 = vpack.c.bf16 %v3195, %v3195
    %v3286 = vpack.c.bf16 %v3202, %v3202
    %v3287 = vpack.c.bf16 %v3209, %v3209
    %v3288 = vpack.c.bf16 %v3216, %v3216
    %v3289 = vpack.c.bf16 %v3223, %v3223
    %v3290 = vpack.c.bf16 %v3230, %v3230
    %v3291 = vpack.c.bf16 %v3237, %v3237
    %v3292 = vpack.c.bf16 %v3244, %v3244
    %v3293 = vld [vmem:[%s5] sm:$0xf]
    %v3294 = vld [vmem:[%s5 + $0x4] sm:$0xf]
    %v3295 = vld [vmem:[%s5 + $0x8] sm:$0xf]
    %v3296 = vld [vmem:[%s5 + $0xc] sm:$0xf]
    %v3297 = vld [vmem:[%s5 + $0x10] sm:$0xf]
    %v3298 = vld [vmem:[%s5 + $0x14] sm:$0xf]
    %v3299 = vld [vmem:[%s5 + $0x18] sm:$0xf]
    %v3300 = vld [vmem:[%s5 + $0x1c] sm:$0xf]
    %v3301 = vld [vmem:[%s5 + $0x20] sm:$0xf]
    %v3302 = vld [vmem:[%s5 + $0x24] sm:$0xf]
    %v3303 = vld [vmem:[%s5 + $0x28] sm:$0xf]
    %v3304 = vld [vmem:[%s5 + $0x2c] sm:$0xf]
    %v3305 = vld [vmem:[%s5 + $0x30] sm:$0xf]
    %v3306 = vld [vmem:[%s5 + $0x34] sm:$0xf]
    %v3307 = vld [vmem:[%s5 + $0x38] sm:$0xf]
    %v3308 = vld [vmem:[%s5 + $0x3c] sm:$0xf]
    %v3309 = vld [vmem:[%s5 + $0x40] sm:$0xf]
    %v3310 = vld [vmem:[%s5 + $0x44] sm:$0xf]
    %v3311 = vld [vmem:[%s5 + $0x48] sm:$0xf]
    %v3312 = vld [vmem:[%s5 + $0x4c] sm:$0xf]
    %v3313 = vld [vmem:[%s5 + $0x50] sm:$0xf]
    %v3314 = vld [vmem:[%s5 + $0x54] sm:$0xf]
    %v3315 = vld [vmem:[%s5 + $0x58] sm:$0xf]
    %v3316 = vld [vmem:[%s5 + $0x5c] sm:$0xf]
    %v3317 = vld [vmem:[%s5 + $0x60] sm:$0xf]
    %v3318 = vld [vmem:[%s5 + $0x64] sm:$0xf]
    %v3319 = vld [vmem:[%s5 + $0x68] sm:$0xf]
    %v3320 = vld [vmem:[%s5 + $0x6c] sm:$0xf]
    %v3321 = vld [vmem:[%s5 + $0x70] sm:$0xf]
    %v3322 = vld [vmem:[%s5 + $0x74] sm:$0xf]
    %v3323 = vld [vmem:[%s5 + $0x78] sm:$0xf]
    %v3324 = vld [vmem:[%s5 + $0x7c] sm:$0xf]
    %v3325 = vld [vmem:[%s5 + $0x80] sm:$0xf]
    %v3326 = vld [vmem:[%s5 + $0x84] sm:$0xf]
    %v3327 = vld [vmem:[%s5 + $0x88] sm:$0xf]
    %v3328 = vld [vmem:[%s5 + $0x8c] sm:$0xf]
    %v3329 = vld [vmem:[%s5 + $0x90] sm:$0xf]
    %v3330 = vld [vmem:[%s5 + $0x94] sm:$0xf]
    %v3331 = vld [vmem:[%s5 + $0x98] sm:$0xf]
    %v3332 = vld [vmem:[%s5 + $0x9c] sm:$0xf]
    %v3333 = vld [vmem:[%s5 + $0xa0] sm:$0xf]
    %v3334 = vld [vmem:[%s5 + $0xa4] sm:$0xf]
    %v3335 = vld [vmem:[%s5 + $0xa8] sm:$0xf]
    %v3336 = vld [vmem:[%s5 + $0xac] sm:$0xf]
    %v3337 = vld [vmem:[%s5 + $0xb0] sm:$0xf]
    %v3338 = vld [vmem:[%s5 + $0xb4] sm:$0xf]
    %v3339 = vld [vmem:[%s5 + $0xb8] sm:$0xf]
    %v3340 = vld [vmem:[%s5 + $0xbc] sm:$0xf]
    %v3341 = vld [vmem:[%s6] sm:$0x1]
    %v3343 = vlaneseq
    %v3344 = vshrl.u32 %v3343, 7
    %v3345 = vsub.s32 0, %v3344
    %v3346 = vrot.slane %v3341, %v3345
    %v3396 = vunpack.c.l.b16 %v3245
    %v3397 = vunpack.c.l.b16 %v3246
    %v3398 = vunpack.c.l.b16 %v3247
    %v3399 = vunpack.c.l.b16 %v3248
    %v3400 = vunpack.c.l.b16 %v3249
    %v3401 = vunpack.c.l.b16 %v3250
    %v3402 = vunpack.c.l.b16 %v3251
    %v3403 = vunpack.c.l.b16 %v3252
    %v3404 = vunpack.c.l.b16 %v3253
    %v3405 = vunpack.c.l.b16 %v3254
    %v3406 = vunpack.c.l.b16 %v3255
    %v3407 = vunpack.c.l.b16 %v3256
    %v3408 = vunpack.c.l.b16 %v3257
    %v3409 = vunpack.c.l.b16 %v3258
    %v3410 = vunpack.c.l.b16 %v3259
    %v3411 = vunpack.c.l.b16 %v3260
    %v3412 = vunpack.c.l.b16 %v3261
    %v3413 = vunpack.c.l.b16 %v3262
    %v3414 = vunpack.c.l.b16 %v3263
    %v3415 = vunpack.c.l.b16 %v3264
    %v3416 = vunpack.c.l.b16 %v3265
    %v3417 = vunpack.c.l.b16 %v3266
    %v3418 = vunpack.c.l.b16 %v3267
    %v3419 = vunpack.c.l.b16 %v3268
    %v3420 = vunpack.c.l.b16 %v3269
    %v3421 = vunpack.c.l.b16 %v3270
    %v3422 = vunpack.c.l.b16 %v3271
    %v3423 = vunpack.c.l.b16 %v3272
    %v3424 = vunpack.c.l.b16 %v3273
    %v3425 = vunpack.c.l.b16 %v3274
    %v3426 = vunpack.c.l.b16 %v3275
    %v3427 = vunpack.c.l.b16 %v3276
    %v3428 = vunpack.c.l.b16 %v3277
    %v3429 = vunpack.c.l.b16 %v3278
    %v3430 = vunpack.c.l.b16 %v3279
    %v3431 = vunpack.c.l.b16 %v3280
    %v3432 = vunpack.c.l.b16 %v3281
    %v3433 = vunpack.c.l.b16 %v3282
    %v3434 = vunpack.c.l.b16 %v3283
    %v3435 = vunpack.c.l.b16 %v3284
    %v3436 = vunpack.c.l.b16 %v3285
    %v3437 = vunpack.c.l.b16 %v3286
    %v3438 = vunpack.c.l.b16 %v3287
    %v3439 = vunpack.c.l.b16 %v3288
    %v3440 = vunpack.c.l.b16 %v3289
    %v3441 = vunpack.c.l.b16 %v3290
    %v3442 = vunpack.c.l.b16 %v3291
    %v3443 = vunpack.c.l.b16 %v3292
    %vm3444 = vcmask 1041409
    %v3445 = vsel %vm3444, %v3399, %v3396
    %vm3446 = vcmask 1042434
    %v3447 = vsel %vm3446, %v3402, %v3445
    %vm3448 = vcmask 1043459
    %v3449 = vsel %vm3448, %v3405, %v3447
    %vm3450 = vcmask 1044484
    %v3451 = vsel %vm3450, %v3408, %v3449
    %vm3452 = vcmask 1045509
    %v3453 = vsel %vm3452, %v3411, %v3451
    %vm3454 = vcmask 1046534
    %v3455 = vsel %vm3454, %v3414, %v3453
    %vm3456 = vcmask 1047559
    %v3457 = vsel %vm3456, %v3417, %v3455
    %v3458 = vsel %vm3444, %v3400, %v3397
    %v3459 = vsel %vm3446, %v3403, %v3458
    %v3460 = vsel %vm3448, %v3406, %v3459
    %v3461 = vsel %vm3450, %v3409, %v3460
    %v3462 = vsel %vm3452, %v3412, %v3461
    %v3463 = vsel %vm3454, %v3415, %v3462
    %v3464 = vsel %vm3456, %v3418, %v3463
    %v3465 = vsel %vm3444, %v3401, %v3398
    %v3466 = vsel %vm3446, %v3404, %v3465
    %v3467 = vsel %vm3448, %v3407, %v3466
    %v3468 = vsel %vm3450, %v3410, %v3467
    %v3469 = vsel %vm3452, %v3413, %v3468
    %v3470 = vsel %vm3454, %v3416, %v3469
    %v3471 = vsel %vm3456, %v3419, %v3470
    %v3472 = vsel %vm3444, %v3423, %v3420
    %v3473 = vsel %vm3446, %v3426, %v3472
    %v3474 = vsel %vm3448, %v3429, %v3473
    %v3475 = vsel %vm3450, %v3432, %v3474
    %v3476 = vsel %vm3452, %v3435, %v3475
    %v3477 = vsel %vm3454, %v3438, %v3476
    %v3478 = vsel %vm3456, %v3441, %v3477
    %v3479 = vsel %vm3444, %v3424, %v3421
    %v3480 = vsel %vm3446, %v3427, %v3479
    %v3481 = vsel %vm3448, %v3430, %v3480
    %v3482 = vsel %vm3450, %v3433, %v3481
    %v3483 = vsel %vm3452, %v3436, %v3482
    %v3484 = vsel %vm3454, %v3439, %v3483
    %v3485 = vsel %vm3456, %v3442, %v3484
    %v3486 = vsel %vm3444, %v3425, %v3422
    %v3487 = vsel %vm3446, %v3428, %v3486
    %v3488 = vsel %vm3448, %v3431, %v3487
    %v3489 = vsel %vm3450, %v3434, %v3488
    %v3490 = vsel %vm3452, %v3437, %v3489
    %v3491 = vsel %vm3454, %v3440, %v3490
    %v3492 = vsel %vm3456, %v3443, %v3491
    %v3493 = vpack.c.b16 %v3478, %v3457
    %v3494 = vpack.c.b16 %v3485, %v3464
    %v3495 = vpack.c.b16 %v3492, %v3471
    %v3547 = vunpack.c.l.b16 %v3293
    %v3548 = vunpack.c.l.b16 %v3294
    %v3549 = vunpack.c.l.b16 %v3295
    %v3550 = vunpack.c.l.b16 %v3296
    %v3551 = vunpack.c.l.b16 %v3297
    %v3552 = vunpack.c.l.b16 %v3298
    %v3553 = vunpack.c.l.b16 %v3299
    %v3554 = vunpack.c.l.b16 %v3300
    %v3555 = vunpack.c.l.b16 %v3301
    %v3556 = vunpack.c.l.b16 %v3302
    %v3557 = vunpack.c.l.b16 %v3303
    %v3558 = vunpack.c.l.b16 %v3304
    %v3559 = vunpack.c.l.b16 %v3305
    %v3560 = vunpack.c.l.b16 %v3306
    %v3561 = vunpack.c.l.b16 %v3307
    %v3562 = vunpack.c.l.b16 %v3308
    %v3563 = vunpack.c.l.b16 %v3309
    %v3564 = vunpack.c.l.b16 %v3310
    %v3565 = vunpack.c.l.b16 %v3311
    %v3566 = vunpack.c.l.b16 %v3312
    %v3567 = vunpack.c.l.b16 %v3313
    %v3568 = vunpack.c.l.b16 %v3314
    %v3569 = vunpack.c.l.b16 %v3315
    %v3570 = vunpack.c.l.b16 %v3316
    %v3571 = vunpack.c.l.b16 %v3317
    %v3572 = vunpack.c.l.b16 %v3318
    %v3573 = vunpack.c.l.b16 %v3319
    %v3574 = vunpack.c.l.b16 %v3320
    %v3575 = vunpack.c.l.b16 %v3321
    %v3576 = vunpack.c.l.b16 %v3322
    %v3577 = vunpack.c.l.b16 %v3323
    %v3578 = vunpack.c.l.b16 %v3324
    %v3579 = vunpack.c.l.b16 %v3325
    %v3580 = vunpack.c.l.b16 %v3326
    %v3581 = vunpack.c.l.b16 %v3327
    %v3582 = vunpack.c.l.b16 %v3328
    %v3583 = vunpack.c.l.b16 %v3329
    %v3584 = vunpack.c.l.b16 %v3330
    %v3585 = vunpack.c.l.b16 %v3331
    %v3586 = vunpack.c.l.b16 %v3332
    %v3587 = vunpack.c.l.b16 %v3333
    %v3588 = vunpack.c.l.b16 %v3334
    %v3589 = vunpack.c.l.b16 %v3335
    %v3590 = vunpack.c.l.b16 %v3336
    %v3591 = vunpack.c.l.b16 %v3337
    %v3592 = vunpack.c.l.b16 %v3338
    %v3593 = vunpack.c.l.b16 %v3339
    %v3594 = vunpack.c.l.b16 %v3340
    %v3595 = vpack.c.b16 %v3548, %v3547
    %v3596 = vpack.c.b16 %v3550, %v3549
    %v3597 = vpack.c.b16 %v3552, %v3551
    %v3598 = vpack.c.b16 %v3554, %v3553
    %v3599 = vpack.c.b16 %v3556, %v3555
    %v3600 = vpack.c.b16 %v3558, %v3557
    %v3601 = vpack.c.b16 %v3560, %v3559
    %v3602 = vpack.c.b16 %v3562, %v3561
    %v3603 = vpack.c.b16 %v3564, %v3563
    %v3604 = vpack.c.b16 %v3566, %v3565
    %v3605 = vpack.c.b16 %v3568, %v3567
    %v3606 = vpack.c.b16 %v3570, %v3569
    %v3607 = vpack.c.b16 %v3572, %v3571
    %v3608 = vpack.c.b16 %v3574, %v3573
    %v3609 = vpack.c.b16 %v3576, %v3575
    %v3610 = vpack.c.b16 %v3578, %v3577
    %v3611 = vpack.c.b16 %v3580, %v3579
    %v3612 = vpack.c.b16 %v3582, %v3581
    %v3613 = vpack.c.b16 %v3584, %v3583
    %v3614 = vpack.c.b16 %v3586, %v3585
    %v3615 = vpack.c.b16 %v3588, %v3587
    %v3616 = vpack.c.b16 %v3590, %v3589
    %v3617 = vpack.c.b16 %v3592, %v3591
    %v3618 = vpack.c.b16 %v3594, %v3593
    %3643 = vmatprep.subr.bf16.mxu0 0
    %3644 = vmatpush1.bf16.msra.mxu0 %v3595
    %3645 = vmatprep.subr.bf16.mxu0 0
    %3646 = vmatpush1.bf16.msra.mxu0 %v3596
    %3647 = vmatprep.subr.bf16.mxu0 0
    %3648 = vmatpush1.bf16.msra.mxu0 %v3597
    %3649 = vmatprep.subr.bf16.mxu0 0
    %3650 = vmatpush1.bf16.msra.mxu0 %v3598
    %3651 = vmatprep.subr.bf16.mxu0 0
    %3652 = vmatpush1.bf16.msra.mxu0 %v3599
    %3653 = vmatprep.subr.bf16.mxu0 0
    %3654 = vmatpush1.bf16.msra.mxu0 %v3600
    %3655 = vmatprep.subr.bf16.mxu0 0
    %3656 = vmatpush1.bf16.msra.mxu0 %v3601
    %3657 = vmatprep.subr.bf16.mxu0 0
    %3658 = vmatpush1.bf16.msra.mxu0 %v3602
    %3659 = vmatprep.subr.bf16.mxu0 0
    %3660 = vmatpush1.bf16.msra.mxu0 %v3603
    %3661 = vmatprep.subr.bf16.mxu0 0
    %3662 = vmatpush1.bf16.msra.mxu0 %v3604
    %3663 = vmatprep.subr.bf16.mxu0 0
    %3664 = vmatpush1.bf16.msra.mxu0 %v3605
    %3665 = vmatprep.subr.bf16.mxu0 0
    %3666 = vmatpush1.bf16.msra.mxu0 %v3606
    %3667 = vmatprep.subr.bf16.mxu0 0
    %3668 = vmatpush1.bf16.msra.mxu0 %v3607
    %3669 = vmatprep.subr.bf16.mxu0 0
    %3670 = vmatpush1.bf16.msra.mxu0 %v3608
    %3671 = vmatprep.subr.bf16.mxu0 0
    %3672 = vmatpush1.bf16.msra.mxu0 %v3609
    %3673 = vmatprep.subr.bf16.mxu0 0
    %3674 = vmatpush1.bf16.msra.mxu0 %v3610
    %3675 = vmatprep.mubr.bf16.mxu0 %v3494
    %3676 = vmatmul.mubr.bf16.gmra.mrb[0].mxu0 %v3493
    %v3677 = vpop.f32.mrb[0].mxu0
    %v3678 = vadd.f32 %v3346, %v3677
    %v3679 = vpop.f32.mrb[0].mxu0
    %v3680 = vpop.f32.mrb[0].mxu0
    %v3681 = vadd.f32 %v3346, %v3680
    %v3682 = vpop.f32.mrb[0].mxu0
    %3683 = vdwg.mxu0
    %3684 = vmatprep.subr.bf16.mxu0 0
    %3685 = vmatpush1.bf16.msra.mxu0 %v3611
    %3686 = vmatprep.subr.bf16.mxu0 0
    %3687 = vmatpush1.bf16.msra.mxu0 %v3612
    %3688 = vmatprep.subr.bf16.mxu0 0
    %3689 = vmatpush1.bf16.msra.mxu0 %v3613
    %3690 = vmatprep.subr.bf16.mxu0 0
    %3691 = vmatpush1.bf16.msra.mxu0 %v3614
    %3692 = vmatprep.subr.bf16.mxu0 0
    %3693 = vmatpush1.bf16.msra.mxu0 %v3615
    %3694 = vmatprep.subr.bf16.mxu0 0
    %3695 = vmatpush1.bf16.msra.mxu0 %v3616
    %3696 = vmatprep.subr.bf16.mxu0 0
    %3697 = vmatpush1.bf16.msra.mxu0 %v3617
    %3698 = vmatprep.subr.bf16.mxu0 0
    %3699 = vmatpush1.bf16.msra.mxu0 %v3618
    %3700 = vmatprep.subr.bf16.mxu0 0
    %3701 = vmatpush1.bf16.msra.mxu0 0
    %3702 = vmatprep.subr.bf16.mxu0 0
    %3703 = vmatpush1.bf16.msra.mxu0 0
    %3704 = vmatprep.subr.bf16.mxu0 0
    %3705 = vmatpush1.bf16.msra.mxu0 0
    %3706 = vmatprep.subr.bf16.mxu0 0
    %3707 = vmatpush1.bf16.msra.mxu0 0
    %3708 = vmatprep.subr.bf16.mxu0 0
    %3709 = vmatpush1.bf16.msra.mxu0 0
    %3710 = vmatprep.subr.bf16.mxu0 0
    %3711 = vmatpush1.bf16.msra.mxu0 0
    %3712 = vmatprep.subr.bf16.mxu0 0
    %3713 = vmatpush1.bf16.msra.mxu0 0
    %3714 = vmatprep.subr.bf16.mxu0 0
    %3715 = vmatpush1.bf16.msra.mxu0 0
    %3716 = vmatprep.mubr.bf16.mxu0 0
    %3717 = vmatmul.mubr.bf16.gmra.mrb[0].mxu0 %v3495
    %v3718 = vpop.f32.mrb[0].mxu0
    %v3719 = vadd.f32 %v3678, %v3718
    %v3720 = vpop.f32.mrb[0].mxu0
    %v3721 = vpop.f32.mrb[0].mxu0
    %v3722 = vadd.f32 %v3681, %v3721
    %v3723 = vpop.f32.mrb[0].mxu0
    %3724 = vdwg.mxu0
    %3725 = vst [vmem:[%s7] sm:$0xff] %v3719
    %3726 = vst [vmem:[%s7 + $0x8] sm:$0xff] %v3722
    // Predicated region
    $region38: #{textcnn_forward.1} parent=1 // pred_check
      _
    $region39: #{textcnn_forward.1} parent=1 // pred_check_branch
      %3728 = sbr.rel (0) target = $region41
    $region40: #{textcnn_forward.1} parent=1 // pred_region
      _
    $region41: #{textcnn_forward.1} parent=1 // pred_fallthru
      _
    // Predicated region
    $region42: #{textcnn_forward.1} parent=1 // pred_check
      _
    $region43: #{textcnn_forward.1} parent=1 // pred_check_branch
      %3730 = sbr.rel (0) target = $region45
    $region44: #{textcnn_forward.1} parent=1 // pred_region
      _
    $region45: #{textcnn_forward.1} parent=1 // pred_fallthru
      _
    %3731 = vsyncpa [#allocation3], 1
    %3732 = vsyncpa [#allocation5], 1

</llo_original>
